<compile_context>
chip_gen: v6e
topology: v6e:2x2x1
jax: 0.10.0
libtpu: 0.0.40
codegen_flags: <defaults>
</compile_context>

<pallas_src>
import jax
import jax.numpy as jnp
from jax import lax
from jax.experimental import pallas as pl
from jax.experimental.pallas import tpu as pltpu

INPUT_SIZE = 384
HIDDEN = 150
OUTPUT = 10
SEQ = 8

H_PAD = 256            # per-gate padded hidden width (multiple of 128)
G4 = 4 * H_PAD         # fused gate width (i, f, g, o concatenated) = 1024
OUT_PAD = 128          # padded output lane width for a lane-dense final store


def lstm_kernel(x_ref, wih_ref, whh_ref, b_ref, h0_ref, c0_ref,
                wout_ref, bout_ref, out_ref, xproj_ref, hall_ref):
    S = x_ref.shape[0]

    # Fused input projection for all timesteps and all 4 gates at once:
    # (S, I) @ (I, 4*Hp) + (1, 4*Hp) -> lane-dense (S, 1024) stored in VMEM scratch.
    xproj_ref[...] = (
        jnp.dot(x_ref[...], wih_ref[...], preferred_element_type=jnp.float32)
        + b_ref[...]
    )

    whh = whh_ref[...]          # (Hp, 4*Hp) fused recurrent weights, VMEM-resident

    def step(t, carry):
        h, c = carry            # h, c live in vregs (no VMEM round-trip)
        # One fused recurrent matmul per step: (1, Hp) @ (Hp, 4*Hp) = (1, 1024).
        gates = xproj_ref[pl.ds(t, 1), :] + jnp.dot(
            h, whh, preferred_element_type=jnp.float32)
        i_g = jax.nn.sigmoid(gates[:, 0 * H_PAD:1 * H_PAD])
        f_g = jax.nn.sigmoid(gates[:, 1 * H_PAD:2 * H_PAD])
        g_g = jnp.tanh(gates[:, 2 * H_PAD:3 * H_PAD])
        o_g = jax.nn.sigmoid(gates[:, 3 * H_PAD:4 * H_PAD])
        c_new = f_g * c + i_g * g_g
        h_new = o_g * jnp.tanh(c_new)
        hall_ref[pl.ds(t, 1), :] = h_new     # only per-step store: one (1, Hp) row
        return (h_new, c_new)

    # S = 8 is static: unroll so the LLO scheduler can overlap MXU/EUP latency.
    lax.fori_loop(0, S, step, (h0_ref[...], c0_ref[...]), unroll=True)

    # Final Linear hoisted out of the recurrence: one (S, Hp) @ (Hp, OUT_PAD) matmul
    # and one unmasked lane-dense store.
    out_ref[...] = (
        jnp.dot(hall_ref[...], wout_ref[...], preferred_element_type=jnp.float32)
        + bout_ref[...]
    )


def _pack_params(weight_ih, weight_hh, bias_ih, bias_hh, lin_w, lin_b):
    """Restack PyTorch-layout LSTM/Linear params into fused, zero-padded layouts."""
    pad_h = H_PAD - HIDDEN
    b_sum = bias_ih + bias_hh
    wih_g, whh_g, b_g = [], [], []
    for k in range(4):  # PyTorch gate order: i, f, g, o
        wih_k = weight_ih[k * HIDDEN:(k + 1) * HIDDEN, :].T      # (I, H)
        whh_k = weight_hh[k * HIDDEN:(k + 1) * HIDDEN, :].T      # (H, H)
        b_k = b_sum[k * HIDDEN:(k + 1) * HIDDEN]                 # (H,)
        wih_g.append(jnp.pad(wih_k, ((0, 0), (0, pad_h))))
        whh_g.append(jnp.pad(whh_k, ((0, pad_h), (0, pad_h))))
        b_g.append(jnp.pad(b_k, (0, pad_h)))
    wih_f = jnp.concatenate(wih_g, axis=1)                        # (I, 4*H_PAD)
    whh_f = jnp.concatenate(whh_g, axis=1)                        # (H_PAD, 4*H_PAD)
    b_f = jnp.concatenate(b_g)[None, :]                           # (1, 4*H_PAD)
    wout_f = jnp.pad(lin_w.T, ((0, pad_h), (0, OUT_PAD - OUTPUT)))  # (H_PAD, OUT_PAD)
    bout_f = jnp.pad(lin_b, (0, OUT_PAD - OUTPUT))[None, :]         # (1, OUT_PAD)
    return wih_f, whh_f, b_f, wout_f, bout_f


def lstm_forward(x, weight_ih, weight_hh, bias_ih, bias_hh, lin_w, lin_b, h0, c0):
    S = x.shape[0]
    wih_f, whh_f, b_f, wout_f, bout_f = _pack_params(
        weight_ih, weight_hh, bias_ih, bias_hh, lin_w, lin_b)
    h0_p = jnp.pad(h0, ((0, 0), (0, H_PAD - HIDDEN)))
    c0_p = jnp.pad(c0, ((0, 0), (0, H_PAD - HIDDEN)))

    def vmem_spec():
        return pl.BlockSpec(memory_space=pltpu.MemorySpace.VMEM)

    out_padded = pl.pallas_call(
        lstm_kernel,
        out_shape=jax.ShapeDtypeStruct((S, OUT_PAD), jnp.float32),
        in_specs=[vmem_spec() for _ in range(8)],
        out_specs=vmem_spec(),
        scratch_shapes=[
            pltpu.VMEM((S, G4), jnp.float32),     # fused per-gate input projections
            pltpu.VMEM((S, H_PAD), jnp.float32),  # all hidden states for the final Linear
        ],
    )(x, wih_f, whh_f, b_f, h0_p, c0_p, wout_f, bout_f)
    return out_padded[:, :OUTPUT]


def lstm_reference(x, weight_ih, weight_hh, bias_ih, bias_hh, lin_w, lin_b, h0, c0):
    """Pure-JAX reference matching PyTorch nn.LSTM + nn.Linear semantics (unpadded)."""
    b_sum = bias_ih + bias_hh
    wih = jnp.stack([weight_ih[k * HIDDEN:(k + 1) * HIDDEN, :].T for k in range(4)])
    whh = jnp.stack([weight_hh[k * HIDDEN:(k + 1) * HIDDEN, :].T for k in range(4)])
    b = jnp.stack([b_sum[k * HIDDEN:(k + 1) * HIDDEN][None, :] for k in range(4)])
    wout = lin_w.T
    bout = lin_b[None, :]

    def step(carry, xt):
        h, c = carry
        xt = xt[None, :]
        gi = xt @ wih[0] + b[0] + h @ whh[0]
        gf = xt @ wih[1] + b[1] + h @ whh[1]
        gg = xt @ wih[2] + b[2] + h @ whh[2]
        go = xt @ wih[3] + b[3] + h @ whh[3]
        i_g = jax.nn.sigmoid(gi)
        f_g = jax.nn.sigmoid(gf)
        g_g = jnp.tanh(gg)
        o_g = jax.nn.sigmoid(go)
        c_new = f_g * c + i_g * g_g
        h_new = o_g * jnp.tanh(c_new)
        return (h_new, c_new), h_new[0]

    (_, _), hs = lax.scan(step, (h0, c0), x)
    return hs @ wout + bout


if __name__ == "__main__":
    key = jax.random.PRNGKey(0)
    ks = jax.random.split(key, 8)

    # Deterministic parameter init mimicking PyTorch defaults
    # (uniform(-1/sqrt(H), 1/sqrt(H)) for LSTM and Linear weights/biases).
    k_lstm = 1.0 / jnp.sqrt(jnp.float32(HIDDEN))
    weight_ih = jax.random.uniform(ks[0], (4 * HIDDEN, INPUT_SIZE),
                                   minval=-k_lstm, maxval=k_lstm, dtype=jnp.float32)
    weight_hh = jax.random.uniform(ks[1], (4 * HIDDEN, HIDDEN),
                                   minval=-k_lstm, maxval=k_lstm, dtype=jnp.float32)
    bias_ih = jax.random.uniform(ks[2], (4 * HIDDEN,),
                                 minval=-k_lstm, maxval=k_lstm, dtype=jnp.float32)
    bias_hh = jax.random.uniform(ks[3], (4 * HIDDEN,),
                                 minval=-k_lstm, maxval=k_lstm, dtype=jnp.float32)
    lin_w = jax.random.uniform(ks[4], (OUTPUT, HIDDEN),
                               minval=-k_lstm, maxval=k_lstm, dtype=jnp.float32)
    lin_b = jax.random.uniform(ks[5], (OUTPUT,),
                               minval=-k_lstm, maxval=k_lstm, dtype=jnp.float32)

    # hidden_cell = (torch.rand(1,1,H), torch.rand(1,1,H)) -> uniform [0,1)
    h0 = jax.random.uniform(ks[6], (1, HIDDEN), dtype=jnp.float32)
    c0 = jax.random.uniform(ks[7], (1, HIDDEN), dtype=jnp.float32)

    # input_seq: (seq_len, input_size); forward views it as (seq_len, 1, input_size).
    x = jax.random.normal(jax.random.PRNGKey(42), (SEQ, INPUT_SIZE), dtype=jnp.float32)

    out = lstm_forward(x, weight_ih, weight_hh, bias_ih, bias_hh, lin_w, lin_b, h0, c0)
    out = jax.block_until_ready(out)

    ref = lstm_reference(x, weight_ih, weight_hh, bias_ih, bias_hh, lin_w, lin_b, h0, c0)
    assert out.shape == (SEQ, OUTPUT)
    assert jnp.allclose(out, ref, rtol=1e-4, atol=1e-4), "mismatch vs JAX reference"

    print("KERNEL_OK")
</pallas_src>

<mosaic_0001>
module attributes {stable_mosaic.version = 11 : i64} {
  func.func @lstm_kernel(%arg0: memref<8x384xf32, #tpu.memory_space<vmem>>, %arg1: memref<384x1024xf32, #tpu.memory_space<vmem>>, %arg2: memref<256x1024xf32, #tpu.memory_space<vmem>>, %arg3: memref<1x1024xf32, #tpu.memory_space<vmem>>, %arg4: memref<1x256xf32, #tpu.memory_space<vmem>>, %arg5: memref<1x256xf32, #tpu.memory_space<vmem>>, %arg6: memref<256x128xf32, #tpu.memory_space<vmem>>, %arg7: memref<1x128xf32, #tpu.memory_space<vmem>>, %arg8: memref<8x128xf32, #tpu.memory_space<vmem>>, %arg9: memref<8x1024xf32, #tpu.memory_space<vmem>>, %arg10: memref<8x256xf32, #tpu.memory_space<vmem>>) attributes {dimension_semantics = [], scalar_prefetch = 0 : i64, scratch_operands = 2 : i64, tpu.core_type = #tpu.core_type<tc>} {
    %c0 = arith.constant 0 : index
    %c0_0 = arith.constant 0 : index
    %0 = vector.load %arg0[%c0, %c0_0] : memref<8x384xf32, #tpu.memory_space<vmem>>, vector<8x384xf32>
    %c0_1 = arith.constant 0 : index
    %c0_2 = arith.constant 0 : index
    %1 = vector.load %arg1[%c0_1, %c0_2] : memref<384x1024xf32, #tpu.memory_space<vmem>>, vector<384x1024xf32>
    %cst = arith.constant dense<0.000000e+00> : vector<8x1024xf32>
    %2 = tpu.matmul %0, %1, %cst {dimension_numbers = #tpu.dot_dimension_numbers<[1], [0], [0], [1], [0, 0, 1, 1], [], []>} : vector<8x384xf32>, vector<384x1024xf32>, vector<8x1024xf32> -> vector<8x1024xf32>
    %c0_3 = arith.constant 0 : index
    %c0_4 = arith.constant 0 : index
    %3 = vector.load %arg3[%c0_3, %c0_4] : memref<1x1024xf32, #tpu.memory_space<vmem>>, vector<1x1024xf32>
    %4 = vector.broadcast %3 : vector<1x1024xf32> to vector<8x1024xf32>
    %5 = arith.addf %2, %4 : vector<8x1024xf32>
    %c0_5 = arith.constant 0 : index
    %c0_6 = arith.constant 0 : index
    %6 = vector.load %arg9[%c0_5, %c0_6] : memref<8x1024xf32, #tpu.memory_space<vmem>>, vector<8x1024xf32>
    tpu.vector_store %arg9[%c0_5, %c0_6], %5 {strides = array<i32>} : memref<8x1024xf32, #tpu.memory_space<vmem>>, vector<8x1024xf32>,
    %c0_7 = arith.constant 0 : index
    %c0_8 = arith.constant 0 : index
    %7 = vector.load %arg2[%c0_7, %c0_8] : memref<256x1024xf32, #tpu.memory_space<vmem>>, vector<256x1024xf32>
    %c0_9 = arith.constant 0 : index
    %c0_10 = arith.constant 0 : index
    %8 = vector.load %arg4[%c0_9, %c0_10] : memref<1x256xf32, #tpu.memory_space<vmem>>, vector<1x256xf32>
    %c0_11 = arith.constant 0 : index
    %c0_12 = arith.constant 0 : index
    %9 = vector.load %arg5[%c0_11, %c0_12] : memref<1x256xf32, #tpu.memory_space<vmem>>, vector<1x256xf32>
    %c0_i32 = arith.constant 0 : i32
    %10 = arith.index_cast %c0_i32 : i32 to index
    %c0_13 = arith.constant 0 : index
    %11 = vector.load %arg9[%10, %c0_13] : memref<8x1024xf32, #tpu.memory_space<vmem>>, vector<1x1024xf32>
    %cst_14 = arith.constant dense<0.000000e+00> : vector<1x1024xf32>
    %12 = tpu.matmul %8, %7, %cst_14 {dimension_numbers = #tpu.dot_dimension_numbers<[1], [0], [0], [1], [0, 0, 1, 1], [], []>} : vector<1x256xf32>, vector<256x1024xf32>, vector<1x1024xf32> -> vector<1x1024xf32>
    %13 = arith.addf %11, %12 : vector<1x1024xf32>
    %14 = vector.extract_strided_slice %13 {offsets = [0, 0], sizes = [1, 256], strides = [1, 1]} : vector<1x1024xf32> to vector<1x256xf32>
    %15 = arith.negf %14 : vector<1x256xf32>
    %16 = math.exp %15 : vector<1x256xf32>
    %cst_15 = arith.constant 1.000000e+00 : f32
    %17 = vector.broadcast %cst_15 : f32 to vector<1x256xf32>
    %18 = arith.addf %17, %16 : vector<1x256xf32>
    %19 = arith.divf %17, %18 : vector<1x256xf32>
    %20 = vector.extract_strided_slice %13 {offsets = [0, 256], sizes = [1, 256], strides = [1, 1]} : vector<1x1024xf32> to vector<1x256xf32>
    %21 = arith.negf %20 : vector<1x256xf32>
    %22 = math.exp %21 : vector<1x256xf32>
    %cst_16 = arith.constant 1.000000e+00 : f32
    %23 = vector.broadcast %cst_16 : f32 to vector<1x256xf32>
    %24 = arith.addf %23, %22 : vector<1x256xf32>
    %25 = arith.divf %23, %24 : vector<1x256xf32>
    %26 = vector.extract_strided_slice %13 {offsets = [0, 512], sizes = [1, 256], strides = [1, 1]} : vector<1x1024xf32> to vector<1x256xf32>
    %27 = math.tanh %26 : vector<1x256xf32>
    %28 = vector.extract_strided_slice %13 {offsets = [0, 768], sizes = [1, 256], strides = [1, 1]} : vector<1x1024xf32> to vector<1x256xf32>
    %29 = arith.negf %28 : vector<1x256xf32>
    %30 = math.exp %29 : vector<1x256xf32>
    %cst_17 = arith.constant 1.000000e+00 : f32
    %31 = vector.broadcast %cst_17 : f32 to vector<1x256xf32>
    %32 = arith.addf %31, %30 : vector<1x256xf32>
    %33 = arith.divf %31, %32 : vector<1x256xf32>
    %34 = arith.mulf %25, %9 : vector<1x256xf32>
    %35 = arith.mulf %19, %27 : vector<1x256xf32>
    %36 = arith.addf %34, %35 : vector<1x256xf32>
    %37 = math.tanh %36 : vector<1x256xf32>
    %38 = arith.mulf %33, %37 : vector<1x256xf32>
    %39 = arith.index_cast %c0_i32 : i32 to index
    %c0_18 = arith.constant 0 : index
    %40 = vector.load %arg10[%39, %c0_18] : memref<8x256xf32, #tpu.memory_space<vmem>>, vector<1x256xf32>
    tpu.vector_store %arg10[%39, %c0_18], %38 {strides = array<i32>} : memref<8x256xf32, #tpu.memory_space<vmem>>, vector<1x256xf32>,
    %c1_i32 = arith.constant 1 : i32
    %41 = arith.index_cast %c1_i32 : i32 to index
    %c0_19 = arith.constant 0 : index
    %42 = vector.load %arg9[%41, %c0_19] : memref<8x1024xf32, #tpu.memory_space<vmem>>, vector<1x1024xf32>
    %cst_20 = arith.constant dense<0.000000e+00> : vector<1x1024xf32>
    %43 = tpu.matmul %38, %7, %cst_20 {dimension_numbers = #tpu.dot_dimension_numbers<[1], [0], [0], [1], [0, 0, 1, 1], [], []>} : vector<1x256xf32>, vector<256x1024xf32>, vector<1x1024xf32> -> vector<1x1024xf32>
    %44 = arith.addf %42, %43 : vector<1x1024xf32>
    %45 = vector.extract_strided_slice %44 {offsets = [0, 0], sizes = [1, 256], strides = [1, 1]} : vector<1x1024xf32> to vector<1x256xf32>
    %46 = arith.negf %45 : vector<1x256xf32>
    %47 = math.exp %46 : vector<1x256xf32>
    %cst_21 = arith.constant 1.000000e+00 : f32
    %48 = vector.broadcast %cst_21 : f32 to vector<1x256xf32>
    %49 = arith.addf %48, %47 : vector<1x256xf32>
    %50 = arith.divf %48, %49 : vector<1x256xf32>
    %51 = vector.extract_strided_slice %44 {offsets = [0, 256], sizes = [1, 256], strides = [1, 1]} : vector<1x1024xf32> to vector<1x256xf32>
    %52 = arith.negf %51 : vector<1x256xf32>
    %53 = math.exp %52 : vector<1x256xf32>
    %cst_22 = arith.constant 1.000000e+00 : f32
    %54 = vector.broadcast %cst_22 : f32 to vector<1x256xf32>
    %55 = arith.addf %54, %53 : vector<1x256xf32>
    %56 = arith.divf %54, %55 : vector<1x256xf32>
    %57 = vector.extract_strided_slice %44 {offsets = [0, 512], sizes = [1, 256], strides = [1, 1]} : vector<1x1024xf32> to vector<1x256xf32>
    %58 = math.tanh %57 : vector<1x256xf32>
    %59 = vector.extract_strided_slice %44 {offsets = [0, 768], sizes = [1, 256], strides = [1, 1]} : vector<1x1024xf32> to vector<1x256xf32>
    %60 = arith.negf %59 : vector<1x256xf32>
    %61 = math.exp %60 : vector<1x256xf32>
    %cst_23 = arith.constant 1.000000e+00 : f32
    %62 = vector.broadcast %cst_23 : f32 to vector<1x256xf32>
    %63 = arith.addf %62, %61 : vector<1x256xf32>
    %64 = arith.divf %62, %63 : vector<1x256xf32>
    %65 = arith.mulf %56, %36 : vector<1x256xf32>
    %66 = arith.mulf %50, %58 : vector<1x256xf32>
    %67 = arith.addf %65, %66 : vector<1x256xf32>
    %68 = math.tanh %67 : vector<1x256xf32>
    %69 = arith.mulf %64, %68 : vector<1x256xf32>
    %70 = arith.index_cast %c1_i32 : i32 to index
    %c0_24 = arith.constant 0 : index
    %71 = vector.load %arg10[%70, %c0_24] : memref<8x256xf32, #tpu.memory_space<vmem>>, vector<1x256xf32>
    tpu.vector_store %arg10[%70, %c0_24], %69 {strides = array<i32>} : memref<8x256xf32, #tpu.memory_space<vmem>>, vector<1x256xf32>,
    %c2_i32 = arith.constant 2 : i32
    %72 = arith.index_cast %c2_i32 : i32 to index
    %c0_25 = arith.constant 0 : index
    %73 = vector.load %arg9[%72, %c0_25] : memref<8x1024xf32, #tpu.memory_space<vmem>>, vector<1x1024xf32>
    %cst_26 = arith.constant dense<0.000000e+00> : vector<1x1024xf32>
    %74 = tpu.matmul %69, %7, %cst_26 {dimension_numbers = #tpu.dot_dimension_numbers<[1], [0], [0], [1], [0, 0, 1, 1], [], []>} : vector<1x256xf32>, vector<256x1024xf32>, vector<1x1024xf32> -> vector<1x1024xf32>
    %75 = arith.addf %73, %74 : vector<1x1024xf32>
    %76 = vector.extract_strided_slice %75 {offsets = [0, 0], sizes = [1, 256], strides = [1, 1]} : vector<1x1024xf32> to vector<1x256xf32>
    %77 = arith.negf %76 : vector<1x256xf32>
    %78 = math.exp %77 : vector<1x256xf32>
    %cst_27 = arith.constant 1.000000e+00 : f32
    %79 = vector.broadcast %cst_27 : f32 to vector<1x256xf32>
    %80 = arith.addf %79, %78 : vector<1x256xf32>
    %81 = arith.divf %79, %80 : vector<1x256xf32>
    %82 = vector.extract_strided_slice %75 {offsets = [0, 256], sizes = [1, 256], strides = [1, 1]} : vector<1x1024xf32> to vector<1x256xf32>
    %83 = arith.negf %82 : vector<1x256xf32>
    %84 = math.exp %83 : vector<1x256xf32>
    %cst_28 = arith.constant 1.000000e+00 : f32
    %85 = vector.broadcast %cst_28 : f32 to vector<1x256xf32>
    %86 = arith.addf %85, %84 : vector<1x256xf32>
    %87 = arith.divf %85, %86 : vector<1x256xf32>
    %88 = vector.extract_strided_slice %75 {offsets = [0, 512], sizes = [1, 256], strides = [1, 1]} : vector<1x1024xf32> to vector<1x256xf32>
    %89 = math.tanh %88 : vector<1x256xf32>
    %90 = vector.extract_strided_slice %75 {offsets = [0, 768], sizes = [1, 256], strides = [1, 1]} : vector<1x1024xf32> to vector<1x256xf32>
    %91 = arith.negf %90 : vector<1x256xf32>
    %92 = math.exp %91 : vector<1x256xf32>
    %cst_29 = arith.constant 1.000000e+00 : f32
    %93 = vector.broadcast %cst_29 : f32 to vector<1x256xf32>
    %94 = arith.addf %93, %92 : vector<1x256xf32>
    %95 = arith.divf %93, %94 : vector<1x256xf32>
    %96 = arith.mulf %87, %67 : vector<1x256xf32>
    %97 = arith.mulf %81, %89 : vector<1x256xf32>
    %98 = arith.addf %96, %97 : vector<1x256xf32>
    %99 = math.tanh %98 : vector<1x256xf32>
    %100 = arith.mulf %95, %99 : vector<1x256xf32>
    %101 = arith.index_cast %c2_i32 : i32 to index
    %c0_30 = arith.constant 0 : index
    %102 = vector.load %arg10[%101, %c0_30] : memref<8x256xf32, #tpu.memory_space<vmem>>, vector<1x256xf32>
    tpu.vector_store %arg10[%101, %c0_30], %100 {strides = array<i32>} : memref<8x256xf32, #tpu.memory_space<vmem>>, vector<1x256xf32>,
    %c3_i32 = arith.constant 3 : i32
    %103 = arith.index_cast %c3_i32 : i32 to index
    %c0_31 = arith.constant 0 : index
    %104 = vector.load %arg9[%103, %c0_31] : memref<8x1024xf32, #tpu.memory_space<vmem>>, vector<1x1024xf32>
    %cst_32 = arith.constant dense<0.000000e+00> : vector<1x1024xf32>
    %105 = tpu.matmul %100, %7, %cst_32 {dimension_numbers = #tpu.dot_dimension_numbers<[1], [0], [0], [1], [0, 0, 1, 1], [], []>} : vector<1x256xf32>, vector<256x1024xf32>, vector<1x1024xf32> -> vector<1x1024xf32>
    %106 = arith.addf %104, %105 : vector<1x1024xf32>
    %107 = vector.extract_strided_slice %106 {offsets = [0, 0], sizes = [1, 256], strides = [1, 1]} : vector<1x1024xf32> to vector<1x256xf32>
    %108 = arith.negf %107 : vector<1x256xf32>
    %109 = math.exp %108 : vector<1x256xf32>
    %cst_33 = arith.constant 1.000000e+00 : f32
    %110 = vector.broadcast %cst_33 : f32 to vector<1x256xf32>
    %111 = arith.addf %110, %109 : vector<1x256xf32>
    %112 = arith.divf %110, %111 : vector<1x256xf32>
    %113 = vector.extract_strided_slice %106 {offsets = [0, 256], sizes = [1, 256], strides = [1, 1]} : vector<1x1024xf32> to vector<1x256xf32>
    %114 = arith.negf %113 : vector<1x256xf32>
    %115 = math.exp %114 : vector<1x256xf32>
    %cst_34 = arith.constant 1.000000e+00 : f32
    %116 = vector.broadcast %cst_34 : f32 to vector<1x256xf32>
    %117 = arith.addf %116, %115 : vector<1x256xf32>
    %118 = arith.divf %116, %117 : vector<1x256xf32>
    %119 = vector.extract_strided_slice %106 {offsets = [0, 512], sizes = [1, 256], strides = [1, 1]} : vector<1x1024xf32> to vector<1x256xf32>
    %120 = math.tanh %119 : vector<1x256xf32>
    %121 = vector.extract_strided_slice %106 {offsets = [0, 768], sizes = [1, 256], strides = [1, 1]} : vector<1x1024xf32> to vector<1x256xf32>
    %122 = arith.negf %121 : vector<1x256xf32>
    %123 = math.exp %122 : vector<1x256xf32>
    %cst_35 = arith.constant 1.000000e+00 : f32
    %124 = vector.broadcast %cst_35 : f32 to vector<1x256xf32>
    %125 = arith.addf %124, %123 : vector<1x256xf32>
    %126 = arith.divf %124, %125 : vector<1x256xf32>
    %127 = arith.mulf %118, %98 : vector<1x256xf32>
    %128 = arith.mulf %112, %120 : vector<1x256xf32>
    %129 = arith.addf %127, %128 : vector<1x256xf32>
    %130 = math.tanh %129 : vector<1x256xf32>
    %131 = arith.mulf %126, %130 : vector<1x256xf32>
    %132 = arith.index_cast %c3_i32 : i32 to index
    %c0_36 = arith.constant 0 : index
    %133 = vector.load %arg10[%132, %c0_36] : memref<8x256xf32, #tpu.memory_space<vmem>>, vector<1x256xf32>
    tpu.vector_store %arg10[%132, %c0_36], %131 {strides = array<i32>} : memref<8x256xf32, #tpu.memory_space<vmem>>, vector<1x256xf32>,
    %c4_i32 = arith.constant 4 : i32
    %134 = arith.index_cast %c4_i32 : i32 to index
    %c0_37 = arith.constant 0 : index
    %135 = vector.load %arg9[%134, %c0_37] : memref<8x1024xf32, #tpu.memory_space<vmem>>, vector<1x1024xf32>
    %cst_38 = arith.constant dense<0.000000e+00> : vector<1x1024xf32>
    %136 = tpu.matmul %131, %7, %cst_38 {dimension_numbers = #tpu.dot_dimension_numbers<[1], [0], [0], [1], [0, 0, 1, 1], [], []>} : vector<1x256xf32>, vector<256x1024xf32>, vector<1x1024xf32> -> vector<1x1024xf32>
    %137 = arith.addf %135, %136 : vector<1x1024xf32>
    %138 = vector.extract_strided_slice %137 {offsets = [0, 0], sizes = [1, 256], strides = [1, 1]} : vector<1x1024xf32> to vector<1x256xf32>
    %139 = arith.negf %138 : vector<1x256xf32>
    %140 = math.exp %139 : vector<1x256xf32>
    %cst_39 = arith.constant 1.000000e+00 : f32
    %141 = vector.broadcast %cst_39 : f32 to vector<1x256xf32>
    %142 = arith.addf %141, %140 : vector<1x256xf32>
    %143 = arith.divf %141, %142 : vector<1x256xf32>
    %144 = vector.extract_strided_slice %137 {offsets = [0, 256], sizes = [1, 256], strides = [1, 1]} : vector<1x1024xf32> to vector<1x256xf32>
    %145 = arith.negf %144 : vector<1x256xf32>
    %146 = math.exp %145 : vector<1x256xf32>
    %cst_40 = arith.constant 1.000000e+00 : f32
    %147 = vector.broadcast %cst_40 : f32 to vector<1x256xf32>
    %148 = arith.addf %147, %146 : vector<1x256xf32>
    %149 = arith.divf %147, %148 : vector<1x256xf32>
    %150 = vector.extract_strided_slice %137 {offsets = [0, 512], sizes = [1, 256], strides = [1, 1]} : vector<1x1024xf32> to vector<1x256xf32>
    %151 = math.tanh %150 : vector<1x256xf32>
    %152 = vector.extract_strided_slice %137 {offsets = [0, 768], sizes = [1, 256], strides = [1, 1]} : vector<1x1024xf32> to vector<1x256xf32>
    %153 = arith.negf %152 : vector<1x256xf32>
    %154 = math.exp %153 : vector<1x256xf32>
    %cst_41 = arith.constant 1.000000e+00 : f32
    %155 = vector.broadcast %cst_41 : f32 to vector<1x256xf32>
    %156 = arith.addf %155, %154 : vector<1x256xf32>
    %157 = arith.divf %155, %156 : vector<1x256xf32>
    %158 = arith.mulf %149, %129 : vector<1x256xf32>
    %159 = arith.mulf %143, %151 : vector<1x256xf32>
    %160 = arith.addf %158, %159 : vector<1x256xf32>
    %161 = math.tanh %160 : vector<1x256xf32>
    %162 = arith.mulf %157, %161 : vector<1x256xf32>
    %163 = arith.index_cast %c4_i32 : i32 to index
    %c0_42 = arith.constant 0 : index
    %164 = vector.load %arg10[%163, %c0_42] : memref<8x256xf32, #tpu.memory_space<vmem>>, vector<1x256xf32>
    tpu.vector_store %arg10[%163, %c0_42], %162 {strides = array<i32>} : memref<8x256xf32, #tpu.memory_space<vmem>>, vector<1x256xf32>,
    %c5_i32 = arith.constant 5 : i32
    %165 = arith.index_cast %c5_i32 : i32 to index
    %c0_43 = arith.constant 0 : index
    %166 = vector.load %arg9[%165, %c0_43] : memref<8x1024xf32, #tpu.memory_space<vmem>>, vector<1x1024xf32>
    %cst_44 = arith.constant dense<0.000000e+00> : vector<1x1024xf32>
    %167 = tpu.matmul %162, %7, %cst_44 {dimension_numbers = #tpu.dot_dimension_numbers<[1], [0], [0], [1], [0, 0, 1, 1], [], []>} : vector<1x256xf32>, vector<256x1024xf32>, vector<1x1024xf32> -> vector<1x1024xf32>
    %168 = arith.addf %166, %167 : vector<1x1024xf32>
    %169 = vector.extract_strided_slice %168 {offsets = [0, 0], sizes = [1, 256], strides = [1, 1]} : vector<1x1024xf32> to vector<1x256xf32>
    %170 = arith.negf %169 : vector<1x256xf32>
    %171 = math.exp %170 : vector<1x256xf32>
    %cst_45 = arith.constant 1.000000e+00 : f32
    %172 = vector.broadcast %cst_45 : f32 to vector<1x256xf32>
    %173 = arith.addf %172, %171 : vector<1x256xf32>
    %174 = arith.divf %172, %173 : vector<1x256xf32>
    %175 = vector.extract_strided_slice %168 {offsets = [0, 256], sizes = [1, 256], strides = [1, 1]} : vector<1x1024xf32> to vector<1x256xf32>
    %176 = arith.negf %175 : vector<1x256xf32>
    %177 = math.exp %176 : vector<1x256xf32>
    %cst_46 = arith.constant 1.000000e+00 : f32
    %178 = vector.broadcast %cst_46 : f32 to vector<1x256xf32>
    %179 = arith.addf %178, %177 : vector<1x256xf32>
    %180 = arith.divf %178, %179 : vector<1x256xf32>
    %181 = vector.extract_strided_slice %168 {offsets = [0, 512], sizes = [1, 256], strides = [1, 1]} : vector<1x1024xf32> to vector<1x256xf32>
    %182 = math.tanh %181 : vector<1x256xf32>
    %183 = vector.extract_strided_slice %168 {offsets = [0, 768], sizes = [1, 256], strides = [1, 1]} : vector<1x1024xf32> to vector<1x256xf32>
    %184 = arith.negf %183 : vector<1x256xf32>
    %185 = math.exp %184 : vector<1x256xf32>
    %cst_47 = arith.constant 1.000000e+00 : f32
    %186 = vector.broadcast %cst_47 : f32 to vector<1x256xf32>
    %187 = arith.addf %186, %185 : vector<1x256xf32>
    %188 = arith.divf %186, %187 : vector<1x256xf32>
    %189 = arith.mulf %180, %160 : vector<1x256xf32>
    %190 = arith.mulf %174, %182 : vector<1x256xf32>
    %191 = arith.addf %189, %190 : vector<1x256xf32>
    %192 = math.tanh %191 : vector<1x256xf32>
    %193 = arith.mulf %188, %192 : vector<1x256xf32>
    %194 = arith.index_cast %c5_i32 : i32 to index
    %c0_48 = arith.constant 0 : index
    %195 = vector.load %arg10[%194, %c0_48] : memref<8x256xf32, #tpu.memory_space<vmem>>, vector<1x256xf32>
    tpu.vector_store %arg10[%194, %c0_48], %193 {strides = array<i32>} : memref<8x256xf32, #tpu.memory_space<vmem>>, vector<1x256xf32>,
    %c6_i32 = arith.constant 6 : i32
    %196 = arith.index_cast %c6_i32 : i32 to index
    %c0_49 = arith.constant 0 : index
    %197 = vector.load %arg9[%196, %c0_49] : memref<8x1024xf32, #tpu.memory_space<vmem>>, vector<1x1024xf32>
    %cst_50 = arith.constant dense<0.000000e+00> : vector<1x1024xf32>
    %198 = tpu.matmul %193, %7, %cst_50 {dimension_numbers = #tpu.dot_dimension_numbers<[1], [0], [0], [1], [0, 0, 1, 1], [], []>} : vector<1x256xf32>, vector<256x1024xf32>, vector<1x1024xf32> -> vector<1x1024xf32>
    %199 = arith.addf %197, %198 : vector<1x1024xf32>
    %200 = vector.extract_strided_slice %199 {offsets = [0, 0], sizes = [1, 256], strides = [1, 1]} : vector<1x1024xf32> to vector<1x256xf32>
    %201 = arith.negf %200 : vector<1x256xf32>
    %202 = math.exp %201 : vector<1x256xf32>
    %cst_51 = arith.constant 1.000000e+00 : f32
    %203 = vector.broadcast %cst_51 : f32 to vector<1x256xf32>
    %204 = arith.addf %203, %202 : vector<1x256xf32>
    %205 = arith.divf %203, %204 : vector<1x256xf32>
    %206 = vector.extract_strided_slice %199 {offsets = [0, 256], sizes = [1, 256], strides = [1, 1]} : vector<1x1024xf32> to vector<1x256xf32>
    %207 = arith.negf %206 : vector<1x256xf32>
    %208 = math.exp %207 : vector<1x256xf32>
    %cst_52 = arith.constant 1.000000e+00 : f32
    %209 = vector.broadcast %cst_52 : f32 to vector<1x256xf32>
    %210 = arith.addf %209, %208 : vector<1x256xf32>
    %211 = arith.divf %209, %210 : vector<1x256xf32>
    %212 = vector.extract_strided_slice %199 {offsets = [0, 512], sizes = [1, 256], strides = [1, 1]} : vector<1x1024xf32> to vector<1x256xf32>
    %213 = math.tanh %212 : vector<1x256xf32>
    %214 = vector.extract_strided_slice %199 {offsets = [0, 768], sizes = [1, 256], strides = [1, 1]} : vector<1x1024xf32> to vector<1x256xf32>
    %215 = arith.negf %214 : vector<1x256xf32>
    %216 = math.exp %215 : vector<1x256xf32>
    %cst_53 = arith.constant 1.000000e+00 : f32
    %217 = vector.broadcast %cst_53 : f32 to vector<1x256xf32>
    %218 = arith.addf %217, %216 : vector<1x256xf32>
    %219 = arith.divf %217, %218 : vector<1x256xf32>
    %220 = arith.mulf %211, %191 : vector<1x256xf32>
    %221 = arith.mulf %205, %213 : vector<1x256xf32>
    %222 = arith.addf %220, %221 : vector<1x256xf32>
    %223 = math.tanh %222 : vector<1x256xf32>
    %224 = arith.mulf %219, %223 : vector<1x256xf32>
    %225 = arith.index_cast %c6_i32 : i32 to index
    %c0_54 = arith.constant 0 : index
    %226 = vector.load %arg10[%225, %c0_54] : memref<8x256xf32, #tpu.memory_space<vmem>>, vector<1x256xf32>
    tpu.vector_store %arg10[%225, %c0_54], %224 {strides = array<i32>} : memref<8x256xf32, #tpu.memory_space<vmem>>, vector<1x256xf32>,
    %c7_i32 = arith.constant 7 : i32
    %227 = arith.index_cast %c7_i32 : i32 to index
    %c0_55 = arith.constant 0 : index
    %228 = vector.load %arg9[%227, %c0_55] : memref<8x1024xf32, #tpu.memory_space<vmem>>, vector<1x1024xf32>
    %cst_56 = arith.constant dense<0.000000e+00> : vector<1x1024xf32>
    %229 = tpu.matmul %224, %7, %cst_56 {dimension_numbers = #tpu.dot_dimension_numbers<[1], [0], [0], [1], [0, 0, 1, 1], [], []>} : vector<1x256xf32>, vector<256x1024xf32>, vector<1x1024xf32> -> vector<1x1024xf32>
    %230 = arith.addf %228, %229 : vector<1x1024xf32>
    %231 = vector.extract_strided_slice %230 {offsets = [0, 0], sizes = [1, 256], strides = [1, 1]} : vector<1x1024xf32> to vector<1x256xf32>
    %232 = arith.negf %231 : vector<1x256xf32>
    %233 = math.exp %232 : vector<1x256xf32>
    %cst_57 = arith.constant 1.000000e+00 : f32
    %234 = vector.broadcast %cst_57 : f32 to vector<1x256xf32>
    %235 = arith.addf %234, %233 : vector<1x256xf32>
    %236 = arith.divf %234, %235 : vector<1x256xf32>
    %237 = vector.extract_strided_slice %230 {offsets = [0, 256], sizes = [1, 256], strides = [1, 1]} : vector<1x1024xf32> to vector<1x256xf32>
    %238 = arith.negf %237 : vector<1x256xf32>
    %239 = math.exp %238 : vector<1x256xf32>
    %cst_58 = arith.constant 1.000000e+00 : f32
    %240 = vector.broadcast %cst_58 : f32 to vector<1x256xf32>
    %241 = arith.addf %240, %239 : vector<1x256xf32>
    %242 = arith.divf %240, %241 : vector<1x256xf32>
    %243 = vector.extract_strided_slice %230 {offsets = [0, 512], sizes = [1, 256], strides = [1, 1]} : vector<1x1024xf32> to vector<1x256xf32>
    %244 = math.tanh %243 : vector<1x256xf32>
    %245 = vector.extract_strided_slice %230 {offsets = [0, 768], sizes = [1, 256], strides = [1, 1]} : vector<1x1024xf32> to vector<1x256xf32>
    %246 = arith.negf %245 : vector<1x256xf32>
    %247 = math.exp %246 : vector<1x256xf32>
    %cst_59 = arith.constant 1.000000e+00 : f32
    %248 = vector.broadcast %cst_59 : f32 to vector<1x256xf32>
    %249 = arith.addf %248, %247 : vector<1x256xf32>
    %250 = arith.divf %248, %249 : vector<1x256xf32>
    %251 = arith.mulf %242, %222 : vector<1x256xf32>
    %252 = arith.mulf %236, %244 : vector<1x256xf32>
    %253 = arith.addf %251, %252 : vector<1x256xf32>
    %254 = math.tanh %253 : vector<1x256xf32>
    %255 = arith.mulf %250, %254 : vector<1x256xf32>
    %256 = arith.index_cast %c7_i32 : i32 to index
    %c0_60 = arith.constant 0 : index
    %257 = vector.load %arg10[%256, %c0_60] : memref<8x256xf32, #tpu.memory_space<vmem>>, vector<1x256xf32>
    tpu.vector_store %arg10[%256, %c0_60], %255 {strides = array<i32>} : memref<8x256xf32, #tpu.memory_space<vmem>>, vector<1x256xf32>,
    %c8_i32 = arith.constant 8 : i32
    %c0_61 = arith.constant 0 : index
    %c0_62 = arith.constant 0 : index
    %258 = vector.load %arg10[%c0_61, %c0_62] : memref<8x256xf32, #tpu.memory_space<vmem>>, vector<8x256xf32>
    %c0_63 = arith.constant 0 : index
    %c0_64 = arith.constant 0 : index
    %259 = vector.load %arg6[%c0_63, %c0_64] : memref<256x128xf32, #tpu.memory_space<vmem>>, vector<256x128xf32>
    %cst_65 = arith.constant dense<0.000000e+00> : vector<8x128xf32>
    %260 = tpu.matmul %258, %259, %cst_65 {dimension_numbers = #tpu.dot_dimension_numbers<[1], [0], [0], [1], [0, 0, 1, 1], [], []>} : vector<8x256xf32>, vector<256x128xf32>, vector<8x128xf32> -> vector<8x128xf32>
    %c0_66 = arith.constant 0 : index
    %c0_67 = arith.constant 0 : index
    %261 = vector.load %arg7[%c0_66, %c0_67] : memref<1x128xf32, #tpu.memory_space<vmem>>, vector<1x128xf32>
    %262 = vector.broadcast %261 : vector<1x128xf32> to vector<8x128xf32>
    %263 = arith.addf %260, %262 : vector<8x128xf32>
    %c0_68 = arith.constant 0 : index
    %c0_69 = arith.constant 0 : index
    %264 = vector.load %arg8[%c0_68, %c0_69] : memref<8x128xf32, #tpu.memory_space<vmem>>, vector<8x128xf32>
    tpu.vector_store %arg8[%c0_68, %c0_69], %263 {strides = array<i32>} : memref<8x128xf32, #tpu.memory_space<vmem>>, vector<8x128xf32>,
    return
  }
}

</mosaic_0001>

<llo_original>
// kernel: tpu_custom_call.1
$region0: #{tpu_custom_call.1}
  #allocation0 [shape = 'u32[]', space=smem, size = 0x4, offset = 0x4, fixed_abs, tag = 'smem constant byte address 0x4 - core index']
  #allocation1 [shape = 'u32[144,128]{1,0:T(1,128)}', space=vmem, size = 0x12000, scoped, tag = 'internal scratch']
  #allocation2 [shape = 'f32[8,1024]{1,0:T(8,128)}', space=vmem, size = 0x8000, scoped, tag = 'scratch operand']
  #allocation3 [shape = 'f32[8,256]{1,0:T(8,128)}', space=vmem, size = 0x2000, scoped, tag = 'scratch operand']
  %s0 = inlined_call_operand.hbm [shape: f32[8,384], index: 0, kind: input, shape index: {}]
  %s1 = inlined_call_operand.hbm [shape: f32[384,1024], index: 1, kind: input, shape index: {}]
  %s2 = inlined_call_operand.hbm [shape: f32[256,1024], index: 2, kind: input, shape index: {}]
  %s3 = inlined_call_operand.hbm [shape: f32[1,1024], index: 3, kind: input, shape index: {}]
  %s4 = inlined_call_operand.hbm [shape: f32[1,256], index: 4, kind: input, shape index: {}]
  %s5 = inlined_call_operand.hbm [shape: f32[1,256], index: 5, kind: input, shape index: {}]
  %s6 = inlined_call_operand.hbm [shape: f32[256,128], index: 6, kind: input, shape index: {}]
  %s7 = inlined_call_operand.hbm [shape: f32[1,128], index: 7, kind: input, shape index: {}]
  %s8 = inlined_call_operand.hbm [shape: f32[8,128], index: 8, kind: output, shape index: {}]
  %s9 = sld [smem:[#allocation0]]
  $region74: #{tpu_custom_call.1} parent=0
    _
  %s11 = ssub.s32 1, %s9
  %s12 = scalar_select 0, %s11, %s9
  $region1: #{tpu_custom_call.1} parent=0
    #allocation4 [shape = 'u8[12288]{0}', space=vmem, size = 0x3000, scoped, tag = 'input window, operand 0, single buffered']
    #allocation5 [shape = 's32[1]{0}', space=sflag, size = 0x4, scoped, tag = 'scoped memory for tpu_custom_call.1']
    #allocation6 [shape = 's32[1]{0}', space=sflag, size = 0x4, scoped, tag = 'scoped memory for tpu_custom_call.1']
    #allocation7 [shape = 'u8[1572864]{0}', space=vmem, size = 0x180000, scoped, tag = 'input window, operand 1, single buffered']
    #allocation8 [shape = 's32[1]{0}', space=sflag, size = 0x4, scoped, tag = 'scoped memory for tpu_custom_call.1']
    #allocation9 [shape = 'u8[1048576]{0}', space=vmem, size = 0x100000, scoped, tag = 'input window, operand 2, single buffered']
    #allocation10 [shape = 'u8[4096]{0}', space=vmem, size = 0x1000, scoped, tag = 'input window, operand 3, single buffered']
    #allocation11 [shape = 's32[1]{0}', space=sflag, size = 0x4, scoped, tag = 'scoped memory for tpu_custom_call.1']
    #allocation12 [shape = 'u8[1024]{0}', space=vmem, size = 0x400, scoped, tag = 'input window, operand 4, single buffered']
    #allocation13 [shape = 'u8[1024]{0}', space=vmem, size = 0x400, scoped, tag = 'input window, operand 5, single buffered']
    #allocation14 [shape = 's32[1]{0}', space=sflag, size = 0x4, scoped, tag = 'scoped memory for tpu_custom_call.1']
    #allocation15 [shape = 'u8[131072]{0}', space=vmem, size = 0x20000, scoped, tag = 'input window, operand 6, single buffered']
    #allocation16 [shape = 'u8[512]{0}', space=vmem, size = 0x400, scoped, tag = 'input window, operand 7, single buffered']
    #allocation17 [shape = 's32[1]{0}', space=sflag, size = 0x4, scoped, tag = 'scoped memory for tpu_custom_call.1']
    #allocation18 [shape = 'u8[4096]{0}', space=vmem, size = 0x1000, scoped, tag = 'output window, operand 0, single buffered']
    %13 = vsyncpa [#allocation5], 0
    %14 = vsyncpa [#allocation8], 0
    %15 = vsyncpa [#allocation11], 0
    %16 = vsyncpa [#allocation14], 0
    %17 = vsyncpa [#allocation17], 0
    %18 = vsyncpa [#allocation6], 0
    // Predicated region
    $region2: #{tpu_custom_call.1} parent=1 // pred_check
      _
    $region3: #{tpu_custom_call.1} parent=1 // pred_check_branch
      %20 = sbr.rel (0) target = $region5
    $region4: #{tpu_custom_call.1} parent=1 // pred_region
      %s22 = ssub.s32 384, 384
      %23 = vsyncadd [#allocation5], %s22
      %s25 = sshll.u32 [#allocation4], 4
      %s26 = int_to_ptr.vmem [resolvable:$true] %s25
      %28 = dma.hbm_to_vmem [thread:$0]  %s0, 384, %s26, [#allocation5]
    $region5: #{tpu_custom_call.1} parent=1 // pred_fallthru
      _
    // Predicated region
    $region6: #{tpu_custom_call.1} parent=1 // pred_check
      _
    $region7: #{tpu_custom_call.1} parent=1 // pred_check_branch
      %30 = sbr.rel (0) target = $region9
    $region8: #{tpu_custom_call.1} parent=1 // pred_region
      %s32 = ssub.s32 49152, 49152
      %33 = vsyncadd [#allocation8], %s32
      %s34 = sshll.u32 [#allocation7], 4
      %s35 = int_to_ptr.vmem [resolvable:$true] %s34
      %40 = dma.hbm_to_vmem [thread:$0]  %s1, 49152, %s35, [#allocation8], 1024, 1024, 64
    $region9: #{tpu_custom_call.1} parent=1 // pred_fallthru
      _
    // Predicated region
    $region10: #{tpu_custom_call.1} parent=1 // pred_check
      _
    $region11: #{tpu_custom_call.1} parent=1 // pred_check_branch
      %42 = sbr.rel (0) target = $region13
    $region12: #{tpu_custom_call.1} parent=1 // pred_region
      %s44 = ssub.s32 32768, 32768
      %45 = vsyncadd [#allocation8], %s44
      %s46 = sshll.u32 [#allocation9], 4
      %s47 = int_to_ptr.vmem [resolvable:$true] %s46
      %52 = dma.hbm_to_vmem [thread:$0]  %s2, 32768, %s47, [#allocation8], 1024, 1024, 64
    $region13: #{tpu_custom_call.1} parent=1 // pred_fallthru
      _
    // Predicated region
    $region14: #{tpu_custom_call.1} parent=1 // pred_check
      _
    $region15: #{tpu_custom_call.1} parent=1 // pred_check_branch
      %54 = sbr.rel (0) target = $region17
    $region16: #{tpu_custom_call.1} parent=1 // pred_region
      %s56 = ssub.s32 128, 128
      %57 = vsyncadd [#allocation11], %s56
      %s59 = sshll.u32 [#allocation10], 4
      %s60 = int_to_ptr.vmem [resolvable:$true] %s59
      %62 = dma.hbm_to_vmem [thread:$0]  %s3, 128, %s60, [#allocation11]
    $region17: #{tpu_custom_call.1} parent=1 // pred_fallthru
      _
    // Predicated region
    $region18: #{tpu_custom_call.1} parent=1 // pred_check
      _
    $region19: #{tpu_custom_call.1} parent=1 // pred_check_branch
      %64 = sbr.rel (0) target = $region21
    $region20: #{tpu_custom_call.1} parent=1 // pred_region
      %s66 = ssub.s32 32, 32
      %67 = vsyncadd [#allocation11], %s66
      %s69 = sshll.u32 [#allocation12], 4
      %s70 = int_to_ptr.vmem [resolvable:$true] %s69
      %72 = dma.hbm_to_vmem [thread:$0]  %s4, 32, %s70, [#allocation11]
    $region21: #{tpu_custom_call.1} parent=1 // pred_fallthru
      _
    // Predicated region
    $region22: #{tpu_custom_call.1} parent=1 // pred_check
      _
    $region23: #{tpu_custom_call.1} parent=1 // pred_check_branch
      %74 = sbr.rel (0) target = $region25
    $region24: #{tpu_custom_call.1} parent=1 // pred_region
      %s76 = ssub.s32 32, 32
      %77 = vsyncadd [#allocation14], %s76
      %s79 = sshll.u32 [#allocation13], 4
      %s80 = int_to_ptr.vmem [resolvable:$true] %s79
      %82 = dma.hbm_to_vmem [thread:$0]  %s5, 32, %s80, [#allocation14]
    $region25: #{tpu_custom_call.1} parent=1 // pred_fallthru
      _
    // Predicated region
    $region26: #{tpu_custom_call.1} parent=1 // pred_check
      _
    $region27: #{tpu_custom_call.1} parent=1 // pred_check_branch
      %84 = sbr.rel (0) target = $region29
    $region28: #{tpu_custom_call.1} parent=1 // pred_region
      %s86 = ssub.s32 4096, 4096
      %87 = vsyncadd [#allocation14], %s86
      %s88 = sshll.u32 [#allocation15], 4
      %s89 = int_to_ptr.vmem [resolvable:$true] %s88
      %94 = dma.hbm_to_vmem [thread:$0]  %s6, 4096, %s89, [#allocation14], 128, 128, 8
    $region29: #{tpu_custom_call.1} parent=1 // pred_fallthru
      _
    // Predicated region
    $region30: #{tpu_custom_call.1} parent=1 // pred_check
      _
    $region31: #{tpu_custom_call.1} parent=1 // pred_check_branch
      %96 = sbr.rel (0) target = $region33
    $region32: #{tpu_custom_call.1} parent=1 // pred_region
      %s98 = ssub.s32 16, 16
      %99 = vsyncadd [#allocation17], %s98
      %s101 = sshll.u32 [#allocation16], 4
      %s102 = int_to_ptr.vmem [resolvable:$true] %s101
      %104 = dma.hbm_to_vmem [thread:$0]  %s7, 16, %s102, [#allocation17]
    $region33: #{tpu_custom_call.1} parent=1 // pred_fallthru
      _
    // Predicated region
    $region34: #{tpu_custom_call.1} parent=1 // pred_check
      _
    $region35: #{tpu_custom_call.1} parent=1 // pred_check_branch
      %106 = sbr.rel (0) target = $region37
    $region36: #{tpu_custom_call.1} parent=1 // pred_region
      %107 = dma.done [#allocation5], 384
    $region37: #{tpu_custom_call.1} parent=1 // pred_fallthru
      _
    // Predicated region
    $region38: #{tpu_custom_call.1} parent=1 // pred_check
      _
    $region39: #{tpu_custom_call.1} parent=1 // pred_check_branch
      %109 = sbr.rel (0) target = $region41
    $region40: #{tpu_custom_call.1} parent=1 // pred_region
      %110 = dma.done [#allocation8], 49152
    $region41: #{tpu_custom_call.1} parent=1 // pred_fallthru
      _
    // Predicated region
    $region42: #{tpu_custom_call.1} parent=1 // pred_check
      _
    $region43: #{tpu_custom_call.1} parent=1 // pred_check_branch
      %112 = sbr.rel (0) target = $region45
    $region44: #{tpu_custom_call.1} parent=1 // pred_region
      %113 = dma.done [#allocation8], 32768
    $region45: #{tpu_custom_call.1} parent=1 // pred_fallthru
      _
    // Predicated region
    $region46: #{tpu_custom_call.1} parent=1 // pred_check
      _
    $region47: #{tpu_custom_call.1} parent=1 // pred_check_branch
      %115 = sbr.rel (0) target = $region49
    $region48: #{tpu_custom_call.1} parent=1 // pred_region
      %116 = dma.done [#allocation11], 128
    $region49: #{tpu_custom_call.1} parent=1 // pred_fallthru
      _
    // Predicated region
    $region50: #{tpu_custom_call.1} parent=1 // pred_check
      _
    $region51: #{tpu_custom_call.1} parent=1 // pred_check_branch
      %118 = sbr.rel (0) target = $region53
    $region52: #{tpu_custom_call.1} parent=1 // pred_region
      %119 = dma.done [#allocation11], 32
    $region53: #{tpu_custom_call.1} parent=1 // pred_fallthru
      _
    // Predicated region
    $region54: #{tpu_custom_call.1} parent=1 // pred_check
      _
    $region55: #{tpu_custom_call.1} parent=1 // pred_check_branch
      %121 = sbr.rel (0) target = $region57
    $region56: #{tpu_custom_call.1} parent=1 // pred_region
      %122 = dma.done [#allocation14], 32
    $region57: #{tpu_custom_call.1} parent=1 // pred_fallthru
      _
    // Predicated region
    $region58: #{tpu_custom_call.1} parent=1 // pred_check
      _
    $region59: #{tpu_custom_call.1} parent=1 // pred_check_branch
      %124 = sbr.rel (0) target = $region61
    $region60: #{tpu_custom_call.1} parent=1 // pred_region
      %125 = dma.done [#allocation14], 4096
    $region61: #{tpu_custom_call.1} parent=1 // pred_fallthru
      _
    // Predicated region
    $region62: #{tpu_custom_call.1} parent=1 // pred_check
      _
    $region63: #{tpu_custom_call.1} parent=1 // pred_check_branch
      %127 = sbr.rel (0) target = $region65
    $region64: #{tpu_custom_call.1} parent=1 // pred_region
      %128 = dma.done [#allocation17], 16
    $region65: #{tpu_custom_call.1} parent=1 // pred_fallthru
      _
    %v129 = vld [vmem:[#allocation4] sm:$0xff]
    %v130 = vld [vmem:[#allocation4 + $0x8] sm:$0xff]
    %v131 = vld [vmem:[#allocation4 + $0x10] sm:$0xff]
    %v132 = vld [vmem:[#allocation7] sm:$0xff]
    %v133 = vld [vmem:[#allocation7 + $0x8] sm:$0xff]
    %v134 = vld [vmem:[#allocation7 + $0x10] sm:$0xff]
    %v135 = vld [vmem:[#allocation7 + $0x18] sm:$0xff]
    %v136 = vld [vmem:[#allocation7 + $0x20] sm:$0xff]
    %v137 = vld [vmem:[#allocation7 + $0x28] sm:$0xff]
    %v138 = vld [vmem:[#allocation7 + $0x30] sm:$0xff]
    %v139 = vld [vmem:[#allocation7 + $0x38] sm:$0xff]
    %v140 = vld [vmem:[#allocation7 + $0x40] sm:$0xff]
    %v141 = vld [vmem:[#allocation7 + $0x48] sm:$0xff]
    %v142 = vld [vmem:[#allocation7 + $0x50] sm:$0xff]
    %v143 = vld [vmem:[#allocation7 + $0x58] sm:$0xff]
    %v144 = vld [vmem:[#allocation7 + $0x60] sm:$0xff]
    %v145 = vld [vmem:[#allocation7 + $0x68] sm:$0xff]
    %v146 = vld [vmem:[#allocation7 + $0x70] sm:$0xff]
    %v147 = vld [vmem:[#allocation7 + $0x78] sm:$0xff]
    %v148 = vld [vmem:[#allocation7 + $0x80] sm:$0xff]
    %v149 = vld [vmem:[#allocation7 + $0x88] sm:$0xff]
    %v150 = vld [vmem:[#allocation7 + $0x90] sm:$0xff]
    %v151 = vld [vmem:[#allocation7 + $0x98] sm:$0xff]
    %v152 = vld [vmem:[#allocation7 + $0xa0] sm:$0xff]
    %v153 = vld [vmem:[#allocation7 + $0xa8] sm:$0xff]
    %v154 = vld [vmem:[#allocation7 + $0xb0] sm:$0xff]
    %v155 = vld [vmem:[#allocation7 + $0xb8] sm:$0xff]
    %v156 = vld [vmem:[#allocation7 + $0xc0] sm:$0xff]
    %v157 = vld [vmem:[#allocation7 + $0xc8] sm:$0xff]
    %v158 = vld [vmem:[#allocation7 + $0xd0] sm:$0xff]
    %v159 = vld [vmem:[#allocation7 + $0xd8] sm:$0xff]
    %v160 = vld [vmem:[#allocation7 + $0xe0] sm:$0xff]
    %v161 = vld [vmem:[#allocation7 + $0xe8] sm:$0xff]
    %v162 = vld [vmem:[#allocation7 + $0xf0] sm:$0xff]
    %v163 = vld [vmem:[#allocation7 + $0xf8] sm:$0xff]
    %v164 = vld [vmem:[#allocation7 + $0x100] sm:$0xff]
    %v165 = vld [vmem:[#allocation7 + $0x108] sm:$0xff]
    %v166 = vld [vmem:[#allocation7 + $0x110] sm:$0xff]
    %v167 = vld [vmem:[#allocation7 + $0x118] sm:$0xff]
    %v168 = vld [vmem:[#allocation7 + $0x120] sm:$0xff]
    %v169 = vld [vmem:[#allocation7 + $0x128] sm:$0xff]
    %v170 = vld [vmem:[#allocation7 + $0x130] sm:$0xff]
    %v171 = vld [vmem:[#allocation7 + $0x138] sm:$0xff]
    %v172 = vld [vmem:[#allocation7 + $0x140] sm:$0xff]
    %v173 = vld [vmem:[#allocation7 + $0x148] sm:$0xff]
    %v174 = vld [vmem:[#allocation7 + $0x150] sm:$0xff]
    %v175 = vld [vmem:[#allocation7 + $0x158] sm:$0xff]
    %v176 = vld [vmem:[#allocation7 + $0x160] sm:$0xff]
    %v177 = vld [vmem:[#allocation7 + $0x168] sm:$0xff]
    %v178 = vld [vmem:[#allocation7 + $0x170] sm:$0xff]
    %v179 = vld [vmem:[#allocation7 + $0x178] sm:$0xff]
    %v180 = vld [vmem:[#allocation7 + $0x180] sm:$0xff]
    %v181 = vld [vmem:[#allocation7 + $0x188] sm:$0xff]
    %v182 = vld [vmem:[#allocation7 + $0x190] sm:$0xff]
    %v183 = vld [vmem:[#allocation7 + $0x198] sm:$0xff]
    %v184 = vld [vmem:[#allocation7 + $0x1a0] sm:$0xff]
    %v185 = vld [vmem:[#allocation7 + $0x1a8] sm:$0xff]
    %v186 = vld [vmem:[#allocation7 + $0x1b0] sm:$0xff]
    %v187 = vld [vmem:[#allocation7 + $0x1b8] sm:$0xff]
    %v188 = vld [vmem:[#allocation7 + $0x1c0] sm:$0xff]
    %v189 = vld [vmem:[#allocation7 + $0x1c8] sm:$0xff]
    %v190 = vld [vmem:[#allocation7 + $0x1d0] sm:$0xff]
    %v191 = vld [vmem:[#allocation7 + $0x1d8] sm:$0xff]
    %v192 = vld [vmem:[#allocation7 + $0x1e0] sm:$0xff]
    %v193 = vld [vmem:[#allocation7 + $0x1e8] sm:$0xff]
    %v194 = vld [vmem:[#allocation7 + $0x1f0] sm:$0xff]
    %v195 = vld [vmem:[#allocation7 + $0x1f8] sm:$0xff]
    %v196 = vld [vmem:[#allocation7 + $0x200] sm:$0xff]
    %v197 = vld [vmem:[#allocation7 + $0x208] sm:$0xff]
    %v198 = vld [vmem:[#allocation7 + $0x210] sm:$0xff]
    %v199 = vld [vmem:[#allocation7 + $0x218] sm:$0xff]
    %v200 = vld [vmem:[#allocation7 + $0x220] sm:$0xff]
    %v201 = vld [vmem:[#allocation7 + $0x228] sm:$0xff]
    %v202 = vld [vmem:[#allocation7 + $0x230] sm:$0xff]
    %v203 = vld [vmem:[#allocation7 + $0x238] sm:$0xff]
    %v204 = vld [vmem:[#allocation7 + $0x240] sm:$0xff]
    %v205 = vld [vmem:[#allocation7 + $0x248] sm:$0xff]
    %v206 = vld [vmem:[#allocation7 + $0x250] sm:$0xff]
    %v207 = vld [vmem:[#allocation7 + $0x258] sm:$0xff]
    %v208 = vld [vmem:[#allocation7 + $0x260] sm:$0xff]
    %v209 = vld [vmem:[#allocation7 + $0x268] sm:$0xff]
    %v210 = vld [vmem:[#allocation7 + $0x270] sm:$0xff]
    %v211 = vld [vmem:[#allocation7 + $0x278] sm:$0xff]
    %v212 = vld [vmem:[#allocation7 + $0x280] sm:$0xff]
    %v213 = vld [vmem:[#allocation7 + $0x288] sm:$0xff]
    %v214 = vld [vmem:[#allocation7 + $0x290] sm:$0xff]
    %v215 = vld [vmem:[#allocation7 + $0x298] sm:$0xff]
    %v216 = vld [vmem:[#allocation7 + $0x2a0] sm:$0xff]
    %v217 = vld [vmem:[#allocation7 + $0x2a8] sm:$0xff]
    %v218 = vld [vmem:[#allocation7 + $0x2b0] sm:$0xff]
    %v219 = vld [vmem:[#allocation7 + $0x2b8] sm:$0xff]
    %v220 = vld [vmem:[#allocation7 + $0x2c0] sm:$0xff]
    %v221 = vld [vmem:[#allocation7 + $0x2c8] sm:$0xff]
    %v222 = vld [vmem:[#allocation7 + $0x2d0] sm:$0xff]
    %v223 = vld [vmem:[#allocation7 + $0x2d8] sm:$0xff]
    %v224 = vld [vmem:[#allocation7 + $0x2e0] sm:$0xff]
    %v225 = vld [vmem:[#allocation7 + $0x2e8] sm:$0xff]
    %v226 = vld [vmem:[#allocation7 + $0x2f0] sm:$0xff]
    %v227 = vld [vmem:[#allocation7 + $0x2f8] sm:$0xff]
    %v228 = vld [vmem:[#allocation7 + $0x300] sm:$0xff]
    %v229 = vld [vmem:[#allocation7 + $0x308] sm:$0xff]
    %v230 = vld [vmem:[#allocation7 + $0x310] sm:$0xff]
    %v231 = vld [vmem:[#allocation7 + $0x318] sm:$0xff]
    %v232 = vld [vmem:[#allocation7 + $0x320] sm:$0xff]
    %v233 = vld [vmem:[#allocation7 + $0x328] sm:$0xff]
    %v234 = vld [vmem:[#allocation7 + $0x330] sm:$0xff]
    %v235 = vld [vmem:[#allocation7 + $0x338] sm:$0xff]
    %v236 = vld [vmem:[#allocation7 + $0x340] sm:$0xff]
    %v237 = vld [vmem:[#allocation7 + $0x348] sm:$0xff]
    %v238 = vld [vmem:[#allocation7 + $0x350] sm:$0xff]
    %v239 = vld [vmem:[#allocation7 + $0x358] sm:$0xff]
    %v240 = vld [vmem:[#allocation7 + $0x360] sm:$0xff]
    %v241 = vld [vmem:[#allocation7 + $0x368] sm:$0xff]
    %v242 = vld [vmem:[#allocation7 + $0x370] sm:$0xff]
    %v243 = vld [vmem:[#allocation7 + $0x378] sm:$0xff]
    %v244 = vld [vmem:[#allocation7 + $0x380] sm:$0xff]
    %v245 = vld [vmem:[#allocation7 + $0x388] sm:$0xff]
    %v246 = vld [vmem:[#allocation7 + $0x390] sm:$0xff]
    %v247 = vld [vmem:[#allocation7 + $0x398] sm:$0xff]
    %v248 = vld [vmem:[#allocation7 + $0x3a0] sm:$0xff]
    %v249 = vld [vmem:[#allocation7 + $0x3a8] sm:$0xff]
    %v250 = vld [vmem:[#allocation7 + $0x3b0] sm:$0xff]
    %v251 = vld [vmem:[#allocation7 + $0x3b8] sm:$0xff]
    %v252 = vld [vmem:[#allocation7 + $0x3c0] sm:$0xff]
    %v253 = vld [vmem:[#allocation7 + $0x3c8] sm:$0xff]
    %v254 = vld [vmem:[#allocation7 + $0x3d0] sm:$0xff]
    %v255 = vld [vmem:[#allocation7 + $0x3d8] sm:$0xff]
    %v256 = vld [vmem:[#allocation7 + $0x3e0] sm:$0xff]
    %v257 = vld [vmem:[#allocation7 + $0x3e8] sm:$0xff]
    %v258 = vld [vmem:[#allocation7 + $0x3f0] sm:$0xff]
    %v259 = vld [vmem:[#allocation7 + $0x3f8] sm:$0xff]
    %v260 = vld [vmem:[#allocation7 + $0x400] sm:$0xff]
    %v261 = vld [vmem:[#allocation7 + $0x408] sm:$0xff]
    %v262 = vld [vmem:[#allocation7 + $0x410] sm:$0xff]
    %v263 = vld [vmem:[#allocation7 + $0x418] sm:$0xff]
    %v264 = vld [vmem:[#allocation7 + $0x420] sm:$0xff]
    %v265 = vld [vmem:[#allocation7 + $0x428] sm:$0xff]
    %v266 = vld [vmem:[#allocation7 + $0x430] sm:$0xff]
    %v267 = vld [vmem:[#allocation7 + $0x438] sm:$0xff]
    %v268 = vld [vmem:[#allocation7 + $0x440] sm:$0xff]
    %v269 = vld [vmem:[#allocation7 + $0x448] sm:$0xff]
    %v270 = vld [vmem:[#allocation7 + $0x450] sm:$0xff]
    %v271 = vld [vmem:[#allocation7 + $0x458] sm:$0xff]
    %v272 = vld [vmem:[#allocation7 + $0x460] sm:$0xff]
    %v273 = vld [vmem:[#allocation7 + $0x468] sm:$0xff]
    %v274 = vld [vmem:[#allocation7 + $0x470] sm:$0xff]
    %v275 = vld [vmem:[#allocation7 + $0x478] sm:$0xff]
    %v276 = vld [vmem:[#allocation7 + $0x480] sm:$0xff]
    %v277 = vld [vmem:[#allocation7 + $0x488] sm:$0xff]
    %v278 = vld [vmem:[#allocation7 + $0x490] sm:$0xff]
    %v279 = vld [vmem:[#allocation7 + $0x498] sm:$0xff]
    %v280 = vld [vmem:[#allocation7 + $0x4a0] sm:$0xff]
    %v281 = vld [vmem:[#allocation7 + $0x4a8] sm:$0xff]
    %v282 = vld [vmem:[#allocation7 + $0x4b0] sm:$0xff]
    %v283 = vld [vmem:[#allocation7 + $0x4b8] sm:$0xff]
    %v284 = vld [vmem:[#allocation7 + $0x4c0] sm:$0xff]
    %v285 = vld [vmem:[#allocation7 + $0x4c8] sm:$0xff]
    %v286 = vld [vmem:[#allocation7 + $0x4d0] sm:$0xff]
    %v287 = vld [vmem:[#allocation7 + $0x4d8] sm:$0xff]
    %v288 = vld [vmem:[#allocation7 + $0x4e0] sm:$0xff]
    %v289 = vld [vmem:[#allocation7 + $0x4e8] sm:$0xff]
    %v290 = vld [vmem:[#allocation7 + $0x4f0] sm:$0xff]
    %v291 = vld [vmem:[#allocation7 + $0x4f8] sm:$0xff]
    %v292 = vld [vmem:[#allocation7 + $0x500] sm:$0xff]
    %v293 = vld [vmem:[#allocation7 + $0x508] sm:$0xff]
    %v294 = vld [vmem:[#allocation7 + $0x510] sm:$0xff]
    %v295 = vld [vmem:[#allocation7 + $0x518] sm:$0xff]
    %v296 = vld [vmem:[#allocation7 + $0x520] sm:$0xff]
    %v297 = vld [vmem:[#allocation7 + $0x528] sm:$0xff]
    %v298 = vld [vmem:[#allocation7 + $0x530] sm:$0xff]
    %v299 = vld [vmem:[#allocation7 + $0x538] sm:$0xff]
    %v300 = vld [vmem:[#allocation7 + $0x540] sm:$0xff]
    %v301 = vld [vmem:[#allocation7 + $0x548] sm:$0xff]
    %v302 = vld [vmem:[#allocation7 + $0x550] sm:$0xff]
    %v303 = vld [vmem:[#allocation7 + $0x558] sm:$0xff]
    %v304 = vld [vmem:[#allocation7 + $0x560] sm:$0xff]
    %v305 = vld [vmem:[#allocation7 + $0x568] sm:$0xff]
    %v306 = vld [vmem:[#allocation7 + $0x570] sm:$0xff]
    %v307 = vld [vmem:[#allocation7 + $0x578] sm:$0xff]
    %v308 = vld [vmem:[#allocation7 + $0x580] sm:$0xff]
    %v309 = vld [vmem:[#allocation7 + $0x588] sm:$0xff]
    %v310 = vld [vmem:[#allocation7 + $0x590] sm:$0xff]
    %v311 = vld [vmem:[#allocation7 + $0x598] sm:$0xff]
    %v312 = vld [vmem:[#allocation7 + $0x5a0] sm:$0xff]
    %v313 = vld [vmem:[#allocation7 + $0x5a8] sm:$0xff]
    %v314 = vld [vmem:[#allocation7 + $0x5b0] sm:$0xff]
    %v315 = vld [vmem:[#allocation7 + $0x5b8] sm:$0xff]
    %v316 = vld [vmem:[#allocation7 + $0x5c0] sm:$0xff]
    %v317 = vld [vmem:[#allocation7 + $0x5c8] sm:$0xff]
    %v318 = vld [vmem:[#allocation7 + $0x5d0] sm:$0xff]
    %v319 = vld [vmem:[#allocation7 + $0x5d8] sm:$0xff]
    %v320 = vld [vmem:[#allocation7 + $0x5e0] sm:$0xff]
    %v321 = vld [vmem:[#allocation7 + $0x5e8] sm:$0xff]
    %v322 = vld [vmem:[#allocation7 + $0x5f0] sm:$0xff]
    %v323 = vld [vmem:[#allocation7 + $0x5f8] sm:$0xff]
    %v324 = vld [vmem:[#allocation7 + $0x600] sm:$0xff]
    %v325 = vld [vmem:[#allocation7 + $0x608] sm:$0xff]
    %v326 = vld [vmem:[#allocation7 + $0x610] sm:$0xff]
    %v327 = vld [vmem:[#allocation7 + $0x618] sm:$0xff]
    %v328 = vld [vmem:[#allocation7 + $0x620] sm:$0xff]
    %v329 = vld [vmem:[#allocation7 + $0x628] sm:$0xff]
    %v330 = vld [vmem:[#allocation7 + $0x630] sm:$0xff]
    %v331 = vld [vmem:[#allocation7 + $0x638] sm:$0xff]
    %v332 = vld [vmem:[#allocation7 + $0x640] sm:$0xff]
    %v333 = vld [vmem:[#allocation7 + $0x648] sm:$0xff]
    %v334 = vld [vmem:[#allocation7 + $0x650] sm:$0xff]
    %v335 = vld [vmem:[#allocation7 + $0x658] sm:$0xff]
    %v336 = vld [vmem:[#allocation7 + $0x660] sm:$0xff]
    %v337 = vld [vmem:[#allocation7 + $0x668] sm:$0xff]
    %v338 = vld [vmem:[#allocation7 + $0x670] sm:$0xff]
    %v339 = vld [vmem:[#allocation7 + $0x678] sm:$0xff]
    %v340 = vld [vmem:[#allocation7 + $0x680] sm:$0xff]
    %v341 = vld [vmem:[#allocation7 + $0x688] sm:$0xff]
    %v342 = vld [vmem:[#allocation7 + $0x690] sm:$0xff]
    %v343 = vld [vmem:[#allocation7 + $0x698] sm:$0xff]
    %v344 = vld [vmem:[#allocation7 + $0x6a0] sm:$0xff]
    %v345 = vld [vmem:[#allocation7 + $0x6a8] sm:$0xff]
    %v346 = vld [vmem:[#allocation7 + $0x6b0] sm:$0xff]
    %v347 = vld [vmem:[#allocation7 + $0x6b8] sm:$0xff]
    %v348 = vld [vmem:[#allocation7 + $0x6c0] sm:$0xff]
    %v349 = vld [vmem:[#allocation7 + $0x6c8] sm:$0xff]
    %v350 = vld [vmem:[#allocation7 + $0x6d0] sm:$0xff]
    %v351 = vld [vmem:[#allocation7 + $0x6d8] sm:$0xff]
    %v352 = vld [vmem:[#allocation7 + $0x6e0] sm:$0xff]
    %v353 = vld [vmem:[#allocation7 + $0x6e8] sm:$0xff]
    %v354 = vld [vmem:[#allocation7 + $0x6f0] sm:$0xff]
    %v355 = vld [vmem:[#allocation7 + $0x6f8] sm:$0xff]
    %v356 = vld [vmem:[#allocation7 + $0x700] sm:$0xff]
    %v357 = vld [vmem:[#allocation7 + $0x708] sm:$0xff]
    %v358 = vld [vmem:[#allocation7 + $0x710] sm:$0xff]
    %v359 = vld [vmem:[#allocation7 + $0x718] sm:$0xff]
    %v360 = vld [vmem:[#allocation7 + $0x720] sm:$0xff]
    %v361 = vld [vmem:[#allocation7 + $0x728] sm:$0xff]
    %v362 = vld [vmem:[#allocation7 + $0x730] sm:$0xff]
    %v363 = vld [vmem:[#allocation7 + $0x738] sm:$0xff]
    %v364 = vld [vmem:[#allocation7 + $0x740] sm:$0xff]
    %v365 = vld [vmem:[#allocation7 + $0x748] sm:$0xff]
    %v366 = vld [vmem:[#allocation7 + $0x750] sm:$0xff]
    %v367 = vld [vmem:[#allocation7 + $0x758] sm:$0xff]
    %v368 = vld [vmem:[#allocation7 + $0x760] sm:$0xff]
    %v369 = vld [vmem:[#allocation7 + $0x768] sm:$0xff]
    %v370 = vld [vmem:[#allocation7 + $0x770] sm:$0xff]
    %v371 = vld [vmem:[#allocation7 + $0x778] sm:$0xff]
    %v372 = vld [vmem:[#allocation7 + $0x780] sm:$0xff]
    %v373 = vld [vmem:[#allocation7 + $0x788] sm:$0xff]
    %v374 = vld [vmem:[#allocation7 + $0x790] sm:$0xff]
    %v375 = vld [vmem:[#allocation7 + $0x798] sm:$0xff]
    %v376 = vld [vmem:[#allocation7 + $0x7a0] sm:$0xff]
    %v377 = vld [vmem:[#allocation7 + $0x7a8] sm:$0xff]
    %v378 = vld [vmem:[#allocation7 + $0x7b0] sm:$0xff]
    %v379 = vld [vmem:[#allocation7 + $0x7b8] sm:$0xff]
    %v380 = vld [vmem:[#allocation7 + $0x7c0] sm:$0xff]
    %v381 = vld [vmem:[#allocation7 + $0x7c8] sm:$0xff]
    %v382 = vld [vmem:[#allocation7 + $0x7d0] sm:$0xff]
    %v383 = vld [vmem:[#allocation7 + $0x7d8] sm:$0xff]
    %v384 = vld [vmem:[#allocation7 + $0x7e0] sm:$0xff]
    %v385 = vld [vmem:[#allocation7 + $0x7e8] sm:$0xff]
    %v386 = vld [vmem:[#allocation7 + $0x7f0] sm:$0xff]
    %v387 = vld [vmem:[#allocation7 + $0x7f8] sm:$0xff]
    %v388 = vld [vmem:[#allocation7 + $0x800] sm:$0xff]
    %v389 = vld [vmem:[#allocation7 + $0x808] sm:$0xff]
    %v390 = vld [vmem:[#allocation7 + $0x810] sm:$0xff]
    %v391 = vld [vmem:[#allocation7 + $0x818] sm:$0xff]
    %v392 = vld [vmem:[#allocation7 + $0x820] sm:$0xff]
    %v393 = vld [vmem:[#allocation7 + $0x828] sm:$0xff]
    %v394 = vld [vmem:[#allocation7 + $0x830] sm:$0xff]
    %v395 = vld [vmem:[#allocation7 + $0x838] sm:$0xff]
    %v396 = vld [vmem:[#allocation7 + $0x840] sm:$0xff]
    %v397 = vld [vmem:[#allocation7 + $0x848] sm:$0xff]
    %v398 = vld [vmem:[#allocation7 + $0x850] sm:$0xff]
    %v399 = vld [vmem:[#allocation7 + $0x858] sm:$0xff]
    %v400 = vld [vmem:[#allocation7 + $0x860] sm:$0xff]
    %v401 = vld [vmem:[#allocation7 + $0x868] sm:$0xff]
    %v402 = vld [vmem:[#allocation7 + $0x870] sm:$0xff]
    %v403 = vld [vmem:[#allocation7 + $0x878] sm:$0xff]
    %v404 = vld [vmem:[#allocation7 + $0x880] sm:$0xff]
    %v405 = vld [vmem:[#allocation7 + $0x888] sm:$0xff]
    %v406 = vld [vmem:[#allocation7 + $0x890] sm:$0xff]
    %v407 = vld [vmem:[#allocation7 + $0x898] sm:$0xff]
    %v408 = vld [vmem:[#allocation7 + $0x8a0] sm:$0xff]
    %v409 = vld [vmem:[#allocation7 + $0x8a8] sm:$0xff]
    %v410 = vld [vmem:[#allocation7 + $0x8b0] sm:$0xff]
    %v411 = vld [vmem:[#allocation7 + $0x8b8] sm:$0xff]
    %v412 = vld [vmem:[#allocation7 + $0x8c0] sm:$0xff]
    %v413 = vld [vmem:[#allocation7 + $0x8c8] sm:$0xff]
    %v414 = vld [vmem:[#allocation7 + $0x8d0] sm:$0xff]
    %v415 = vld [vmem:[#allocation7 + $0x8d8] sm:$0xff]
    %v416 = vld [vmem:[#allocation7 + $0x8e0] sm:$0xff]
    %v417 = vld [vmem:[#allocation7 + $0x8e8] sm:$0xff]
    %v418 = vld [vmem:[#allocation7 + $0x8f0] sm:$0xff]
    %v419 = vld [vmem:[#allocation7 + $0x8f8] sm:$0xff]
    %v420 = vld [vmem:[#allocation7 + $0x900] sm:$0xff]
    %v421 = vld [vmem:[#allocation7 + $0x908] sm:$0xff]
    %v422 = vld [vmem:[#allocation7 + $0x910] sm:$0xff]
    %v423 = vld [vmem:[#allocation7 + $0x918] sm:$0xff]
    %v424 = vld [vmem:[#allocation7 + $0x920] sm:$0xff]
    %v425 = vld [vmem:[#allocation7 + $0x928] sm:$0xff]
    %v426 = vld [vmem:[#allocation7 + $0x930] sm:$0xff]
    %v427 = vld [vmem:[#allocation7 + $0x938] sm:$0xff]
    %v428 = vld [vmem:[#allocation7 + $0x940] sm:$0xff]
    %v429 = vld [vmem:[#allocation7 + $0x948] sm:$0xff]
    %v430 = vld [vmem:[#allocation7 + $0x950] sm:$0xff]
    %v431 = vld [vmem:[#allocation7 + $0x958] sm:$0xff]
    %v432 = vld [vmem:[#allocation7 + $0x960] sm:$0xff]
    %v433 = vld [vmem:[#allocation7 + $0x968] sm:$0xff]
    %v434 = vld [vmem:[#allocation7 + $0x970] sm:$0xff]
    %v435 = vld [vmem:[#allocation7 + $0x978] sm:$0xff]
    %v436 = vld [vmem:[#allocation7 + $0x980] sm:$0xff]
    %v437 = vld [vmem:[#allocation7 + $0x988] sm:$0xff]
    %v438 = vld [vmem:[#allocation7 + $0x990] sm:$0xff]
    %v439 = vld [vmem:[#allocation7 + $0x998] sm:$0xff]
    %v440 = vld [vmem:[#allocation7 + $0x9a0] sm:$0xff]
    %v441 = vld [vmem:[#allocation7 + $0x9a8] sm:$0xff]
    %v442 = vld [vmem:[#allocation7 + $0x9b0] sm:$0xff]
    %v443 = vld [vmem:[#allocation7 + $0x9b8] sm:$0xff]
    %v444 = vld [vmem:[#allocation7 + $0x9c0] sm:$0xff]
    %v445 = vld [vmem:[#allocation7 + $0x9c8] sm:$0xff]
    %v446 = vld [vmem:[#allocation7 + $0x9d0] sm:$0xff]
    %v447 = vld [vmem:[#allocation7 + $0x9d8] sm:$0xff]
    %v448 = vld [vmem:[#allocation7 + $0x9e0] sm:$0xff]
    %v449 = vld [vmem:[#allocation7 + $0x9e8] sm:$0xff]
    %v450 = vld [vmem:[#allocation7 + $0x9f0] sm:$0xff]
    %v451 = vld [vmem:[#allocation7 + $0x9f8] sm:$0xff]
    %v452 = vld [vmem:[#allocation7 + $0xa00] sm:$0xff]
    %v453 = vld [vmem:[#allocation7 + $0xa08] sm:$0xff]
    %v454 = vld [vmem:[#allocation7 + $0xa10] sm:$0xff]
    %v455 = vld [vmem:[#allocation7 + $0xa18] sm:$0xff]
    %v456 = vld [vmem:[#allocation7 + $0xa20] sm:$0xff]
    %v457 = vld [vmem:[#allocation7 + $0xa28] sm:$0xff]
    %v458 = vld [vmem:[#allocation7 + $0xa30] sm:$0xff]
    %v459 = vld [vmem:[#allocation7 + $0xa38] sm:$0xff]
    %v460 = vld [vmem:[#allocation7 + $0xa40] sm:$0xff]
    %v461 = vld [vmem:[#allocation7 + $0xa48] sm:$0xff]
    %v462 = vld [vmem:[#allocation7 + $0xa50] sm:$0xff]
    %v463 = vld [vmem:[#allocation7 + $0xa58] sm:$0xff]
    %v464 = vld [vmem:[#allocation7 + $0xa60] sm:$0xff]
    %v465 = vld [vmem:[#allocation7 + $0xa68] sm:$0xff]
    %v466 = vld [vmem:[#allocation7 + $0xa70] sm:$0xff]
    %v467 = vld [vmem:[#allocation7 + $0xa78] sm:$0xff]
    %v468 = vld [vmem:[#allocation7 + $0xa80] sm:$0xff]
    %v469 = vld [vmem:[#allocation7 + $0xa88] sm:$0xff]
    %v470 = vld [vmem:[#allocation7 + $0xa90] sm:$0xff]
    %v471 = vld [vmem:[#allocation7 + $0xa98] sm:$0xff]
    %v472 = vld [vmem:[#allocation7 + $0xaa0] sm:$0xff]
    %v473 = vld [vmem:[#allocation7 + $0xaa8] sm:$0xff]
    %v474 = vld [vmem:[#allocation7 + $0xab0] sm:$0xff]
    %v475 = vld [vmem:[#allocation7 + $0xab8] sm:$0xff]
    %v476 = vld [vmem:[#allocation7 + $0xac0] sm:$0xff]
    %v477 = vld [vmem:[#allocation7 + $0xac8] sm:$0xff]
    %v478 = vld [vmem:[#allocation7 + $0xad0] sm:$0xff]
    %v479 = vld [vmem:[#allocation7 + $0xad8] sm:$0xff]
    %v480 = vld [vmem:[#allocation7 + $0xae0] sm:$0xff]
    %v481 = vld [vmem:[#allocation7 + $0xae8] sm:$0xff]
    %v482 = vld [vmem:[#allocation7 + $0xaf0] sm:$0xff]
    %v483 = vld [vmem:[#allocation7 + $0xaf8] sm:$0xff]
    %v484 = vld [vmem:[#allocation7 + $0xb00] sm:$0xff]
    %v485 = vld [vmem:[#allocation7 + $0xb08] sm:$0xff]
    %v486 = vld [vmem:[#allocation7 + $0xb10] sm:$0xff]
    %v487 = vld [vmem:[#allocation7 + $0xb18] sm:$0xff]
    %v488 = vld [vmem:[#allocation7 + $0xb20] sm:$0xff]
    %v489 = vld [vmem:[#allocation7 + $0xb28] sm:$0xff]
    %v490 = vld [vmem:[#allocation7 + $0xb30] sm:$0xff]
    %v491 = vld [vmem:[#allocation7 + $0xb38] sm:$0xff]
    %v492 = vld [vmem:[#allocation7 + $0xb40] sm:$0xff]
    %v493 = vld [vmem:[#allocation7 + $0xb48] sm:$0xff]
    %v494 = vld [vmem:[#allocation7 + $0xb50] sm:$0xff]
    %v495 = vld [vmem:[#allocation7 + $0xb58] sm:$0xff]
    %v496 = vld [vmem:[#allocation7 + $0xb60] sm:$0xff]
    %v497 = vld [vmem:[#allocation7 + $0xb68] sm:$0xff]
    %v498 = vld [vmem:[#allocation7 + $0xb70] sm:$0xff]
    %v499 = vld [vmem:[#allocation7 + $0xb78] sm:$0xff]
    %v500 = vld [vmem:[#allocation7 + $0xb80] sm:$0xff]
    %v501 = vld [vmem:[#allocation7 + $0xb88] sm:$0xff]
    %v502 = vld [vmem:[#allocation7 + $0xb90] sm:$0xff]
    %v503 = vld [vmem:[#allocation7 + $0xb98] sm:$0xff]
    %v504 = vld [vmem:[#allocation7 + $0xba0] sm:$0xff]
    %v505 = vld [vmem:[#allocation7 + $0xba8] sm:$0xff]
    %v506 = vld [vmem:[#allocation7 + $0xbb0] sm:$0xff]
    %v507 = vld [vmem:[#allocation7 + $0xbb8] sm:$0xff]
    %v508 = vld [vmem:[#allocation7 + $0xbc0] sm:$0xff]
    %v509 = vld [vmem:[#allocation7 + $0xbc8] sm:$0xff]
    %v510 = vld [vmem:[#allocation7 + $0xbd0] sm:$0xff]
    %v511 = vld [vmem:[#allocation7 + $0xbd8] sm:$0xff]
    %v512 = vld [vmem:[#allocation7 + $0xbe0] sm:$0xff]
    %v513 = vld [vmem:[#allocation7 + $0xbe8] sm:$0xff]
    %v514 = vld [vmem:[#allocation7 + $0xbf0] sm:$0xff]
    %v515 = vld [vmem:[#allocation7 + $0xbf8] sm:$0xff]
    %v516 = vld [vmem:[#allocation10] sm:$0xff]
    %v518 = vlaneseq
    %v519 = vshrl.u32 %v518, 7
    %v520 = vsub.s32 0, %v519
    %v521 = vrot.slane %v516, %v520
    %v522 = vlaneseq
    %v523 = vshrl.u32 %v522, 7
    %v524 = vsub.s32 1, %v523
    %v525 = vrot.slane %v516, %v524
    %v526 = vlaneseq
    %v527 = vshrl.u32 %v526, 7
    %v528 = vsub.s32 2, %v527
    %v529 = vrot.slane %v516, %v528
    %v530 = vlaneseq
    %v531 = vshrl.u32 %v530, 7
    %v532 = vsub.s32 3, %v531
    %v533 = vrot.slane %v516, %v532
    %v534 = vlaneseq
    %v535 = vshrl.u32 %v534, 7
    %v536 = vsub.s32 4, %v535
    %v537 = vrot.slane %v516, %v536
    %v538 = vlaneseq
    %v539 = vshrl.u32 %v538, 7
    %v540 = vsub.s32 5, %v539
    %v541 = vrot.slane %v516, %v540
    %v542 = vlaneseq
    %v543 = vshrl.u32 %v542, 7
    %v544 = vsub.s32 6, %v543
    %v545 = vrot.slane %v516, %v544
    %v546 = vlaneseq
    %v547 = vshrl.u32 %v546, 7
    %v548 = vsub.s32 7, %v547
    %v549 = vrot.slane %v516, %v548
    %558 = vmatprep.subr.mxu0 %v253
    %559 = vmatpush1.msra.mxu0 %v252
    %560 = vmatprep.subr.mxu0 %v245
    %561 = vmatpush1.msra.mxu0 %v244
    %562 = vmatprep.subr.mxu0 %v237
    %563 = vmatpush1.msra.mxu0 %v236
    %564 = vmatprep.subr.mxu0 %v229
    %565 = vmatpush1.msra.mxu0 %v228
    %566 = vmatprep.subr.mxu0 %v221
    %567 = vmatpush1.msra.mxu0 %v220
    %568 = vmatprep.subr.mxu0 %v213
    %569 = vmatpush1.msra.mxu0 %v212
    %570 = vmatprep.subr.mxu0 %v205
    %571 = vmatpush1.msra.mxu0 %v204
    %572 = vmatprep.subr.mxu0 %v197
    %573 = vmatpush1.msra.mxu0 %v196
    %574 = vmatprep.subr.mxu0 %v189
    %575 = vmatpush1.msra.mxu0 %v188
    %576 = vmatprep.subr.mxu0 %v181
    %577 = vmatpush1.msra.mxu0 %v180
    %578 = vmatprep.subr.mxu0 %v173
    %579 = vmatpush1.msra.mxu0 %v172
    %580 = vmatprep.subr.mxu0 %v165
    %581 = vmatpush1.msra.mxu0 %v164
    %582 = vmatprep.subr.mxu0 %v157
    %583 = vmatpush1.msra.mxu0 %v156
    %584 = vmatprep.subr.mxu0 %v149
    %585 = vmatpush1.msra.mxu0 %v148
    %586 = vmatprep.subr.mxu0 %v141
    %587 = vmatpush1.msra.mxu0 %v140
    %588 = vmatprep.subr.mxu0 %v133
    %589 = vmatpush1.msra.mxu0 %v132
    %590 = vmatprep.subr.mxu0 %v381
    %591 = vmatpush2.msra.mxu0 %v380
    %592 = vmatprep.subr.mxu0 %v373
    %593 = vmatpush2.msra.mxu0 %v372
    %594 = vmatprep.subr.mxu0 %v365
    %595 = vmatpush2.msra.mxu0 %v364
    %596 = vmatprep.subr.mxu0 %v357
    %597 = vmatpush2.msra.mxu0 %v356
    %598 = vmatprep.subr.mxu0 %v349
    %599 = vmatpush2.msra.mxu0 %v348
    %600 = vmatprep.subr.mxu0 %v341
    %601 = vmatpush2.msra.mxu0 %v340
    %602 = vmatprep.subr.mxu0 %v333
    %603 = vmatpush2.msra.mxu0 %v332
    %604 = vmatprep.subr.mxu0 %v325
    %605 = vmatpush2.msra.mxu0 %v324
    %606 = vmatprep.subr.mxu0 %v317
    %607 = vmatpush2.msra.mxu0 %v316
    %608 = vmatprep.subr.mxu0 %v309
    %609 = vmatpush2.msra.mxu0 %v308
    %610 = vmatprep.subr.mxu0 %v301
    %611 = vmatpush2.msra.mxu0 %v300
    %612 = vmatprep.subr.mxu0 %v293
    %613 = vmatpush2.msra.mxu0 %v292
    %614 = vmatprep.subr.mxu0 %v285
    %615 = vmatpush2.msra.mxu0 %v284
    %616 = vmatprep.subr.mxu0 %v277
    %617 = vmatpush2.msra.mxu0 %v276
    %618 = vmatprep.subr.mxu0 %v269
    %619 = vmatpush2.msra.mxu0 %v268
    %620 = vmatprep.subr.mxu0 %v261
    %621 = vmatpush2.msra.mxu0 %v260
    %622 = vmatprep.mubr.f32.mxu0 %v130
    %623 = vmatmul.mubr.f32.gmra.mxu0 %v129
    %v624 = vpop.f32.mrf.mxu0
    %v625 = vadd.f32 %v521, %v624
    %v626 = vpop.f32.mrf.mxu0
    %v627 = vadd.f32 %v525, %v626
    %628 = vdwg.mxu0
    %629 = vmatprep.subr.mxu0 %v509
    %630 = vmatpush1.msra.mxu0 %v508
    %631 = vmatprep.subr.mxu0 %v501
    %632 = vmatpush1.msra.mxu0 %v500
    %633 = vmatprep.subr.mxu0 %v493
    %634 = vmatpush1.msra.mxu0 %v492
    %635 = vmatprep.subr.mxu0 %v485
    %636 = vmatpush1.msra.mxu0 %v484
    %637 = vmatprep.subr.mxu0 %v477
    %638 = vmatpush1.msra.mxu0 %v476
    %639 = vmatprep.subr.mxu0 %v469
    %640 = vmatpush1.msra.mxu0 %v468
    %641 = vmatprep.subr.mxu0 %v461
    %642 = vmatpush1.msra.mxu0 %v460
    %643 = vmatprep.subr.mxu0 %v453
    %644 = vmatpush1.msra.mxu0 %v452
    %645 = vmatprep.subr.mxu0 %v445
    %646 = vmatpush1.msra.mxu0 %v444
    %647 = vmatprep.subr.mxu0 %v437
    %648 = vmatpush1.msra.mxu0 %v436
    %649 = vmatprep.subr.mxu0 %v429
    %650 = vmatpush1.msra.mxu0 %v428
    %651 = vmatprep.subr.mxu0 %v421
    %652 = vmatpush1.msra.mxu0 %v420
    %653 = vmatprep.subr.mxu0 %v413
    %654 = vmatpush1.msra.mxu0 %v412
    %655 = vmatprep.subr.mxu0 %v405
    %656 = vmatpush1.msra.mxu0 %v404
    %657 = vmatprep.subr.mxu0 %v397
    %658 = vmatpush1.msra.mxu0 %v396
    %659 = vmatprep.subr.mxu0 %v389
    %660 = vmatpush1.msra.mxu0 %v388
    %661 = vmatprep.subr.mxu0 0.0
    %662 = vmatpush2.msra.mxu0 0.0
    %663 = vmatprep.subr.mxu0 0.0
    %664 = vmatpush2.msra.mxu0 0.0
    %665 = vmatprep.subr.mxu0 0.0
    %666 = vmatpush2.msra.mxu0 0.0
    %667 = vmatprep.subr.mxu0 0.0
    %668 = vmatpush2.msra.mxu0 0.0
    %669 = vmatprep.subr.mxu0 0.0
    %670 = vmatpush2.msra.mxu0 0.0
    %671 = vmatprep.subr.mxu0 0.0
    %672 = vmatpush2.msra.mxu0 0.0
    %673 = vmatprep.subr.mxu0 0.0
    %674 = vmatpush2.msra.mxu0 0.0
    %675 = vmatprep.subr.mxu0 0.0
    %676 = vmatpush2.msra.mxu0 0.0
    %677 = vmatprep.subr.mxu0 0.0
    %678 = vmatpush2.msra.mxu0 0.0
    %679 = vmatprep.subr.mxu0 0.0
    %680 = vmatpush2.msra.mxu0 0.0
    %681 = vmatprep.subr.mxu0 0.0
    %682 = vmatpush2.msra.mxu0 0.0
    %683 = vmatprep.subr.mxu0 0.0
    %684 = vmatpush2.msra.mxu0 0.0
    %685 = vmatprep.subr.mxu0 0.0
    %686 = vmatpush2.msra.mxu0 0.0
    %687 = vmatprep.subr.mxu0 0.0
    %688 = vmatpush2.msra.mxu0 0.0
    %689 = vmatprep.subr.mxu0 0.0
    %690 = vmatpush2.msra.mxu0 0.0
    %691 = vmatprep.subr.mxu0 0.0
    %692 = vmatpush2.msra.mxu0 0.0
    %693 = vmatprep.mubr.f32.mxu0 0.0
    %694 = vmatmul.mubr.f32.gmra.mxu0 %v131
    %v695 = vpop.f32.mrf.mxu0
    %v696 = vadd.f32 %v625, %v695
    %v697 = vpop.f32.mrf.mxu0
    %v698 = vadd.f32 %v627, %v697
    %699 = vdwg.mxu0
    %700 = vmatprep.subr.mxu0 %v255
    %701 = vmatpush1.msra.mxu0 %v254
    %702 = vmatprep.subr.mxu0 %v247
    %703 = vmatpush1.msra.mxu0 %v246
    %704 = vmatprep.subr.mxu0 %v239
    %705 = vmatpush1.msra.mxu0 %v238
    %706 = vmatprep.subr.mxu0 %v231
    %707 = vmatpush1.msra.mxu0 %v230
    %708 = vmatprep.subr.mxu0 %v223
    %709 = vmatpush1.msra.mxu0 %v222
    %710 = vmatprep.subr.mxu0 %v215
    %711 = vmatpush1.msra.mxu0 %v214
    %712 = vmatprep.subr.mxu0 %v207
    %713 = vmatpush1.msra.mxu0 %v206
    %714 = vmatprep.subr.mxu0 %v199
    %715 = vmatpush1.msra.mxu0 %v198
    %716 = vmatprep.subr.mxu0 %v191
    %717 = vmatpush1.msra.mxu0 %v190
    %718 = vmatprep.subr.mxu0 %v183
    %719 = vmatpush1.msra.mxu0 %v182
    %720 = vmatprep.subr.mxu0 %v175
    %721 = vmatpush1.msra.mxu0 %v174
    %722 = vmatprep.subr.mxu0 %v167
    %723 = vmatpush1.msra.mxu0 %v166
    %724 = vmatprep.subr.mxu0 %v159
    %725 = vmatpush1.msra.mxu0 %v158
    %726 = vmatprep.subr.mxu0 %v151
    %727 = vmatpush1.msra.mxu0 %v150
    %728 = vmatprep.subr.mxu0 %v143
    %729 = vmatpush1.msra.mxu0 %v142
    %730 = vmatprep.subr.mxu0 %v135
    %731 = vmatpush1.msra.mxu0 %v134
    %732 = vmatprep.subr.mxu0 %v383
    %733 = vmatpush2.msra.mxu0 %v382
    %734 = vmatprep.subr.mxu0 %v375
    %735 = vmatpush2.msra.mxu0 %v374
    %736 = vmatprep.subr.mxu0 %v367
    %737 = vmatpush2.msra.mxu0 %v366
    %738 = vmatprep.subr.mxu0 %v359
    %739 = vmatpush2.msra.mxu0 %v358
    %740 = vmatprep.subr.mxu0 %v351
    %741 = vmatpush2.msra.mxu0 %v350
    %742 = vmatprep.subr.mxu0 %v343
    %743 = vmatpush2.msra.mxu0 %v342
    %744 = vmatprep.subr.mxu0 %v335
    %745 = vmatpush2.msra.mxu0 %v334
    %746 = vmatprep.subr.mxu0 %v327
    %747 = vmatpush2.msra.mxu0 %v326
    %748 = vmatprep.subr.mxu0 %v319
    %749 = vmatpush2.msra.mxu0 %v318
    %750 = vmatprep.subr.mxu0 %v311
    %751 = vmatpush2.msra.mxu0 %v310
    %752 = vmatprep.subr.mxu0 %v303
    %753 = vmatpush2.msra.mxu0 %v302
    %754 = vmatprep.subr.mxu0 %v295
    %755 = vmatpush2.msra.mxu0 %v294
    %756 = vmatprep.subr.mxu0 %v287
    %757 = vmatpush2.msra.mxu0 %v286
    %758 = vmatprep.subr.mxu0 %v279
    %759 = vmatpush2.msra.mxu0 %v278
    %760 = vmatprep.subr.mxu0 %v271
    %761 = vmatpush2.msra.mxu0 %v270
    %762 = vmatprep.subr.mxu0 %v263
    %763 = vmatpush2.msra.mxu0 %v262
    %764 = vmatprep.mubr.f32.mxu0 %v130
    %765 = vmatmul.mubr.f32.gmra.mxu0 %v129
    %v766 = vpop.f32.mrf.mxu0
    %v767 = vadd.f32 %v529, %v766
    %v768 = vpop.f32.mrf.mxu0
    %v769 = vadd.f32 %v533, %v768
    %770 = vdwg.mxu0
    %771 = vmatprep.subr.mxu0 %v511
    %772 = vmatpush1.msra.mxu0 %v510
    %773 = vmatprep.subr.mxu0 %v503
    %774 = vmatpush1.msra.mxu0 %v502
    %775 = vmatprep.subr.mxu0 %v495
    %776 = vmatpush1.msra.mxu0 %v494
    %777 = vmatprep.subr.mxu0 %v487
    %778 = vmatpush1.msra.mxu0 %v486
    %779 = vmatprep.subr.mxu0 %v479
    %780 = vmatpush1.msra.mxu0 %v478
    %781 = vmatprep.subr.mxu0 %v471
    %782 = vmatpush1.msra.mxu0 %v470
    %783 = vmatprep.subr.mxu0 %v463
    %784 = vmatpush1.msra.mxu0 %v462
    %785 = vmatprep.subr.mxu0 %v455
    %786 = vmatpush1.msra.mxu0 %v454
    %787 = vmatprep.subr.mxu0 %v447
    %788 = vmatpush1.msra.mxu0 %v446
    %789 = vmatprep.subr.mxu0 %v439
    %790 = vmatpush1.msra.mxu0 %v438
    %791 = vmatprep.subr.mxu0 %v431
    %792 = vmatpush1.msra.mxu0 %v430
    %793 = vmatprep.subr.mxu0 %v423
    %794 = vmatpush1.msra.mxu0 %v422
    %795 = vmatprep.subr.mxu0 %v415
    %796 = vmatpush1.msra.mxu0 %v414
    %797 = vmatprep.subr.mxu0 %v407
    %798 = vmatpush1.msra.mxu0 %v406
    %799 = vmatprep.subr.mxu0 %v399
    %800 = vmatpush1.msra.mxu0 %v398
    %801 = vmatprep.subr.mxu0 %v391
    %802 = vmatpush1.msra.mxu0 %v390
    %803 = vmatprep.subr.mxu0 0.0
    %804 = vmatpush2.msra.mxu0 0.0
    %805 = vmatprep.subr.mxu0 0.0
    %806 = vmatpush2.msra.mxu0 0.0
    %807 = vmatprep.subr.mxu0 0.0
    %808 = vmatpush2.msra.mxu0 0.0
    %809 = vmatprep.subr.mxu0 0.0
    %810 = vmatpush2.msra.mxu0 0.0
    %811 = vmatprep.subr.mxu0 0.0
    %812 = vmatpush2.msra.mxu0 0.0
    %813 = vmatprep.subr.mxu0 0.0
    %814 = vmatpush2.msra.mxu0 0.0
    %815 = vmatprep.subr.mxu0 0.0
    %816 = vmatpush2.msra.mxu0 0.0
    %817 = vmatprep.subr.mxu0 0.0
    %818 = vmatpush2.msra.mxu0 0.0
    %819 = vmatprep.subr.mxu0 0.0
    %820 = vmatpush2.msra.mxu0 0.0
    %821 = vmatprep.subr.mxu0 0.0
    %822 = vmatpush2.msra.mxu0 0.0
    %823 = vmatprep.subr.mxu0 0.0
    %824 = vmatpush2.msra.mxu0 0.0
    %825 = vmatprep.subr.mxu0 0.0
    %826 = vmatpush2.msra.mxu0 0.0
    %827 = vmatprep.subr.mxu0 0.0
    %828 = vmatpush2.msra.mxu0 0.0
    %829 = vmatprep.subr.mxu0 0.0
    %830 = vmatpush2.msra.mxu0 0.0
    %831 = vmatprep.subr.mxu0 0.0
    %832 = vmatpush2.msra.mxu0 0.0
    %833 = vmatprep.subr.mxu0 0.0
    %834 = vmatpush2.msra.mxu0 0.0
    %835 = vmatprep.mubr.f32.mxu0 0.0
    %836 = vmatmul.mubr.f32.gmra.mxu0 %v131
    %v837 = vpop.f32.mrf.mxu0
    %v838 = vadd.f32 %v767, %v837
    %v839 = vpop.f32.mrf.mxu0
    %v840 = vadd.f32 %v769, %v839
    %841 = vdwg.mxu0
    %842 = vmatprep.subr.mxu0 %v257
    %843 = vmatpush1.msra.mxu0 %v256
    %844 = vmatprep.subr.mxu0 %v249
    %845 = vmatpush1.msra.mxu0 %v248
    %846 = vmatprep.subr.mxu0 %v241
    %847 = vmatpush1.msra.mxu0 %v240
    %848 = vmatprep.subr.mxu0 %v233
    %849 = vmatpush1.msra.mxu0 %v232
    %850 = vmatprep.subr.mxu0 %v225
    %851 = vmatpush1.msra.mxu0 %v224
    %852 = vmatprep.subr.mxu0 %v217
    %853 = vmatpush1.msra.mxu0 %v216
    %854 = vmatprep.subr.mxu0 %v209
    %855 = vmatpush1.msra.mxu0 %v208
    %856 = vmatprep.subr.mxu0 %v201
    %857 = vmatpush1.msra.mxu0 %v200
    %858 = vmatprep.subr.mxu0 %v193
    %859 = vmatpush1.msra.mxu0 %v192
    %860 = vmatprep.subr.mxu0 %v185
    %861 = vmatpush1.msra.mxu0 %v184
    %862 = vmatprep.subr.mxu0 %v177
    %863 = vmatpush1.msra.mxu0 %v176
    %864 = vmatprep.subr.mxu0 %v169
    %865 = vmatpush1.msra.mxu0 %v168
    %866 = vmatprep.subr.mxu0 %v161
    %867 = vmatpush1.msra.mxu0 %v160
    %868 = vmatprep.subr.mxu0 %v153
    %869 = vmatpush1.msra.mxu0 %v152
    %870 = vmatprep.subr.mxu0 %v145
    %871 = vmatpush1.msra.mxu0 %v144
    %872 = vmatprep.subr.mxu0 %v137
    %873 = vmatpush1.msra.mxu0 %v136
    %874 = vmatprep.subr.mxu0 %v385
    %875 = vmatpush2.msra.mxu0 %v384
    %876 = vmatprep.subr.mxu0 %v377
    %877 = vmatpush2.msra.mxu0 %v376
    %878 = vmatprep.subr.mxu0 %v369
    %879 = vmatpush2.msra.mxu0 %v368
    %880 = vmatprep.subr.mxu0 %v361
    %881 = vmatpush2.msra.mxu0 %v360
    %882 = vmatprep.subr.mxu0 %v353
    %883 = vmatpush2.msra.mxu0 %v352
    %884 = vmatprep.subr.mxu0 %v345
    %885 = vmatpush2.msra.mxu0 %v344
    %886 = vmatprep.subr.mxu0 %v337
    %887 = vmatpush2.msra.mxu0 %v336
    %888 = vmatprep.subr.mxu0 %v329
    %889 = vmatpush2.msra.mxu0 %v328
    %890 = vmatprep.subr.mxu0 %v321
    %891 = vmatpush2.msra.mxu0 %v320
    %892 = vmatprep.subr.mxu0 %v313
    %893 = vmatpush2.msra.mxu0 %v312
    %894 = vmatprep.subr.mxu0 %v305
    %895 = vmatpush2.msra.mxu0 %v304
    %896 = vmatprep.subr.mxu0 %v297
    %897 = vmatpush2.msra.mxu0 %v296
    %898 = vmatprep.subr.mxu0 %v289
    %899 = vmatpush2.msra.mxu0 %v288
    %900 = vmatprep.subr.mxu0 %v281
    %901 = vmatpush2.msra.mxu0 %v280
    %902 = vmatprep.subr.mxu0 %v273
    %903 = vmatpush2.msra.mxu0 %v272
    %904 = vmatprep.subr.mxu0 %v265
    %905 = vmatpush2.msra.mxu0 %v264
    %906 = vmatprep.mubr.f32.mxu0 %v130
    %907 = vmatmul.mubr.f32.gmra.mxu0 %v129
    %v908 = vpop.f32.mrf.mxu0
    %v909 = vadd.f32 %v537, %v908
    %v910 = vpop.f32.mrf.mxu0
    %v911 = vadd.f32 %v541, %v910
    %912 = vdwg.mxu0
    %913 = vmatprep.subr.mxu0 %v513
    %914 = vmatpush1.msra.mxu0 %v512
    %915 = vmatprep.subr.mxu0 %v505
    %916 = vmatpush1.msra.mxu0 %v504
    %917 = vmatprep.subr.mxu0 %v497
    %918 = vmatpush1.msra.mxu0 %v496
    %919 = vmatprep.subr.mxu0 %v489
    %920 = vmatpush1.msra.mxu0 %v488
    %921 = vmatprep.subr.mxu0 %v481
    %922 = vmatpush1.msra.mxu0 %v480
    %923 = vmatprep.subr.mxu0 %v473
    %924 = vmatpush1.msra.mxu0 %v472
    %925 = vmatprep.subr.mxu0 %v465
    %926 = vmatpush1.msra.mxu0 %v464
    %927 = vmatprep.subr.mxu0 %v457
    %928 = vmatpush1.msra.mxu0 %v456
    %929 = vmatprep.subr.mxu0 %v449
    %930 = vmatpush1.msra.mxu0 %v448
    %931 = vmatprep.subr.mxu0 %v441
    %932 = vmatpush1.msra.mxu0 %v440
    %933 = vmatprep.subr.mxu0 %v433
    %934 = vmatpush1.msra.mxu0 %v432
    %935 = vmatprep.subr.mxu0 %v425
    %936 = vmatpush1.msra.mxu0 %v424
    %937 = vmatprep.subr.mxu0 %v417
    %938 = vmatpush1.msra.mxu0 %v416
    %939 = vmatprep.subr.mxu0 %v409
    %940 = vmatpush1.msra.mxu0 %v408
    %941 = vmatprep.subr.mxu0 %v401
    %942 = vmatpush1.msra.mxu0 %v400
    %943 = vmatprep.subr.mxu0 %v393
    %944 = vmatpush1.msra.mxu0 %v392
    %945 = vmatprep.subr.mxu0 0.0
    %946 = vmatpush2.msra.mxu0 0.0
    %947 = vmatprep.subr.mxu0 0.0
    %948 = vmatpush2.msra.mxu0 0.0
    %949 = vmatprep.subr.mxu0 0.0
    %950 = vmatpush2.msra.mxu0 0.0
    %951 = vmatprep.subr.mxu0 0.0
    %952 = vmatpush2.msra.mxu0 0.0
    %953 = vmatprep.subr.mxu0 0.0
    %954 = vmatpush2.msra.mxu0 0.0
    %955 = vmatprep.subr.mxu0 0.0
    %956 = vmatpush2.msra.mxu0 0.0
    %957 = vmatprep.subr.mxu0 0.0
    %958 = vmatpush2.msra.mxu0 0.0
    %959 = vmatprep.subr.mxu0 0.0
    %960 = vmatpush2.msra.mxu0 0.0
    %961 = vmatprep.subr.mxu0 0.0
    %962 = vmatpush2.msra.mxu0 0.0
    %963 = vmatprep.subr.mxu0 0.0
    %964 = vmatpush2.msra.mxu0 0.0
    %965 = vmatprep.subr.mxu0 0.0
    %966 = vmatpush2.msra.mxu0 0.0
    %967 = vmatprep.subr.mxu0 0.0
    %968 = vmatpush2.msra.mxu0 0.0
    %969 = vmatprep.subr.mxu0 0.0
    %970 = vmatpush2.msra.mxu0 0.0
    %971 = vmatprep.subr.mxu0 0.0
    %972 = vmatpush2.msra.mxu0 0.0
    %973 = vmatprep.subr.mxu0 0.0
    %974 = vmatpush2.msra.mxu0 0.0
    %975 = vmatprep.subr.mxu0 0.0
    %976 = vmatpush2.msra.mxu0 0.0
    %977 = vmatprep.mubr.f32.mxu0 0.0
    %978 = vmatmul.mubr.f32.gmra.mxu0 %v131
    %v979 = vpop.f32.mrf.mxu0
    %v980 = vadd.f32 %v909, %v979
    %v981 = vpop.f32.mrf.mxu0
    %v982 = vadd.f32 %v911, %v981
    %983 = vdwg.mxu0
    %984 = vmatprep.subr.mxu0 %v259
    %985 = vmatpush1.msra.mxu0 %v258
    %986 = vmatprep.subr.mxu0 %v251
    %987 = vmatpush1.msra.mxu0 %v250
    %988 = vmatprep.subr.mxu0 %v243
    %989 = vmatpush1.msra.mxu0 %v242
    %990 = vmatprep.subr.mxu0 %v235
    %991 = vmatpush1.msra.mxu0 %v234
    %992 = vmatprep.subr.mxu0 %v227
    %993 = vmatpush1.msra.mxu0 %v226
    %994 = vmatprep.subr.mxu0 %v219
    %995 = vmatpush1.msra.mxu0 %v218
    %996 = vmatprep.subr.mxu0 %v211
    %997 = vmatpush1.msra.mxu0 %v210
    %998 = vmatprep.subr.mxu0 %v203
    %999 = vmatpush1.msra.mxu0 %v202
    %1000 = vmatprep.subr.mxu0 %v195
    %1001 = vmatpush1.msra.mxu0 %v194
    %1002 = vmatprep.subr.mxu0 %v187
    %1003 = vmatpush1.msra.mxu0 %v186
    %1004 = vmatprep.subr.mxu0 %v179
    %1005 = vmatpush1.msra.mxu0 %v178
    %1006 = vmatprep.subr.mxu0 %v171
    %1007 = vmatpush1.msra.mxu0 %v170
    %1008 = vmatprep.subr.mxu0 %v163
    %1009 = vmatpush1.msra.mxu0 %v162
    %1010 = vmatprep.subr.mxu0 %v155
    %1011 = vmatpush1.msra.mxu0 %v154
    %1012 = vmatprep.subr.mxu0 %v147
    %1013 = vmatpush1.msra.mxu0 %v146
    %1014 = vmatprep.subr.mxu0 %v139
    %1015 = vmatpush1.msra.mxu0 %v138
    %1016 = vmatprep.subr.mxu0 %v387
    %1017 = vmatpush2.msra.mxu0 %v386
    %1018 = vmatprep.subr.mxu0 %v379
    %1019 = vmatpush2.msra.mxu0 %v378
    %1020 = vmatprep.subr.mxu0 %v371
    %1021 = vmatpush2.msra.mxu0 %v370
    %1022 = vmatprep.subr.mxu0 %v363
    %1023 = vmatpush2.msra.mxu0 %v362
    %1024 = vmatprep.subr.mxu0 %v355
    %1025 = vmatpush2.msra.mxu0 %v354
    %1026 = vmatprep.subr.mxu0 %v347
    %1027 = vmatpush2.msra.mxu0 %v346
    %1028 = vmatprep.subr.mxu0 %v339
    %1029 = vmatpush2.msra.mxu0 %v338
    %1030 = vmatprep.subr.mxu0 %v331
    %1031 = vmatpush2.msra.mxu0 %v330
    %1032 = vmatprep.subr.mxu0 %v323
    %1033 = vmatpush2.msra.mxu0 %v322
    %1034 = vmatprep.subr.mxu0 %v315
    %1035 = vmatpush2.msra.mxu0 %v314
    %1036 = vmatprep.subr.mxu0 %v307
    %1037 = vmatpush2.msra.mxu0 %v306
    %1038 = vmatprep.subr.mxu0 %v299
    %1039 = vmatpush2.msra.mxu0 %v298
    %1040 = vmatprep.subr.mxu0 %v291
    %1041 = vmatpush2.msra.mxu0 %v290
    %1042 = vmatprep.subr.mxu0 %v283
    %1043 = vmatpush2.msra.mxu0 %v282
    %1044 = vmatprep.subr.mxu0 %v275
    %1045 = vmatpush2.msra.mxu0 %v274
    %1046 = vmatprep.subr.mxu0 %v267
    %1047 = vmatpush2.msra.mxu0 %v266
    %1048 = vmatprep.mubr.f32.mxu0 %v130
    %1049 = vmatmul.mubr.f32.gmra.mxu0 %v129
    %v1050 = vpop.f32.mrf.mxu0
    %v1051 = vadd.f32 %v545, %v1050
    %v1052 = vpop.f32.mrf.mxu0
    %v1053 = vadd.f32 %v549, %v1052
    %1054 = vdwg.mxu0
    %1055 = vmatprep.subr.mxu0 %v515
    %1056 = vmatpush1.msra.mxu0 %v514
    %1057 = vmatprep.subr.mxu0 %v507
    %1058 = vmatpush1.msra.mxu0 %v506
    %1059 = vmatprep.subr.mxu0 %v499
    %1060 = vmatpush1.msra.mxu0 %v498
    %1061 = vmatprep.subr.mxu0 %v491
    %1062 = vmatpush1.msra.mxu0 %v490
    %1063 = vmatprep.subr.mxu0 %v483
    %1064 = vmatpush1.msra.mxu0 %v482
    %1065 = vmatprep.subr.mxu0 %v475
    %1066 = vmatpush1.msra.mxu0 %v474
    %1067 = vmatprep.subr.mxu0 %v467
    %1068 = vmatpush1.msra.mxu0 %v466
    %1069 = vmatprep.subr.mxu0 %v459
    %1070 = vmatpush1.msra.mxu0 %v458
    %1071 = vmatprep.subr.mxu0 %v451
    %1072 = vmatpush1.msra.mxu0 %v450
    %1073 = vmatprep.subr.mxu0 %v443
    %1074 = vmatpush1.msra.mxu0 %v442
    %1075 = vmatprep.subr.mxu0 %v435
    %1076 = vmatpush1.msra.mxu0 %v434
    %1077 = vmatprep.subr.mxu0 %v427
    %1078 = vmatpush1.msra.mxu0 %v426
    %1079 = vmatprep.subr.mxu0 %v419
    %1080 = vmatpush1.msra.mxu0 %v418
    %1081 = vmatprep.subr.mxu0 %v411
    %1082 = vmatpush1.msra.mxu0 %v410
    %1083 = vmatprep.subr.mxu0 %v403
    %1084 = vmatpush1.msra.mxu0 %v402
    %1085 = vmatprep.subr.mxu0 %v395
    %1086 = vmatpush1.msra.mxu0 %v394
    %1087 = vmatprep.subr.mxu0 0.0
    %1088 = vmatpush2.msra.mxu0 0.0
    %1089 = vmatprep.subr.mxu0 0.0
    %1090 = vmatpush2.msra.mxu0 0.0
    %1091 = vmatprep.subr.mxu0 0.0
    %1092 = vmatpush2.msra.mxu0 0.0
    %1093 = vmatprep.subr.mxu0 0.0
    %1094 = vmatpush2.msra.mxu0 0.0
    %1095 = vmatprep.subr.mxu0 0.0
    %1096 = vmatpush2.msra.mxu0 0.0
    %1097 = vmatprep.subr.mxu0 0.0
    %1098 = vmatpush2.msra.mxu0 0.0
    %1099 = vmatprep.subr.mxu0 0.0
    %1100 = vmatpush2.msra.mxu0 0.0
    %1101 = vmatprep.subr.mxu0 0.0
    %1102 = vmatpush2.msra.mxu0 0.0
    %1103 = vmatprep.subr.mxu0 0.0
    %1104 = vmatpush2.msra.mxu0 0.0
    %1105 = vmatprep.subr.mxu0 0.0
    %1106 = vmatpush2.msra.mxu0 0.0
    %1107 = vmatprep.subr.mxu0 0.0
    %1108 = vmatpush2.msra.mxu0 0.0
    %1109 = vmatprep.subr.mxu0 0.0
    %1110 = vmatpush2.msra.mxu0 0.0
    %1111 = vmatprep.subr.mxu0 0.0
    %1112 = vmatpush2.msra.mxu0 0.0
    %1113 = vmatprep.subr.mxu0 0.0
    %1114 = vmatpush2.msra.mxu0 0.0
    %1115 = vmatprep.subr.mxu0 0.0
    %1116 = vmatpush2.msra.mxu0 0.0
    %1117 = vmatprep.subr.mxu0 0.0
    %1118 = vmatpush2.msra.mxu0 0.0
    %1119 = vmatprep.mubr.f32.mxu0 0.0
    %1120 = vmatmul.mubr.f32.gmra.mxu0 %v131
    %v1121 = vpop.f32.mrf.mxu0
    %v1122 = vadd.f32 %v1051, %v1121
    %v1123 = vpop.f32.mrf.mxu0
    %v1124 = vadd.f32 %v1053, %v1123
    %1125 = vdwg.mxu0
    %1126 = vst [vmem:[#allocation2] sm:$0xff] %v696
    %1127 = vst [vmem:[#allocation2 + $0x8] sm:$0xff] %v698
    %1128 = vst [vmem:[#allocation2 + $0x10] sm:$0xff] %v838
    %1129 = vst [vmem:[#allocation2 + $0x18] sm:$0xff] %v840
    %1130 = vst [vmem:[#allocation2 + $0x20] sm:$0xff] %v980
    %1131 = vst [vmem:[#allocation2 + $0x28] sm:$0xff] %v982
    %1132 = vst [vmem:[#allocation2 + $0x30] sm:$0xff] %v1122
    %1133 = vst [vmem:[#allocation2 + $0x38] sm:$0xff] %v1124
    %v1134 = vld [vmem:[#allocation9] sm:$0xff]
    %v1135 = vld [vmem:[#allocation9 + $0x8] sm:$0xff]
    %v1136 = vld [vmem:[#allocation9 + $0x10] sm:$0xff]
    %v1137 = vld [vmem:[#allocation9 + $0x18] sm:$0xff]
    %v1138 = vld [vmem:[#allocation9 + $0x20] sm:$0xff]
    %v1139 = vld [vmem:[#allocation9 + $0x28] sm:$0xff]
    %v1140 = vld [vmem:[#allocation9 + $0x30] sm:$0xff]
    %v1141 = vld [vmem:[#allocation9 + $0x38] sm:$0xff]
    %v1142 = vld [vmem:[#allocation9 + $0x40] sm:$0xff]
    %v1143 = vld [vmem:[#allocation9 + $0x48] sm:$0xff]
    %v1144 = vld [vmem:[#allocation9 + $0x50] sm:$0xff]
    %v1145 = vld [vmem:[#allocation9 + $0x58] sm:$0xff]
    %v1146 = vld [vmem:[#allocation9 + $0x60] sm:$0xff]
    %v1147 = vld [vmem:[#allocation9 + $0x68] sm:$0xff]
    %v1148 = vld [vmem:[#allocation9 + $0x70] sm:$0xff]
    %v1149 = vld [vmem:[#allocation9 + $0x78] sm:$0xff]
    %v1150 = vld [vmem:[#allocation9 + $0x80] sm:$0xff]
    %v1151 = vld [vmem:[#allocation9 + $0x88] sm:$0xff]
    %v1152 = vld [vmem:[#allocation9 + $0x90] sm:$0xff]
    %v1153 = vld [vmem:[#allocation9 + $0x98] sm:$0xff]
    %v1154 = vld [vmem:[#allocation9 + $0xa0] sm:$0xff]
    %v1155 = vld [vmem:[#allocation9 + $0xa8] sm:$0xff]
    %v1156 = vld [vmem:[#allocation9 + $0xb0] sm:$0xff]
    %v1157 = vld [vmem:[#allocation9 + $0xb8] sm:$0xff]
    %v1158 = vld [vmem:[#allocation9 + $0xc0] sm:$0xff]
    %v1159 = vld [vmem:[#allocation9 + $0xc8] sm:$0xff]
    %v1160 = vld [vmem:[#allocation9 + $0xd0] sm:$0xff]
    %v1161 = vld [vmem:[#allocation9 + $0xd8] sm:$0xff]
    %v1162 = vld [vmem:[#allocation9 + $0xe0] sm:$0xff]
    %v1163 = vld [vmem:[#allocation9 + $0xe8] sm:$0xff]
    %v1164 = vld [vmem:[#allocation9 + $0xf0] sm:$0xff]
    %v1165 = vld [vmem:[#allocation9 + $0xf8] sm:$0xff]
    %v1166 = vld [vmem:[#allocation9 + $0x100] sm:$0xff]
    %v1167 = vld [vmem:[#allocation9 + $0x108] sm:$0xff]
    %v1168 = vld [vmem:[#allocation9 + $0x110] sm:$0xff]
    %v1169 = vld [vmem:[#allocation9 + $0x118] sm:$0xff]
    %v1170 = vld [vmem:[#allocation9 + $0x120] sm:$0xff]
    %v1171 = vld [vmem:[#allocation9 + $0x128] sm:$0xff]
    %v1172 = vld [vmem:[#allocation9 + $0x130] sm:$0xff]
    %v1173 = vld [vmem:[#allocation9 + $0x138] sm:$0xff]
    %v1174 = vld [vmem:[#allocation9 + $0x140] sm:$0xff]
    %v1175 = vld [vmem:[#allocation9 + $0x148] sm:$0xff]
    %v1176 = vld [vmem:[#allocation9 + $0x150] sm:$0xff]
    %v1177 = vld [vmem:[#allocation9 + $0x158] sm:$0xff]
    %v1178 = vld [vmem:[#allocation9 + $0x160] sm:$0xff]
    %v1179 = vld [vmem:[#allocation9 + $0x168] sm:$0xff]
    %v1180 = vld [vmem:[#allocation9 + $0x170] sm:$0xff]
    %v1181 = vld [vmem:[#allocation9 + $0x178] sm:$0xff]
    %v1182 = vld [vmem:[#allocation9 + $0x180] sm:$0xff]
    %v1183 = vld [vmem:[#allocation9 + $0x188] sm:$0xff]
    %v1184 = vld [vmem:[#allocation9 + $0x190] sm:$0xff]
    %v1185 = vld [vmem:[#allocation9 + $0x198] sm:$0xff]
    %v1186 = vld [vmem:[#allocation9 + $0x1a0] sm:$0xff]
    %v1187 = vld [vmem:[#allocation9 + $0x1a8] sm:$0xff]
    %v1188 = vld [vmem:[#allocation9 + $0x1b0] sm:$0xff]
    %v1189 = vld [vmem:[#allocation9 + $0x1b8] sm:$0xff]
    %v1190 = vld [vmem:[#allocation9 + $0x1c0] sm:$0xff]
    %v1191 = vld [vmem:[#allocation9 + $0x1c8] sm:$0xff]
    %v1192 = vld [vmem:[#allocation9 + $0x1d0] sm:$0xff]
    %v1193 = vld [vmem:[#allocation9 + $0x1d8] sm:$0xff]
    %v1194 = vld [vmem:[#allocation9 + $0x1e0] sm:$0xff]
    %v1195 = vld [vmem:[#allocation9 + $0x1e8] sm:$0xff]
    %v1196 = vld [vmem:[#allocation9 + $0x1f0] sm:$0xff]
    %v1197 = vld [vmem:[#allocation9 + $0x1f8] sm:$0xff]
    %v1198 = vld [vmem:[#allocation9 + $0x200] sm:$0xff]
    %v1199 = vld [vmem:[#allocation9 + $0x208] sm:$0xff]
    %v1200 = vld [vmem:[#allocation9 + $0x210] sm:$0xff]
    %v1201 = vld [vmem:[#allocation9 + $0x218] sm:$0xff]
    %v1202 = vld [vmem:[#allocation9 + $0x220] sm:$0xff]
    %v1203 = vld [vmem:[#allocation9 + $0x228] sm:$0xff]
    %v1204 = vld [vmem:[#allocation9 + $0x230] sm:$0xff]
    %v1205 = vld [vmem:[#allocation9 + $0x238] sm:$0xff]
    %v1206 = vld [vmem:[#allocation9 + $0x240] sm:$0xff]
    %v1207 = vld [vmem:[#allocation9 + $0x248] sm:$0xff]
    %v1208 = vld [vmem:[#allocation9 + $0x250] sm:$0xff]
    %v1209 = vld [vmem:[#allocation9 + $0x258] sm:$0xff]
    %v1210 = vld [vmem:[#allocation9 + $0x260] sm:$0xff]
    %v1211 = vld [vmem:[#allocation9 + $0x268] sm:$0xff]
    %v1212 = vld [vmem:[#allocation9 + $0x270] sm:$0xff]
    %v1213 = vld [vmem:[#allocation9 + $0x278] sm:$0xff]
    %v1214 = vld [vmem:[#allocation9 + $0x280] sm:$0xff]
    %v1215 = vld [vmem:[#allocation9 + $0x288] sm:$0xff]
    %v1216 = vld [vmem:[#allocation9 + $0x290] sm:$0xff]
    %v1217 = vld [vmem:[#allocation9 + $0x298] sm:$0xff]
    %v1218 = vld [vmem:[#allocation9 + $0x2a0] sm:$0xff]
    %v1219 = vld [vmem:[#allocation9 + $0x2a8] sm:$0xff]
    %v1220 = vld [vmem:[#allocation9 + $0x2b0] sm:$0xff]
    %v1221 = vld [vmem:[#allocation9 + $0x2b8] sm:$0xff]
    %v1222 = vld [vmem:[#allocation9 + $0x2c0] sm:$0xff]
    %v1223 = vld [vmem:[#allocation9 + $0x2c8] sm:$0xff]
    %v1224 = vld [vmem:[#allocation9 + $0x2d0] sm:$0xff]
    %v1225 = vld [vmem:[#allocation9 + $0x2d8] sm:$0xff]
    %v1226 = vld [vmem:[#allocation9 + $0x2e0] sm:$0xff]
    %v1227 = vld [vmem:[#allocation9 + $0x2e8] sm:$0xff]
    %v1228 = vld [vmem:[#allocation9 + $0x2f0] sm:$0xff]
    %v1229 = vld [vmem:[#allocation9 + $0x2f8] sm:$0xff]
    %v1230 = vld [vmem:[#allocation9 + $0x300] sm:$0xff]
    %v1231 = vld [vmem:[#allocation9 + $0x308] sm:$0xff]
    %v1232 = vld [vmem:[#allocation9 + $0x310] sm:$0xff]
    %v1233 = vld [vmem:[#allocation9 + $0x318] sm:$0xff]
    %v1234 = vld [vmem:[#allocation9 + $0x320] sm:$0xff]
    %v1235 = vld [vmem:[#allocation9 + $0x328] sm:$0xff]
    %v1236 = vld [vmem:[#allocation9 + $0x330] sm:$0xff]
    %v1237 = vld [vmem:[#allocation9 + $0x338] sm:$0xff]
    %v1238 = vld [vmem:[#allocation9 + $0x340] sm:$0xff]
    %v1239 = vld [vmem:[#allocation9 + $0x348] sm:$0xff]
    %v1240 = vld [vmem:[#allocation9 + $0x350] sm:$0xff]
    %v1241 = vld [vmem:[#allocation9 + $0x358] sm:$0xff]
    %v1242 = vld [vmem:[#allocation9 + $0x360] sm:$0xff]
    %v1243 = vld [vmem:[#allocation9 + $0x368] sm:$0xff]
    %v1244 = vld [vmem:[#allocation9 + $0x370] sm:$0xff]
    %v1245 = vld [vmem:[#allocation9 + $0x378] sm:$0xff]
    %v1246 = vld [vmem:[#allocation9 + $0x380] sm:$0xff]
    %v1247 = vld [vmem:[#allocation9 + $0x388] sm:$0xff]
    %v1248 = vld [vmem:[#allocation9 + $0x390] sm:$0xff]
    %v1249 = vld [vmem:[#allocation9 + $0x398] sm:$0xff]
    %v1250 = vld [vmem:[#allocation9 + $0x3a0] sm:$0xff]
    %v1251 = vld [vmem:[#allocation9 + $0x3a8] sm:$0xff]
    %v1252 = vld [vmem:[#allocation9 + $0x3b0] sm:$0xff]
    %v1253 = vld [vmem:[#allocation9 + $0x3b8] sm:$0xff]
    %v1254 = vld [vmem:[#allocation9 + $0x3c0] sm:$0xff]
    %v1255 = vld [vmem:[#allocation9 + $0x3c8] sm:$0xff]
    %v1256 = vld [vmem:[#allocation9 + $0x3d0] sm:$0xff]
    %v1257 = vld [vmem:[#allocation9 + $0x3d8] sm:$0xff]
    %v1258 = vld [vmem:[#allocation9 + $0x3e0] sm:$0xff]
    %v1259 = vld [vmem:[#allocation9 + $0x3e8] sm:$0xff]
    %v1260 = vld [vmem:[#allocation9 + $0x3f0] sm:$0xff]
    %v1261 = vld [vmem:[#allocation9 + $0x3f8] sm:$0xff]
    %v1262 = vld [vmem:[#allocation9 + $0x400] sm:$0xff]
    %v1263 = vld [vmem:[#allocation9 + $0x408] sm:$0xff]
    %v1264 = vld [vmem:[#allocation9 + $0x410] sm:$0xff]
    %v1265 = vld [vmem:[#allocation9 + $0x418] sm:$0xff]
    %v1266 = vld [vmem:[#allocation9 + $0x420] sm:$0xff]
    %v1267 = vld [vmem:[#allocation9 + $0x428] sm:$0xff]
    %v1268 = vld [vmem:[#allocation9 + $0x430] sm:$0xff]
    %v1269 = vld [vmem:[#allocation9 + $0x438] sm:$0xff]
    %v1270 = vld [vmem:[#allocation9 + $0x440] sm:$0xff]
    %v1271 = vld [vmem:[#allocation9 + $0x448] sm:$0xff]
    %v1272 = vld [vmem:[#allocation9 + $0x450] sm:$0xff]
    %v1273 = vld [vmem:[#allocation9 + $0x458] sm:$0xff]
    %v1274 = vld [vmem:[#allocation9 + $0x460] sm:$0xff]
    %v1275 = vld [vmem:[#allocation9 + $0x468] sm:$0xff]
    %v1276 = vld [vmem:[#allocation9 + $0x470] sm:$0xff]
    %v1277 = vld [vmem:[#allocation9 + $0x478] sm:$0xff]
    %v1278 = vld [vmem:[#allocation9 + $0x480] sm:$0xff]
    %v1279 = vld [vmem:[#allocation9 + $0x488] sm:$0xff]
    %v1280 = vld [vmem:[#allocation9 + $0x490] sm:$0xff]
    %v1281 = vld [vmem:[#allocation9 + $0x498] sm:$0xff]
    %v1282 = vld [vmem:[#allocation9 + $0x4a0] sm:$0xff]
    %v1283 = vld [vmem:[#allocation9 + $0x4a8] sm:$0xff]
    %v1284 = vld [vmem:[#allocation9 + $0x4b0] sm:$0xff]
    %v1285 = vld [vmem:[#allocation9 + $0x4b8] sm:$0xff]
    %v1286 = vld [vmem:[#allocation9 + $0x4c0] sm:$0xff]
    %v1287 = vld [vmem:[#allocation9 + $0x4c8] sm:$0xff]
    %v1288 = vld [vmem:[#allocation9 + $0x4d0] sm:$0xff]
    %v1289 = vld [vmem:[#allocation9 + $0x4d8] sm:$0xff]
    %v1290 = vld [vmem:[#allocation9 + $0x4e0] sm:$0xff]
    %v1291 = vld [vmem:[#allocation9 + $0x4e8] sm:$0xff]
    %v1292 = vld [vmem:[#allocation9 + $0x4f0] sm:$0xff]
    %v1293 = vld [vmem:[#allocation9 + $0x4f8] sm:$0xff]
    %v1294 = vld [vmem:[#allocation9 + $0x500] sm:$0xff]
    %v1295 = vld [vmem:[#allocation9 + $0x508] sm:$0xff]
    %v1296 = vld [vmem:[#allocation9 + $0x510] sm:$0xff]
    %v1297 = vld [vmem:[#allocation9 + $0x518] sm:$0xff]
    %v1298 = vld [vmem:[#allocation9 + $0x520] sm:$0xff]
    %v1299 = vld [vmem:[#allocation9 + $0x528] sm:$0xff]
    %v1300 = vld [vmem:[#allocation9 + $0x530] sm:$0xff]
    %v1301 = vld [vmem:[#allocation9 + $0x538] sm:$0xff]
    %v1302 = vld [vmem:[#allocation9 + $0x540] sm:$0xff]
    %v1303 = vld [vmem:[#allocation9 + $0x548] sm:$0xff]
    %v1304 = vld [vmem:[#allocation9 + $0x550] sm:$0xff]
    %v1305 = vld [vmem:[#allocation9 + $0x558] sm:$0xff]
    %v1306 = vld [vmem:[#allocation9 + $0x560] sm:$0xff]
    %v1307 = vld [vmem:[#allocation9 + $0x568] sm:$0xff]
    %v1308 = vld [vmem:[#allocation9 + $0x570] sm:$0xff]
    %v1309 = vld [vmem:[#allocation9 + $0x578] sm:$0xff]
    %v1310 = vld [vmem:[#allocation9 + $0x580] sm:$0xff]
    %v1311 = vld [vmem:[#allocation9 + $0x588] sm:$0xff]
    %v1312 = vld [vmem:[#allocation9 + $0x590] sm:$0xff]
    %v1313 = vld [vmem:[#allocation9 + $0x598] sm:$0xff]
    %v1314 = vld [vmem:[#allocation9 + $0x5a0] sm:$0xff]
    %v1315 = vld [vmem:[#allocation9 + $0x5a8] sm:$0xff]
    %v1316 = vld [vmem:[#allocation9 + $0x5b0] sm:$0xff]
    %v1317 = vld [vmem:[#allocation9 + $0x5b8] sm:$0xff]
    %v1318 = vld [vmem:[#allocation9 + $0x5c0] sm:$0xff]
    %v1319 = vld [vmem:[#allocation9 + $0x5c8] sm:$0xff]
    %v1320 = vld [vmem:[#allocation9 + $0x5d0] sm:$0xff]
    %v1321 = vld [vmem:[#allocation9 + $0x5d8] sm:$0xff]
    %v1322 = vld [vmem:[#allocation9 + $0x5e0] sm:$0xff]
    %v1323 = vld [vmem:[#allocation9 + $0x5e8] sm:$0xff]
    %v1324 = vld [vmem:[#allocation9 + $0x5f0] sm:$0xff]
    %v1325 = vld [vmem:[#allocation9 + $0x5f8] sm:$0xff]
    %v1326 = vld [vmem:[#allocation9 + $0x600] sm:$0xff]
    %v1327 = vld [vmem:[#allocation9 + $0x608] sm:$0xff]
    %v1328 = vld [vmem:[#allocation9 + $0x610] sm:$0xff]
    %v1329 = vld [vmem:[#allocation9 + $0x618] sm:$0xff]
    %v1330 = vld [vmem:[#allocation9 + $0x620] sm:$0xff]
    %v1331 = vld [vmem:[#allocation9 + $0x628] sm:$0xff]
    %v1332 = vld [vmem:[#allocation9 + $0x630] sm:$0xff]
    %v1333 = vld [vmem:[#allocation9 + $0x638] sm:$0xff]
    %v1334 = vld [vmem:[#allocation9 + $0x640] sm:$0xff]
    %v1335 = vld [vmem:[#allocation9 + $0x648] sm:$0xff]
    %v1336 = vld [vmem:[#allocation9 + $0x650] sm:$0xff]
    %v1337 = vld [vmem:[#allocation9 + $0x658] sm:$0xff]
    %v1338 = vld [vmem:[#allocation9 + $0x660] sm:$0xff]
    %v1339 = vld [vmem:[#allocation9 + $0x668] sm:$0xff]
    %v1340 = vld [vmem:[#allocation9 + $0x670] sm:$0xff]
    %v1341 = vld [vmem:[#allocation9 + $0x678] sm:$0xff]
    %v1342 = vld [vmem:[#allocation9 + $0x680] sm:$0xff]
    %v1343 = vld [vmem:[#allocation9 + $0x688] sm:$0xff]
    %v1344 = vld [vmem:[#allocation9 + $0x690] sm:$0xff]
    %v1345 = vld [vmem:[#allocation9 + $0x698] sm:$0xff]
    %v1346 = vld [vmem:[#allocation9 + $0x6a0] sm:$0xff]
    %v1347 = vld [vmem:[#allocation9 + $0x6a8] sm:$0xff]
    %v1348 = vld [vmem:[#allocation9 + $0x6b0] sm:$0xff]
    %v1349 = vld [vmem:[#allocation9 + $0x6b8] sm:$0xff]
    %v1350 = vld [vmem:[#allocation9 + $0x6c0] sm:$0xff]
    %v1351 = vld [vmem:[#allocation9 + $0x6c8] sm:$0xff]
    %v1352 = vld [vmem:[#allocation9 + $0x6d0] sm:$0xff]
    %v1353 = vld [vmem:[#allocation9 + $0x6d8] sm:$0xff]
    %v1354 = vld [vmem:[#allocation9 + $0x6e0] sm:$0xff]
    %v1355 = vld [vmem:[#allocation9 + $0x6e8] sm:$0xff]
    %v1356 = vld [vmem:[#allocation9 + $0x6f0] sm:$0xff]
    %v1357 = vld [vmem:[#allocation9 + $0x6f8] sm:$0xff]
    %v1358 = vld [vmem:[#allocation9 + $0x700] sm:$0xff]
    %v1359 = vld [vmem:[#allocation9 + $0x708] sm:$0xff]
    %v1360 = vld [vmem:[#allocation9 + $0x710] sm:$0xff]
    %v1361 = vld [vmem:[#allocation9 + $0x718] sm:$0xff]
    %v1362 = vld [vmem:[#allocation9 + $0x720] sm:$0xff]
    %v1363 = vld [vmem:[#allocation9 + $0x728] sm:$0xff]
    %v1364 = vld [vmem:[#allocation9 + $0x730] sm:$0xff]
    %v1365 = vld [vmem:[#allocation9 + $0x738] sm:$0xff]
    %v1366 = vld [vmem:[#allocation9 + $0x740] sm:$0xff]
    %v1367 = vld [vmem:[#allocation9 + $0x748] sm:$0xff]
    %v1368 = vld [vmem:[#allocation9 + $0x750] sm:$0xff]
    %v1369 = vld [vmem:[#allocation9 + $0x758] sm:$0xff]
    %v1370 = vld [vmem:[#allocation9 + $0x760] sm:$0xff]
    %v1371 = vld [vmem:[#allocation9 + $0x768] sm:$0xff]
    %v1372 = vld [vmem:[#allocation9 + $0x770] sm:$0xff]
    %v1373 = vld [vmem:[#allocation9 + $0x778] sm:$0xff]
    %v1374 = vld [vmem:[#allocation9 + $0x780] sm:$0xff]
    %v1375 = vld [vmem:[#allocation9 + $0x788] sm:$0xff]
    %v1376 = vld [vmem:[#allocation9 + $0x790] sm:$0xff]
    %v1377 = vld [vmem:[#allocation9 + $0x798] sm:$0xff]
    %v1378 = vld [vmem:[#allocation9 + $0x7a0] sm:$0xff]
    %v1379 = vld [vmem:[#allocation9 + $0x7a8] sm:$0xff]
    %v1380 = vld [vmem:[#allocation9 + $0x7b0] sm:$0xff]
    %v1381 = vld [vmem:[#allocation9 + $0x7b8] sm:$0xff]
    %v1382 = vld [vmem:[#allocation9 + $0x7c0] sm:$0xff]
    %v1383 = vld [vmem:[#allocation9 + $0x7c8] sm:$0xff]
    %v1384 = vld [vmem:[#allocation9 + $0x7d0] sm:$0xff]
    %v1385 = vld [vmem:[#allocation9 + $0x7d8] sm:$0xff]
    %v1386 = vld [vmem:[#allocation9 + $0x7e0] sm:$0xff]
    %v1387 = vld [vmem:[#allocation9 + $0x7e8] sm:$0xff]
    %v1388 = vld [vmem:[#allocation9 + $0x7f0] sm:$0xff]
    %v1389 = vld [vmem:[#allocation9 + $0x7f8] sm:$0xff]
    %v1390 = vld [vmem:[#allocation12] sm:$0x3]
    %v1391 = vld [vmem:[#allocation13] sm:$0x3]
    %v1392 = vld [vmem:[#allocation2] ss:$8 sm:$0xf]
    %v1393 = vld [vmem:[#allocation2] ss:$8 sm:$0xf0]
    %v1394 = vor.u32 %v1392, %v1393
    %v1396 = vlaneseq
    %v1397 = vshrl.u32 %v1396, 7
    %v1398 = vsub.s32 0, %v1397
    %v1399 = vrot.slane %v1390, %v1398
    %v1400 = vlaneseq
    %v1401 = vshrl.u32 %v1400, 7
    %v1402 = vsub.s32 1, %v1401
    %v1403 = vrot.slane %v1390, %v1402
    %1406 = vmatprep.subr.mxu0 %v1255
    %1407 = vmatpush1.msra.mxu0 %v1254
    %1408 = vmatprep.subr.mxu0 %v1247
    %1409 = vmatpush1.msra.mxu0 %v1246
    %1410 = vmatprep.subr.mxu0 %v1239
    %1411 = vmatpush1.msra.mxu0 %v1238
    %1412 = vmatprep.subr.mxu0 %v1231
    %1413 = vmatpush1.msra.mxu0 %v1230
    %1414 = vmatprep.subr.mxu0 %v1223
    %1415 = vmatpush1.msra.mxu0 %v1222
    %1416 = vmatprep.subr.mxu0 %v1215
    %1417 = vmatpush1.msra.mxu0 %v1214
    %1418 = vmatprep.subr.mxu0 %v1207
    %1419 = vmatpush1.msra.mxu0 %v1206
    %1420 = vmatprep.subr.mxu0 %v1199
    %1421 = vmatpush1.msra.mxu0 %v1198
    %1422 = vmatprep.subr.mxu0 %v1191
    %1423 = vmatpush1.msra.mxu0 %v1190
    %1424 = vmatprep.subr.mxu0 %v1183
    %1425 = vmatpush1.msra.mxu0 %v1182
    %1426 = vmatprep.subr.mxu0 %v1175
    %1427 = vmatpush1.msra.mxu0 %v1174
    %1428 = vmatprep.subr.mxu0 %v1167
    %1429 = vmatpush1.msra.mxu0 %v1166
    %1430 = vmatprep.subr.mxu0 %v1159
    %1431 = vmatpush1.msra.mxu0 %v1158
    %1432 = vmatprep.subr.mxu0 %v1151
    %1433 = vmatpush1.msra.mxu0 %v1150
    %1434 = vmatprep.subr.mxu0 %v1143
    %1435 = vmatpush1.msra.mxu0 %v1142
    %1436 = vmatprep.subr.mxu0 %v1135
    %1437 = vmatpush1.msra.mxu0 %v1134
    %1438 = vmatprep.subr.mxu0 %v1383
    %1439 = vmatpush2.msra.mxu0 %v1382
    %1440 = vmatprep.subr.mxu0 %v1375
    %1441 = vmatpush2.msra.mxu0 %v1374
    %1442 = vmatprep.subr.mxu0 %v1367
    %1443 = vmatpush2.msra.mxu0 %v1366
    %1444 = vmatprep.subr.mxu0 %v1359
    %1445 = vmatpush2.msra.mxu0 %v1358
    %1446 = vmatprep.subr.mxu0 %v1351
    %1447 = vmatpush2.msra.mxu0 %v1350
    %1448 = vmatprep.subr.mxu0 %v1343
    %1449 = vmatpush2.msra.mxu0 %v1342
    %1450 = vmatprep.subr.mxu0 %v1335
    %1451 = vmatpush2.msra.mxu0 %v1334
    %1452 = vmatprep.subr.mxu0 %v1327
    %1453 = vmatpush2.msra.mxu0 %v1326
    %1454 = vmatprep.subr.mxu0 %v1319
    %1455 = vmatpush2.msra.mxu0 %v1318
    %1456 = vmatprep.subr.mxu0 %v1311
    %1457 = vmatpush2.msra.mxu0 %v1310
    %1458 = vmatprep.subr.mxu0 %v1303
    %1459 = vmatpush2.msra.mxu0 %v1302
    %1460 = vmatprep.subr.mxu0 %v1295
    %1461 = vmatpush2.msra.mxu0 %v1294
    %1462 = vmatprep.subr.mxu0 %v1287
    %1463 = vmatpush2.msra.mxu0 %v1286
    %1464 = vmatprep.subr.mxu0 %v1279
    %1465 = vmatpush2.msra.mxu0 %v1278
    %1466 = vmatprep.subr.mxu0 %v1271
    %1467 = vmatpush2.msra.mxu0 %v1270
    %1468 = vmatprep.subr.mxu0 %v1263
    %1469 = vmatpush2.msra.mxu0 %v1262
    %1470 = vmatprep.mubr.f32.mxu0 %v1403
    %1471 = vmatmul.mubr.f32.gmra.mxu0 %v1399
    %v1472 = vpop.f32.mrf.mxu0
    %v1473 = vadd.f32 0.0, %v1472
    %v1474 = vpop.f32.mrf.mxu0
    %v1475 = vadd.f32 0.0, %v1474
    %1476 = vdwg.mxu0
    %1477 = vmatprep.subr.mxu0 %v1257
    %1478 = vmatpush1.msra.mxu0 %v1256
    %1479 = vmatprep.subr.mxu0 %v1249
    %1480 = vmatpush1.msra.mxu0 %v1248
    %1481 = vmatprep.subr.mxu0 %v1241
    %1482 = vmatpush1.msra.mxu0 %v1240
    %1483 = vmatprep.subr.mxu0 %v1233
    %1484 = vmatpush1.msra.mxu0 %v1232
    %1485 = vmatprep.subr.mxu0 %v1225
    %1486 = vmatpush1.msra.mxu0 %v1224
    %1487 = vmatprep.subr.mxu0 %v1217
    %1488 = vmatpush1.msra.mxu0 %v1216
    %1489 = vmatprep.subr.mxu0 %v1209
    %1490 = vmatpush1.msra.mxu0 %v1208
    %1491 = vmatprep.subr.mxu0 %v1201
    %1492 = vmatpush1.msra.mxu0 %v1200
    %1493 = vmatprep.subr.mxu0 %v1193
    %1494 = vmatpush1.msra.mxu0 %v1192
    %1495 = vmatprep.subr.mxu0 %v1185
    %1496 = vmatpush1.msra.mxu0 %v1184
    %1497 = vmatprep.subr.mxu0 %v1177
    %1498 = vmatpush1.msra.mxu0 %v1176
    %1499 = vmatprep.subr.mxu0 %v1169
    %1500 = vmatpush1.msra.mxu0 %v1168
    %1501 = vmatprep.subr.mxu0 %v1161
    %1502 = vmatpush1.msra.mxu0 %v1160
    %1503 = vmatprep.subr.mxu0 %v1153
    %1504 = vmatpush1.msra.mxu0 %v1152
    %1505 = vmatprep.subr.mxu0 %v1145
    %1506 = vmatpush1.msra.mxu0 %v1144
    %1507 = vmatprep.subr.mxu0 %v1137
    %1508 = vmatpush1.msra.mxu0 %v1136
    %1509 = vmatprep.subr.mxu0 %v1385
    %1510 = vmatpush2.msra.mxu0 %v1384
    %1511 = vmatprep.subr.mxu0 %v1377
    %1512 = vmatpush2.msra.mxu0 %v1376
    %1513 = vmatprep.subr.mxu0 %v1369
    %1514 = vmatpush2.msra.mxu0 %v1368
    %1515 = vmatprep.subr.mxu0 %v1361
    %1516 = vmatpush2.msra.mxu0 %v1360
    %1517 = vmatprep.subr.mxu0 %v1353
    %1518 = vmatpush2.msra.mxu0 %v1352
    %1519 = vmatprep.subr.mxu0 %v1345
    %1520 = vmatpush2.msra.mxu0 %v1344
    %1521 = vmatprep.subr.mxu0 %v1337
    %1522 = vmatpush2.msra.mxu0 %v1336
    %1523 = vmatprep.subr.mxu0 %v1329
    %1524 = vmatpush2.msra.mxu0 %v1328
    %1525 = vmatprep.subr.mxu0 %v1321
    %1526 = vmatpush2.msra.mxu0 %v1320
    %1527 = vmatprep.subr.mxu0 %v1313
    %1528 = vmatpush2.msra.mxu0 %v1312
    %1529 = vmatprep.subr.mxu0 %v1305
    %1530 = vmatpush2.msra.mxu0 %v1304
    %1531 = vmatprep.subr.mxu0 %v1297
    %1532 = vmatpush2.msra.mxu0 %v1296
    %1533 = vmatprep.subr.mxu0 %v1289
    %1534 = vmatpush2.msra.mxu0 %v1288
    %1535 = vmatprep.subr.mxu0 %v1281
    %1536 = vmatpush2.msra.mxu0 %v1280
    %1537 = vmatprep.subr.mxu0 %v1273
    %1538 = vmatpush2.msra.mxu0 %v1272
    %1539 = vmatprep.subr.mxu0 %v1265
    %1540 = vmatpush2.msra.mxu0 %v1264
    %1541 = vmatprep.mubr.f32.mxu0 %v1403
    %1542 = vmatmul.mubr.f32.gmra.mxu0 %v1399
    %v1543 = vpop.f32.mrf.mxu0
    %v1544 = vadd.f32 0.0, %v1543
    %v1545 = vpop.f32.mrf.mxu0
    %v1546 = vadd.f32 0.0, %v1545
    %1547 = vdwg.mxu0
    %1548 = vmatprep.subr.mxu0 %v1259
    %1549 = vmatpush1.msra.mxu0 %v1258
    %1550 = vmatprep.subr.mxu0 %v1251
    %1551 = vmatpush1.msra.mxu0 %v1250
    %1552 = vmatprep.subr.mxu0 %v1243
    %1553 = vmatpush1.msra.mxu0 %v1242
    %1554 = vmatprep.subr.mxu0 %v1235
    %1555 = vmatpush1.msra.mxu0 %v1234
    %1556 = vmatprep.subr.mxu0 %v1227
    %1557 = vmatpush1.msra.mxu0 %v1226
    %1558 = vmatprep.subr.mxu0 %v1219
    %1559 = vmatpush1.msra.mxu0 %v1218
    %1560 = vmatprep.subr.mxu0 %v1211
    %1561 = vmatpush1.msra.mxu0 %v1210
    %1562 = vmatprep.subr.mxu0 %v1203
    %1563 = vmatpush1.msra.mxu0 %v1202
    %1564 = vmatprep.subr.mxu0 %v1195
    %1565 = vmatpush1.msra.mxu0 %v1194
    %1566 = vmatprep.subr.mxu0 %v1187
    %1567 = vmatpush1.msra.mxu0 %v1186
    %1568 = vmatprep.subr.mxu0 %v1179
    %1569 = vmatpush1.msra.mxu0 %v1178
    %1570 = vmatprep.subr.mxu0 %v1171
    %1571 = vmatpush1.msra.mxu0 %v1170
    %1572 = vmatprep.subr.mxu0 %v1163
    %1573 = vmatpush1.msra.mxu0 %v1162
    %1574 = vmatprep.subr.mxu0 %v1155
    %1575 = vmatpush1.msra.mxu0 %v1154
    %1576 = vmatprep.subr.mxu0 %v1147
    %1577 = vmatpush1.msra.mxu0 %v1146
    %1578 = vmatprep.subr.mxu0 %v1139
    %1579 = vmatpush1.msra.mxu0 %v1138
    %1580 = vmatprep.subr.mxu0 %v1387
    %1581 = vmatpush2.msra.mxu0 %v1386
    %1582 = vmatprep.subr.mxu0 %v1379
    %1583 = vmatpush2.msra.mxu0 %v1378
    %1584 = vmatprep.subr.mxu0 %v1371
    %1585 = vmatpush2.msra.mxu0 %v1370
    %1586 = vmatprep.subr.mxu0 %v1363
    %1587 = vmatpush2.msra.mxu0 %v1362
    %1588 = vmatprep.subr.mxu0 %v1355
    %1589 = vmatpush2.msra.mxu0 %v1354
    %1590 = vmatprep.subr.mxu0 %v1347
    %1591 = vmatpush2.msra.mxu0 %v1346
    %1592 = vmatprep.subr.mxu0 %v1339
    %1593 = vmatpush2.msra.mxu0 %v1338
    %1594 = vmatprep.subr.mxu0 %v1331
    %1595 = vmatpush2.msra.mxu0 %v1330
    %1596 = vmatprep.subr.mxu0 %v1323
    %1597 = vmatpush2.msra.mxu0 %v1322
    %1598 = vmatprep.subr.mxu0 %v1315
    %1599 = vmatpush2.msra.mxu0 %v1314
    %1600 = vmatprep.subr.mxu0 %v1307
    %1601 = vmatpush2.msra.mxu0 %v1306
    %1602 = vmatprep.subr.mxu0 %v1299
    %1603 = vmatpush2.msra.mxu0 %v1298
    %1604 = vmatprep.subr.mxu0 %v1291
    %1605 = vmatpush2.msra.mxu0 %v1290
    %1606 = vmatprep.subr.mxu0 %v1283
    %1607 = vmatpush2.msra.mxu0 %v1282
    %1608 = vmatprep.subr.mxu0 %v1275
    %1609 = vmatpush2.msra.mxu0 %v1274
    %1610 = vmatprep.subr.mxu0 %v1267
    %1611 = vmatpush2.msra.mxu0 %v1266
    %1612 = vmatprep.mubr.f32.mxu0 %v1403
    %1613 = vmatmul.mubr.f32.gmra.mxu0 %v1399
    %v1614 = vpop.f32.mrf.mxu0
    %v1615 = vadd.f32 0.0, %v1614
    %v1616 = vpop.f32.mrf.mxu0
    %v1617 = vadd.f32 0.0, %v1616
    %1618 = vdwg.mxu0
    %1619 = vmatprep.subr.mxu0 %v1261
    %1620 = vmatpush1.msra.mxu0 %v1260
    %1621 = vmatprep.subr.mxu0 %v1253
    %1622 = vmatpush1.msra.mxu0 %v1252
    %1623 = vmatprep.subr.mxu0 %v1245
    %1624 = vmatpush1.msra.mxu0 %v1244
    %1625 = vmatprep.subr.mxu0 %v1237
    %1626 = vmatpush1.msra.mxu0 %v1236
    %1627 = vmatprep.subr.mxu0 %v1229
    %1628 = vmatpush1.msra.mxu0 %v1228
    %1629 = vmatprep.subr.mxu0 %v1221
    %1630 = vmatpush1.msra.mxu0 %v1220
    %1631 = vmatprep.subr.mxu0 %v1213
    %1632 = vmatpush1.msra.mxu0 %v1212
    %1633 = vmatprep.subr.mxu0 %v1205
    %1634 = vmatpush1.msra.mxu0 %v1204
    %1635 = vmatprep.subr.mxu0 %v1197
    %1636 = vmatpush1.msra.mxu0 %v1196
    %1637 = vmatprep.subr.mxu0 %v1189
    %1638 = vmatpush1.msra.mxu0 %v1188
    %1639 = vmatprep.subr.mxu0 %v1181
    %1640 = vmatpush1.msra.mxu0 %v1180
    %1641 = vmatprep.subr.mxu0 %v1173
    %1642 = vmatpush1.msra.mxu0 %v1172
    %1643 = vmatprep.subr.mxu0 %v1165
    %1644 = vmatpush1.msra.mxu0 %v1164
    %1645 = vmatprep.subr.mxu0 %v1157
    %1646 = vmatpush1.msra.mxu0 %v1156
    %1647 = vmatprep.subr.mxu0 %v1149
    %1648 = vmatpush1.msra.mxu0 %v1148
    %1649 = vmatprep.subr.mxu0 %v1141
    %1650 = vmatpush1.msra.mxu0 %v1140
    %1651 = vmatprep.subr.mxu0 %v1389
    %1652 = vmatpush2.msra.mxu0 %v1388
    %1653 = vmatprep.subr.mxu0 %v1381
    %1654 = vmatpush2.msra.mxu0 %v1380
    %1655 = vmatprep.subr.mxu0 %v1373
    %1656 = vmatpush2.msra.mxu0 %v1372
    %1657 = vmatprep.subr.mxu0 %v1365
    %1658 = vmatpush2.msra.mxu0 %v1364
    %1659 = vmatprep.subr.mxu0 %v1357
    %1660 = vmatpush2.msra.mxu0 %v1356
    %1661 = vmatprep.subr.mxu0 %v1349
    %1662 = vmatpush2.msra.mxu0 %v1348
    %1663 = vmatprep.subr.mxu0 %v1341
    %1664 = vmatpush2.msra.mxu0 %v1340
    %1665 = vmatprep.subr.mxu0 %v1333
    %1666 = vmatpush2.msra.mxu0 %v1332
    %1667 = vmatprep.subr.mxu0 %v1325
    %1668 = vmatpush2.msra.mxu0 %v1324
    %1669 = vmatprep.subr.mxu0 %v1317
    %1670 = vmatpush2.msra.mxu0 %v1316
    %1671 = vmatprep.subr.mxu0 %v1309
    %1672 = vmatpush2.msra.mxu0 %v1308
    %1673 = vmatprep.subr.mxu0 %v1301
    %1674 = vmatpush2.msra.mxu0 %v1300
    %1675 = vmatprep.subr.mxu0 %v1293
    %1676 = vmatpush2.msra.mxu0 %v1292
    %1677 = vmatprep.subr.mxu0 %v1285
    %1678 = vmatpush2.msra.mxu0 %v1284
    %1679 = vmatprep.subr.mxu0 %v1277
    %1680 = vmatpush2.msra.mxu0 %v1276
    %1681 = vmatprep.subr.mxu0 %v1269
    %1682 = vmatpush2.msra.mxu0 %v1268
    %1683 = vmatprep.mubr.f32.mxu0 %v1403
    %1684 = vmatmul.mubr.f32.gmra.mxu0 %v1399
    %v1685 = vpop.f32.mrf.mxu0
    %v1686 = vadd.f32 0.0, %v1685
    %v1687 = vpop.f32.mrf.mxu0
    %v1688 = vadd.f32 0.0, %v1687
    %1689 = vdwg.mxu0
    %v1698 = vcombine.low %v1473, %v1475
    %v1699 = vcombine.low %v1544, %v1546
    %v1700 = vcombine.low %v1615, %v1617
    %v1701 = vcombine.low %v1686, %v1688
    %v1703 = vunpack.c.l.s4 1966171168
    %v1704 = vunpack.c.0.s8 %v1703
    %v1705 = vlaneseq
    %v1706 = vshrl.u32 %v1705, 7
    %v1707 = vsub.s32 %v1704, %v1706
    %v1708 = vrot.slane %v1698, %v1707
    %v1710 = vunpack.c.l.s4 1966171168
    %v1711 = vunpack.c.0.s8 %v1710
    %v1712 = vlaneseq
    %v1713 = vshrl.u32 %v1712, 7
    %v1714 = vsub.s32 %v1711, %v1713
    %v1715 = vrot.slane %v1699, %v1714
    %v1717 = vunpack.c.l.s4 1966171168
    %v1718 = vunpack.c.0.s8 %v1717
    %v1719 = vlaneseq
    %v1720 = vshrl.u32 %v1719, 7
    %v1721 = vsub.s32 %v1718, %v1720
    %v1722 = vrot.slane %v1700, %v1721
    %v1724 = vunpack.c.l.s4 1966171168
    %v1725 = vunpack.c.0.s8 %v1724
    %v1726 = vlaneseq
    %v1727 = vshrl.u32 %v1726, 7
    %v1728 = vsub.s32 %v1725, %v1727
    %v1729 = vrot.slane %v1701, %v1728
    %v1730 = vcombine.low %v1708, %v1715
    %v1731 = vcombine.low %v1722, %v1729
    %v1733 = vunpack.c.l.s4 1966171168
    %v1734 = vunpack.c.0.s8 %v1733
    %v1735 = vlaneseq
    %v1736 = vshrl.u32 %v1735, 7
    %v1737 = vsub.s32 %v1734, %v1736
    %v1738 = vrot.slane %v1730, %v1737
    %v1740 = vunpack.c.l.s4 1966171168
    %v1741 = vunpack.c.0.s8 %v1740
    %v1742 = vlaneseq
    %v1743 = vshrl.u32 %v1742, 7
    %v1744 = vsub.s32 %v1741, %v1743
    %v1745 = vrot.slane %v1731, %v1744
    %v1746 = vcombine.low %v1738, %v1745
    %v1748 = vadd.f32 %v1394, %v1746
    %v1749 = vxor.u32 %v1748, 2147483648
    %v1750 = vmul.f32 %v1749, 1.442695
    %v1751 = vpow.pop %v1750
    %v1752 = vadd.f32 %v1751, 1.0
    %v1753 = vrcp.pop %v1752
    %v1754 = vmul.f32 1.0, %v1753
    %v1756 = vrot.slane %v1748, 2
    %v1758 = vxor.u32 %v1756, 2147483648
    %v1759 = vmul.f32 %v1758, 1.442695
    %v1760 = vpow.pop %v1759
    %v1761 = vadd.f32 %v1760, 1.0
    %v1762 = vrcp.pop %v1761
    %v1763 = vmul.f32 1.0, %v1762
    %v1764 = vrot.slane %v1748, 4
    %v1766 = vtanh.pop %v1764
    %v1767 = vrot.slane %v1748, 6
    %v1769 = vxor.u32 %v1767, 2147483648
    %v1770 = vmul.f32 %v1769, 1.442695
    %v1771 = vpow.pop %v1770
    %v1772 = vadd.f32 %v1771, 1.0
    %v1773 = vrcp.pop %v1772
    %v1774 = vmul.f32 1.0, %v1773
    %v1775 = vmul.f32 %v1763, %v1391
    %v1776 = vmul.f32 %v1754, %v1766
    %v1777 = vadd.f32 %v1775, %v1776
    %v1778 = vtanh.pop %v1777
    %v1779 = vmul.f32 %v1774, %v1778
    %v1780 = vlaneseq
    %vm1781 = vcmp.ge.s32.totalorder %v1780, 0
    %vm1782 = vcmp.lt.s32.totalorder %v1780, 256
    %vm1783 = vmand %vm1781, %vm1782
    %1784 = vst.msk [vmem:[#allocation3] ss:$8 sm:$0x3] %vm1783, %v1779
    %1785 = vst.msk [vmem:[#allocation3] ss:$8 sm:$0x0] %vm1783, %v1779
    %s1786 = scalar_lea.vmem [#allocation2], 1
    %v1787 = vld [vmem:[%s1786] ss:$8 sm:$0xf]
    %v1788 = vld [vmem:[%s1786] ss:$8 sm:$0xf0]
    %v1789 = vor.u32 %v1787, %v1788
    %v1791 = vlaneseq
    %v1792 = vshrl.u32 %v1791, 7
    %v1793 = vsub.s32 0, %v1792
    %v1794 = vrot.slane %v1779, %v1793
    %v1795 = vlaneseq
    %v1796 = vshrl.u32 %v1795, 7
    %v1797 = vsub.s32 1, %v1796
    %v1798 = vrot.slane %v1779, %v1797
    %1801 = vmatprep.subr.mxu0 %v1255
    %1802 = vmatpush1.msra.mxu0 %v1254
    %1803 = vmatprep.subr.mxu0 %v1247
    %1804 = vmatpush1.msra.mxu0 %v1246
    %1805 = vmatprep.subr.mxu0 %v1239
    %1806 = vmatpush1.msra.mxu0 %v1238
    %1807 = vmatprep.subr.mxu0 %v1231
    %1808 = vmatpush1.msra.mxu0 %v1230
    %1809 = vmatprep.subr.mxu0 %v1223
    %1810 = vmatpush1.msra.mxu0 %v1222
    %1811 = vmatprep.subr.mxu0 %v1215
    %1812 = vmatpush1.msra.mxu0 %v1214
    %1813 = vmatprep.subr.mxu0 %v1207
    %1814 = vmatpush1.msra.mxu0 %v1206
    %1815 = vmatprep.subr.mxu0 %v1199
    %1816 = vmatpush1.msra.mxu0 %v1198
    %1817 = vmatprep.subr.mxu0 %v1191
    %1818 = vmatpush1.msra.mxu0 %v1190
    %1819 = vmatprep.subr.mxu0 %v1183
    %1820 = vmatpush1.msra.mxu0 %v1182
    %1821 = vmatprep.subr.mxu0 %v1175
    %1822 = vmatpush1.msra.mxu0 %v1174
    %1823 = vmatprep.subr.mxu0 %v1167
    %1824 = vmatpush1.msra.mxu0 %v1166
    %1825 = vmatprep.subr.mxu0 %v1159
    %1826 = vmatpush1.msra.mxu0 %v1158
    %1827 = vmatprep.subr.mxu0 %v1151
    %1828 = vmatpush1.msra.mxu0 %v1150
    %1829 = vmatprep.subr.mxu0 %v1143
    %1830 = vmatpush1.msra.mxu0 %v1142
    %1831 = vmatprep.subr.mxu0 %v1135
    %1832 = vmatpush1.msra.mxu0 %v1134
    %1833 = vmatprep.subr.mxu0 %v1383
    %1834 = vmatpush2.msra.mxu0 %v1382
    %1835 = vmatprep.subr.mxu0 %v1375
    %1836 = vmatpush2.msra.mxu0 %v1374
    %1837 = vmatprep.subr.mxu0 %v1367
    %1838 = vmatpush2.msra.mxu0 %v1366
    %1839 = vmatprep.subr.mxu0 %v1359
    %1840 = vmatpush2.msra.mxu0 %v1358
    %1841 = vmatprep.subr.mxu0 %v1351
    %1842 = vmatpush2.msra.mxu0 %v1350
    %1843 = vmatprep.subr.mxu0 %v1343
    %1844 = vmatpush2.msra.mxu0 %v1342
    %1845 = vmatprep.subr.mxu0 %v1335
    %1846 = vmatpush2.msra.mxu0 %v1334
    %1847 = vmatprep.subr.mxu0 %v1327
    %1848 = vmatpush2.msra.mxu0 %v1326
    %1849 = vmatprep.subr.mxu0 %v1319
    %1850 = vmatpush2.msra.mxu0 %v1318
    %1851 = vmatprep.subr.mxu0 %v1311
    %1852 = vmatpush2.msra.mxu0 %v1310
    %1853 = vmatprep.subr.mxu0 %v1303
    %1854 = vmatpush2.msra.mxu0 %v1302
    %1855 = vmatprep.subr.mxu0 %v1295
    %1856 = vmatpush2.msra.mxu0 %v1294
    %1857 = vmatprep.subr.mxu0 %v1287
    %1858 = vmatpush2.msra.mxu0 %v1286
    %1859 = vmatprep.subr.mxu0 %v1279
    %1860 = vmatpush2.msra.mxu0 %v1278
    %1861 = vmatprep.subr.mxu0 %v1271
    %1862 = vmatpush2.msra.mxu0 %v1270
    %1863 = vmatprep.subr.mxu0 %v1263
    %1864 = vmatpush2.msra.mxu0 %v1262
    %1865 = vmatprep.mubr.f32.mxu0 %v1798
    %1866 = vmatmul.mubr.f32.gmra.mxu0 %v1794
    %v1867 = vpop.f32.mrf.mxu0
    %v1868 = vadd.f32 0.0, %v1867
    %v1869 = vpop.f32.mrf.mxu0
    %v1870 = vadd.f32 0.0, %v1869
    %1871 = vdwg.mxu0
    %1872 = vmatprep.subr.mxu0 %v1257
    %1873 = vmatpush1.msra.mxu0 %v1256
    %1874 = vmatprep.subr.mxu0 %v1249
    %1875 = vmatpush1.msra.mxu0 %v1248
    %1876 = vmatprep.subr.mxu0 %v1241
    %1877 = vmatpush1.msra.mxu0 %v1240
    %1878 = vmatprep.subr.mxu0 %v1233
    %1879 = vmatpush1.msra.mxu0 %v1232
    %1880 = vmatprep.subr.mxu0 %v1225
    %1881 = vmatpush1.msra.mxu0 %v1224
    %1882 = vmatprep.subr.mxu0 %v1217
    %1883 = vmatpush1.msra.mxu0 %v1216
    %1884 = vmatprep.subr.mxu0 %v1209
    %1885 = vmatpush1.msra.mxu0 %v1208
    %1886 = vmatprep.subr.mxu0 %v1201
    %1887 = vmatpush1.msra.mxu0 %v1200
    %1888 = vmatprep.subr.mxu0 %v1193
    %1889 = vmatpush1.msra.mxu0 %v1192
    %1890 = vmatprep.subr.mxu0 %v1185
    %1891 = vmatpush1.msra.mxu0 %v1184
    %1892 = vmatprep.subr.mxu0 %v1177
    %1893 = vmatpush1.msra.mxu0 %v1176
    %1894 = vmatprep.subr.mxu0 %v1169
    %1895 = vmatpush1.msra.mxu0 %v1168
    %1896 = vmatprep.subr.mxu0 %v1161
    %1897 = vmatpush1.msra.mxu0 %v1160
    %1898 = vmatprep.subr.mxu0 %v1153
    %1899 = vmatpush1.msra.mxu0 %v1152
    %1900 = vmatprep.subr.mxu0 %v1145
    %1901 = vmatpush1.msra.mxu0 %v1144
    %1902 = vmatprep.subr.mxu0 %v1137
    %1903 = vmatpush1.msra.mxu0 %v1136
    %1904 = vmatprep.subr.mxu0 %v1385
    %1905 = vmatpush2.msra.mxu0 %v1384
    %1906 = vmatprep.subr.mxu0 %v1377
    %1907 = vmatpush2.msra.mxu0 %v1376
    %1908 = vmatprep.subr.mxu0 %v1369
    %1909 = vmatpush2.msra.mxu0 %v1368
    %1910 = vmatprep.subr.mxu0 %v1361
    %1911 = vmatpush2.msra.mxu0 %v1360
    %1912 = vmatprep.subr.mxu0 %v1353
    %1913 = vmatpush2.msra.mxu0 %v1352
    %1914 = vmatprep.subr.mxu0 %v1345
    %1915 = vmatpush2.msra.mxu0 %v1344
    %1916 = vmatprep.subr.mxu0 %v1337
    %1917 = vmatpush2.msra.mxu0 %v1336
    %1918 = vmatprep.subr.mxu0 %v1329
    %1919 = vmatpush2.msra.mxu0 %v1328
    %1920 = vmatprep.subr.mxu0 %v1321
    %1921 = vmatpush2.msra.mxu0 %v1320
    %1922 = vmatprep.subr.mxu0 %v1313
    %1923 = vmatpush2.msra.mxu0 %v1312
    %1924 = vmatprep.subr.mxu0 %v1305
    %1925 = vmatpush2.msra.mxu0 %v1304
    %1926 = vmatprep.subr.mxu0 %v1297
    %1927 = vmatpush2.msra.mxu0 %v1296
    %1928 = vmatprep.subr.mxu0 %v1289
    %1929 = vmatpush2.msra.mxu0 %v1288
    %1930 = vmatprep.subr.mxu0 %v1281
    %1931 = vmatpush2.msra.mxu0 %v1280
    %1932 = vmatprep.subr.mxu0 %v1273
    %1933 = vmatpush2.msra.mxu0 %v1272
    %1934 = vmatprep.subr.mxu0 %v1265
    %1935 = vmatpush2.msra.mxu0 %v1264
    %1936 = vmatprep.mubr.f32.mxu0 %v1798
    %1937 = vmatmul.mubr.f32.gmra.mxu0 %v1794
    %v1938 = vpop.f32.mrf.mxu0
    %v1939 = vadd.f32 0.0, %v1938
    %v1940 = vpop.f32.mrf.mxu0
    %v1941 = vadd.f32 0.0, %v1940
    %1942 = vdwg.mxu0
    %1943 = vmatprep.subr.mxu0 %v1259
    %1944 = vmatpush1.msra.mxu0 %v1258
    %1945 = vmatprep.subr.mxu0 %v1251
    %1946 = vmatpush1.msra.mxu0 %v1250
    %1947 = vmatprep.subr.mxu0 %v1243
    %1948 = vmatpush1.msra.mxu0 %v1242
    %1949 = vmatprep.subr.mxu0 %v1235
    %1950 = vmatpush1.msra.mxu0 %v1234
    %1951 = vmatprep.subr.mxu0 %v1227
    %1952 = vmatpush1.msra.mxu0 %v1226
    %1953 = vmatprep.subr.mxu0 %v1219
    %1954 = vmatpush1.msra.mxu0 %v1218
    %1955 = vmatprep.subr.mxu0 %v1211
    %1956 = vmatpush1.msra.mxu0 %v1210
    %1957 = vmatprep.subr.mxu0 %v1203
    %1958 = vmatpush1.msra.mxu0 %v1202
    %1959 = vmatprep.subr.mxu0 %v1195
    %1960 = vmatpush1.msra.mxu0 %v1194
    %1961 = vmatprep.subr.mxu0 %v1187
    %1962 = vmatpush1.msra.mxu0 %v1186
    %1963 = vmatprep.subr.mxu0 %v1179
    %1964 = vmatpush1.msra.mxu0 %v1178
    %1965 = vmatprep.subr.mxu0 %v1171
    %1966 = vmatpush1.msra.mxu0 %v1170
    %1967 = vmatprep.subr.mxu0 %v1163
    %1968 = vmatpush1.msra.mxu0 %v1162
    %1969 = vmatprep.subr.mxu0 %v1155
    %1970 = vmatpush1.msra.mxu0 %v1154
    %1971 = vmatprep.subr.mxu0 %v1147
    %1972 = vmatpush1.msra.mxu0 %v1146
    %1973 = vmatprep.subr.mxu0 %v1139
    %1974 = vmatpush1.msra.mxu0 %v1138
    %1975 = vmatprep.subr.mxu0 %v1387
    %1976 = vmatpush2.msra.mxu0 %v1386
    %1977 = vmatprep.subr.mxu0 %v1379
    %1978 = vmatpush2.msra.mxu0 %v1378
    %1979 = vmatprep.subr.mxu0 %v1371
    %1980 = vmatpush2.msra.mxu0 %v1370
    %1981 = vmatprep.subr.mxu0 %v1363
    %1982 = vmatpush2.msra.mxu0 %v1362
    %1983 = vmatprep.subr.mxu0 %v1355
    %1984 = vmatpush2.msra.mxu0 %v1354
    %1985 = vmatprep.subr.mxu0 %v1347
    %1986 = vmatpush2.msra.mxu0 %v1346
    %1987 = vmatprep.subr.mxu0 %v1339
    %1988 = vmatpush2.msra.mxu0 %v1338
    %1989 = vmatprep.subr.mxu0 %v1331
    %1990 = vmatpush2.msra.mxu0 %v1330
    %1991 = vmatprep.subr.mxu0 %v1323
    %1992 = vmatpush2.msra.mxu0 %v1322
    %1993 = vmatprep.subr.mxu0 %v1315
    %1994 = vmatpush2.msra.mxu0 %v1314
    %1995 = vmatprep.subr.mxu0 %v1307
    %1996 = vmatpush2.msra.mxu0 %v1306
    %1997 = vmatprep.subr.mxu0 %v1299
    %1998 = vmatpush2.msra.mxu0 %v1298
    %1999 = vmatprep.subr.mxu0 %v1291
    %2000 = vmatpush2.msra.mxu0 %v1290
    %2001 = vmatprep.subr.mxu0 %v1283
    %2002 = vmatpush2.msra.mxu0 %v1282
    %2003 = vmatprep.subr.mxu0 %v1275
    %2004 = vmatpush2.msra.mxu0 %v1274
    %2005 = vmatprep.subr.mxu0 %v1267
    %2006 = vmatpush2.msra.mxu0 %v1266
    %2007 = vmatprep.mubr.f32.mxu0 %v1798
    %2008 = vmatmul.mubr.f32.gmra.mxu0 %v1794
    %v2009 = vpop.f32.mrf.mxu0
    %v2010 = vadd.f32 0.0, %v2009
    %v2011 = vpop.f32.mrf.mxu0
    %v2012 = vadd.f32 0.0, %v2011
    %2013 = vdwg.mxu0
    %2014 = vmatprep.subr.mxu0 %v1261
    %2015 = vmatpush1.msra.mxu0 %v1260
    %2016 = vmatprep.subr.mxu0 %v1253
    %2017 = vmatpush1.msra.mxu0 %v1252
    %2018 = vmatprep.subr.mxu0 %v1245
    %2019 = vmatpush1.msra.mxu0 %v1244
    %2020 = vmatprep.subr.mxu0 %v1237
    %2021 = vmatpush1.msra.mxu0 %v1236
    %2022 = vmatprep.subr.mxu0 %v1229
    %2023 = vmatpush1.msra.mxu0 %v1228
    %2024 = vmatprep.subr.mxu0 %v1221
    %2025 = vmatpush1.msra.mxu0 %v1220
    %2026 = vmatprep.subr.mxu0 %v1213
    %2027 = vmatpush1.msra.mxu0 %v1212
    %2028 = vmatprep.subr.mxu0 %v1205
    %2029 = vmatpush1.msra.mxu0 %v1204
    %2030 = vmatprep.subr.mxu0 %v1197
    %2031 = vmatpush1.msra.mxu0 %v1196
    %2032 = vmatprep.subr.mxu0 %v1189
    %2033 = vmatpush1.msra.mxu0 %v1188
    %2034 = vmatprep.subr.mxu0 %v1181
    %2035 = vmatpush1.msra.mxu0 %v1180
    %2036 = vmatprep.subr.mxu0 %v1173
    %2037 = vmatpush1.msra.mxu0 %v1172
    %2038 = vmatprep.subr.mxu0 %v1165
    %2039 = vmatpush1.msra.mxu0 %v1164
    %2040 = vmatprep.subr.mxu0 %v1157
    %2041 = vmatpush1.msra.mxu0 %v1156
    %2042 = vmatprep.subr.mxu0 %v1149
    %2043 = vmatpush1.msra.mxu0 %v1148
    %2044 = vmatprep.subr.mxu0 %v1141
    %2045 = vmatpush1.msra.mxu0 %v1140
    %2046 = vmatprep.subr.mxu0 %v1389
    %2047 = vmatpush2.msra.mxu0 %v1388
    %2048 = vmatprep.subr.mxu0 %v1381
    %2049 = vmatpush2.msra.mxu0 %v1380
    %2050 = vmatprep.subr.mxu0 %v1373
    %2051 = vmatpush2.msra.mxu0 %v1372
    %2052 = vmatprep.subr.mxu0 %v1365
    %2053 = vmatpush2.msra.mxu0 %v1364
    %2054 = vmatprep.subr.mxu0 %v1357
    %2055 = vmatpush2.msra.mxu0 %v1356
    %2056 = vmatprep.subr.mxu0 %v1349
    %2057 = vmatpush2.msra.mxu0 %v1348
    %2058 = vmatprep.subr.mxu0 %v1341
    %2059 = vmatpush2.msra.mxu0 %v1340
    %2060 = vmatprep.subr.mxu0 %v1333
    %2061 = vmatpush2.msra.mxu0 %v1332
    %2062 = vmatprep.subr.mxu0 %v1325
    %2063 = vmatpush2.msra.mxu0 %v1324
    %2064 = vmatprep.subr.mxu0 %v1317
    %2065 = vmatpush2.msra.mxu0 %v1316
    %2066 = vmatprep.subr.mxu0 %v1309
    %2067 = vmatpush2.msra.mxu0 %v1308
    %2068 = vmatprep.subr.mxu0 %v1301
    %2069 = vmatpush2.msra.mxu0 %v1300
    %2070 = vmatprep.subr.mxu0 %v1293
    %2071 = vmatpush2.msra.mxu0 %v1292
    %2072 = vmatprep.subr.mxu0 %v1285
    %2073 = vmatpush2.msra.mxu0 %v1284
    %2074 = vmatprep.subr.mxu0 %v1277
    %2075 = vmatpush2.msra.mxu0 %v1276
    %2076 = vmatprep.subr.mxu0 %v1269
    %2077 = vmatpush2.msra.mxu0 %v1268
    %2078 = vmatprep.mubr.f32.mxu0 %v1798
    %2079 = vmatmul.mubr.f32.gmra.mxu0 %v1794
    %v2080 = vpop.f32.mrf.mxu0
    %v2081 = vadd.f32 0.0, %v2080
    %v2082 = vpop.f32.mrf.mxu0
    %v2083 = vadd.f32 0.0, %v2082
    %2084 = vdwg.mxu0
    %v2093 = vcombine.low %v1868, %v1870
    %v2094 = vcombine.low %v1939, %v1941
    %v2095 = vcombine.low %v2010, %v2012
    %v2096 = vcombine.low %v2081, %v2083
    %v2098 = vunpack.c.l.s4 1966171168
    %v2099 = vunpack.c.0.s8 %v2098
    %v2100 = vlaneseq
    %v2101 = vshrl.u32 %v2100, 7
    %v2102 = vsub.s32 %v2099, %v2101
    %v2103 = vrot.slane %v2093, %v2102
    %v2105 = vunpack.c.l.s4 1966171168
    %v2106 = vunpack.c.0.s8 %v2105
    %v2107 = vlaneseq
    %v2108 = vshrl.u32 %v2107, 7
    %v2109 = vsub.s32 %v2106, %v2108
    %v2110 = vrot.slane %v2094, %v2109
    %v2112 = vunpack.c.l.s4 1966171168
    %v2113 = vunpack.c.0.s8 %v2112
    %v2114 = vlaneseq
    %v2115 = vshrl.u32 %v2114, 7
    %v2116 = vsub.s32 %v2113, %v2115
    %v2117 = vrot.slane %v2095, %v2116
    %v2119 = vunpack.c.l.s4 1966171168
    %v2120 = vunpack.c.0.s8 %v2119
    %v2121 = vlaneseq
    %v2122 = vshrl.u32 %v2121, 7
    %v2123 = vsub.s32 %v2120, %v2122
    %v2124 = vrot.slane %v2096, %v2123
    %v2125 = vcombine.low %v2103, %v2110
    %v2126 = vcombine.low %v2117, %v2124
    %v2128 = vunpack.c.l.s4 1966171168
    %v2129 = vunpack.c.0.s8 %v2128
    %v2130 = vlaneseq
    %v2131 = vshrl.u32 %v2130, 7
    %v2132 = vsub.s32 %v2129, %v2131
    %v2133 = vrot.slane %v2125, %v2132
    %v2135 = vunpack.c.l.s4 1966171168
    %v2136 = vunpack.c.0.s8 %v2135
    %v2137 = vlaneseq
    %v2138 = vshrl.u32 %v2137, 7
    %v2139 = vsub.s32 %v2136, %v2138
    %v2140 = vrot.slane %v2126, %v2139
    %v2141 = vcombine.low %v2133, %v2140
    %v2143 = vadd.f32 %v1789, %v2141
    %v2144 = vxor.u32 %v2143, 2147483648
    %v2145 = vmul.f32 %v2144, 1.442695
    %v2146 = vpow.pop %v2145
    %v2147 = vadd.f32 %v2146, 1.0
    %v2148 = vrcp.pop %v2147
    %v2149 = vmul.f32 1.0, %v2148
    %v2151 = vrot.slane %v2143, 2
    %v2153 = vxor.u32 %v2151, 2147483648
    %v2154 = vmul.f32 %v2153, 1.442695
    %v2155 = vpow.pop %v2154
    %v2156 = vadd.f32 %v2155, 1.0
    %v2157 = vrcp.pop %v2156
    %v2158 = vmul.f32 1.0, %v2157
    %v2159 = vrot.slane %v2143, 4
    %v2161 = vtanh.pop %v2159
    %v2162 = vrot.slane %v2143, 6
    %v2164 = vxor.u32 %v2162, 2147483648
    %v2165 = vmul.f32 %v2164, 1.442695
    %v2166 = vpow.pop %v2165
    %v2167 = vadd.f32 %v2166, 1.0
    %v2168 = vrcp.pop %v2167
    %v2169 = vmul.f32 1.0, %v2168
    %v2170 = vmul.f32 %v2158, %v1777
    %v2171 = vmul.f32 %v2149, %v2161
    %v2172 = vadd.f32 %v2170, %v2171
    %v2173 = vtanh.pop %v2172
    %v2174 = vmul.f32 %v2169, %v2173
    %s2175 = scalar_lea.vmem [#allocation3], 1
    %2176 = vst.msk [vmem:[%s2175] ss:$8 sm:$0x3] %vm1783, %v2174
    %2177 = vst.msk [vmem:[%s2175] ss:$8 sm:$0x0] %vm1783, %v2174
    %s2178 = scalar_lea.vmem [#allocation2], 2
    %v2179 = vld [vmem:[%s2178] ss:$8 sm:$0xf]
    %v2180 = vld [vmem:[%s2178] ss:$8 sm:$0xf0]
    %v2181 = vor.u32 %v2179, %v2180
    %v2183 = vlaneseq
    %v2184 = vshrl.u32 %v2183, 7
    %v2185 = vsub.s32 0, %v2184
    %v2186 = vrot.slane %v2174, %v2185
    %v2187 = vlaneseq
    %v2188 = vshrl.u32 %v2187, 7
    %v2189 = vsub.s32 1, %v2188
    %v2190 = vrot.slane %v2174, %v2189
    %2193 = vmatprep.subr.mxu0 %v1255
    %2194 = vmatpush1.msra.mxu0 %v1254
    %2195 = vmatprep.subr.mxu0 %v1247
    %2196 = vmatpush1.msra.mxu0 %v1246
    %2197 = vmatprep.subr.mxu0 %v1239
    %2198 = vmatpush1.msra.mxu0 %v1238
    %2199 = vmatprep.subr.mxu0 %v1231
    %2200 = vmatpush1.msra.mxu0 %v1230
    %2201 = vmatprep.subr.mxu0 %v1223
    %2202 = vmatpush1.msra.mxu0 %v1222
    %2203 = vmatprep.subr.mxu0 %v1215
    %2204 = vmatpush1.msra.mxu0 %v1214
    %2205 = vmatprep.subr.mxu0 %v1207
    %2206 = vmatpush1.msra.mxu0 %v1206
    %2207 = vmatprep.subr.mxu0 %v1199
    %2208 = vmatpush1.msra.mxu0 %v1198
    %2209 = vmatprep.subr.mxu0 %v1191
    %2210 = vmatpush1.msra.mxu0 %v1190
    %2211 = vmatprep.subr.mxu0 %v1183
    %2212 = vmatpush1.msra.mxu0 %v1182
    %2213 = vmatprep.subr.mxu0 %v1175
    %2214 = vmatpush1.msra.mxu0 %v1174
    %2215 = vmatprep.subr.mxu0 %v1167
    %2216 = vmatpush1.msra.mxu0 %v1166
    %2217 = vmatprep.subr.mxu0 %v1159
    %2218 = vmatpush1.msra.mxu0 %v1158
    %2219 = vmatprep.subr.mxu0 %v1151
    %2220 = vmatpush1.msra.mxu0 %v1150
    %2221 = vmatprep.subr.mxu0 %v1143
    %2222 = vmatpush1.msra.mxu0 %v1142
    %2223 = vmatprep.subr.mxu0 %v1135
    %2224 = vmatpush1.msra.mxu0 %v1134
    %2225 = vmatprep.subr.mxu0 %v1383
    %2226 = vmatpush2.msra.mxu0 %v1382
    %2227 = vmatprep.subr.mxu0 %v1375
    %2228 = vmatpush2.msra.mxu0 %v1374
    %2229 = vmatprep.subr.mxu0 %v1367
    %2230 = vmatpush2.msra.mxu0 %v1366
    %2231 = vmatprep.subr.mxu0 %v1359
    %2232 = vmatpush2.msra.mxu0 %v1358
    %2233 = vmatprep.subr.mxu0 %v1351
    %2234 = vmatpush2.msra.mxu0 %v1350
    %2235 = vmatprep.subr.mxu0 %v1343
    %2236 = vmatpush2.msra.mxu0 %v1342
    %2237 = vmatprep.subr.mxu0 %v1335
    %2238 = vmatpush2.msra.mxu0 %v1334
    %2239 = vmatprep.subr.mxu0 %v1327
    %2240 = vmatpush2.msra.mxu0 %v1326
    %2241 = vmatprep.subr.mxu0 %v1319
    %2242 = vmatpush2.msra.mxu0 %v1318
    %2243 = vmatprep.subr.mxu0 %v1311
    %2244 = vmatpush2.msra.mxu0 %v1310
    %2245 = vmatprep.subr.mxu0 %v1303
    %2246 = vmatpush2.msra.mxu0 %v1302
    %2247 = vmatprep.subr.mxu0 %v1295
    %2248 = vmatpush2.msra.mxu0 %v1294
    %2249 = vmatprep.subr.mxu0 %v1287
    %2250 = vmatpush2.msra.mxu0 %v1286
    %2251 = vmatprep.subr.mxu0 %v1279
    %2252 = vmatpush2.msra.mxu0 %v1278
    %2253 = vmatprep.subr.mxu0 %v1271
    %2254 = vmatpush2.msra.mxu0 %v1270
    %2255 = vmatprep.subr.mxu0 %v1263
    %2256 = vmatpush2.msra.mxu0 %v1262
    %2257 = vmatprep.mubr.f32.mxu0 %v2190
    %2258 = vmatmul.mubr.f32.gmra.mxu0 %v2186
    %v2259 = vpop.f32.mrf.mxu0
    %v2260 = vadd.f32 0.0, %v2259
    %v2261 = vpop.f32.mrf.mxu0
    %v2262 = vadd.f32 0.0, %v2261
    %2263 = vdwg.mxu0
    %2264 = vmatprep.subr.mxu0 %v1257
    %2265 = vmatpush1.msra.mxu0 %v1256
    %2266 = vmatprep.subr.mxu0 %v1249
    %2267 = vmatpush1.msra.mxu0 %v1248
    %2268 = vmatprep.subr.mxu0 %v1241
    %2269 = vmatpush1.msra.mxu0 %v1240
    %2270 = vmatprep.subr.mxu0 %v1233
    %2271 = vmatpush1.msra.mxu0 %v1232
    %2272 = vmatprep.subr.mxu0 %v1225
    %2273 = vmatpush1.msra.mxu0 %v1224
    %2274 = vmatprep.subr.mxu0 %v1217
    %2275 = vmatpush1.msra.mxu0 %v1216
    %2276 = vmatprep.subr.mxu0 %v1209
    %2277 = vmatpush1.msra.mxu0 %v1208
    %2278 = vmatprep.subr.mxu0 %v1201
    %2279 = vmatpush1.msra.mxu0 %v1200
    %2280 = vmatprep.subr.mxu0 %v1193
    %2281 = vmatpush1.msra.mxu0 %v1192
    %2282 = vmatprep.subr.mxu0 %v1185
    %2283 = vmatpush1.msra.mxu0 %v1184
    %2284 = vmatprep.subr.mxu0 %v1177
    %2285 = vmatpush1.msra.mxu0 %v1176
    %2286 = vmatprep.subr.mxu0 %v1169
    %2287 = vmatpush1.msra.mxu0 %v1168
    %2288 = vmatprep.subr.mxu0 %v1161
    %2289 = vmatpush1.msra.mxu0 %v1160
    %2290 = vmatprep.subr.mxu0 %v1153
    %2291 = vmatpush1.msra.mxu0 %v1152
    %2292 = vmatprep.subr.mxu0 %v1145
    %2293 = vmatpush1.msra.mxu0 %v1144
    %2294 = vmatprep.subr.mxu0 %v1137
    %2295 = vmatpush1.msra.mxu0 %v1136
    %2296 = vmatprep.subr.mxu0 %v1385
    %2297 = vmatpush2.msra.mxu0 %v1384
    %2298 = vmatprep.subr.mxu0 %v1377
    %2299 = vmatpush2.msra.mxu0 %v1376
    %2300 = vmatprep.subr.mxu0 %v1369
    %2301 = vmatpush2.msra.mxu0 %v1368
    %2302 = vmatprep.subr.mxu0 %v1361
    %2303 = vmatpush2.msra.mxu0 %v1360
    %2304 = vmatprep.subr.mxu0 %v1353
    %2305 = vmatpush2.msra.mxu0 %v1352
    %2306 = vmatprep.subr.mxu0 %v1345
    %2307 = vmatpush2.msra.mxu0 %v1344
    %2308 = vmatprep.subr.mxu0 %v1337
    %2309 = vmatpush2.msra.mxu0 %v1336
    %2310 = vmatprep.subr.mxu0 %v1329
    %2311 = vmatpush2.msra.mxu0 %v1328
    %2312 = vmatprep.subr.mxu0 %v1321
    %2313 = vmatpush2.msra.mxu0 %v1320
    %2314 = vmatprep.subr.mxu0 %v1313
    %2315 = vmatpush2.msra.mxu0 %v1312
    %2316 = vmatprep.subr.mxu0 %v1305
    %2317 = vmatpush2.msra.mxu0 %v1304
    %2318 = vmatprep.subr.mxu0 %v1297
    %2319 = vmatpush2.msra.mxu0 %v1296
    %2320 = vmatprep.subr.mxu0 %v1289
    %2321 = vmatpush2.msra.mxu0 %v1288
    %2322 = vmatprep.subr.mxu0 %v1281
    %2323 = vmatpush2.msra.mxu0 %v1280
    %2324 = vmatprep.subr.mxu0 %v1273
    %2325 = vmatpush2.msra.mxu0 %v1272
    %2326 = vmatprep.subr.mxu0 %v1265
    %2327 = vmatpush2.msra.mxu0 %v1264
    %2328 = vmatprep.mubr.f32.mxu0 %v2190
    %2329 = vmatmul.mubr.f32.gmra.mxu0 %v2186
    %v2330 = vpop.f32.mrf.mxu0
    %v2331 = vadd.f32 0.0, %v2330
    %v2332 = vpop.f32.mrf.mxu0
    %v2333 = vadd.f32 0.0, %v2332
    %2334 = vdwg.mxu0
    %2335 = vmatprep.subr.mxu0 %v1259
    %2336 = vmatpush1.msra.mxu0 %v1258
    %2337 = vmatprep.subr.mxu0 %v1251
    %2338 = vmatpush1.msra.mxu0 %v1250
    %2339 = vmatprep.subr.mxu0 %v1243
    %2340 = vmatpush1.msra.mxu0 %v1242
    %2341 = vmatprep.subr.mxu0 %v1235
    %2342 = vmatpush1.msra.mxu0 %v1234
    %2343 = vmatprep.subr.mxu0 %v1227
    %2344 = vmatpush1.msra.mxu0 %v1226
    %2345 = vmatprep.subr.mxu0 %v1219
    %2346 = vmatpush1.msra.mxu0 %v1218
    %2347 = vmatprep.subr.mxu0 %v1211
    %2348 = vmatpush1.msra.mxu0 %v1210
    %2349 = vmatprep.subr.mxu0 %v1203
    %2350 = vmatpush1.msra.mxu0 %v1202
    %2351 = vmatprep.subr.mxu0 %v1195
    %2352 = vmatpush1.msra.mxu0 %v1194
    %2353 = vmatprep.subr.mxu0 %v1187
    %2354 = vmatpush1.msra.mxu0 %v1186
    %2355 = vmatprep.subr.mxu0 %v1179
    %2356 = vmatpush1.msra.mxu0 %v1178
    %2357 = vmatprep.subr.mxu0 %v1171
    %2358 = vmatpush1.msra.mxu0 %v1170
    %2359 = vmatprep.subr.mxu0 %v1163
    %2360 = vmatpush1.msra.mxu0 %v1162
    %2361 = vmatprep.subr.mxu0 %v1155
    %2362 = vmatpush1.msra.mxu0 %v1154
    %2363 = vmatprep.subr.mxu0 %v1147
    %2364 = vmatpush1.msra.mxu0 %v1146
    %2365 = vmatprep.subr.mxu0 %v1139
    %2366 = vmatpush1.msra.mxu0 %v1138
    %2367 = vmatprep.subr.mxu0 %v1387
    %2368 = vmatpush2.msra.mxu0 %v1386
    %2369 = vmatprep.subr.mxu0 %v1379
    %2370 = vmatpush2.msra.mxu0 %v1378
    %2371 = vmatprep.subr.mxu0 %v1371
    %2372 = vmatpush2.msra.mxu0 %v1370
    %2373 = vmatprep.subr.mxu0 %v1363
    %2374 = vmatpush2.msra.mxu0 %v1362
    %2375 = vmatprep.subr.mxu0 %v1355
    %2376 = vmatpush2.msra.mxu0 %v1354
    %2377 = vmatprep.subr.mxu0 %v1347
    %2378 = vmatpush2.msra.mxu0 %v1346
    %2379 = vmatprep.subr.mxu0 %v1339
    %2380 = vmatpush2.msra.mxu0 %v1338
    %2381 = vmatprep.subr.mxu0 %v1331
    %2382 = vmatpush2.msra.mxu0 %v1330
    %2383 = vmatprep.subr.mxu0 %v1323
    %2384 = vmatpush2.msra.mxu0 %v1322
    %2385 = vmatprep.subr.mxu0 %v1315
    %2386 = vmatpush2.msra.mxu0 %v1314
    %2387 = vmatprep.subr.mxu0 %v1307
    %2388 = vmatpush2.msra.mxu0 %v1306
    %2389 = vmatprep.subr.mxu0 %v1299
    %2390 = vmatpush2.msra.mxu0 %v1298
    %2391 = vmatprep.subr.mxu0 %v1291
    %2392 = vmatpush2.msra.mxu0 %v1290
    %2393 = vmatprep.subr.mxu0 %v1283
    %2394 = vmatpush2.msra.mxu0 %v1282
    %2395 = vmatprep.subr.mxu0 %v1275
    %2396 = vmatpush2.msra.mxu0 %v1274
    %2397 = vmatprep.subr.mxu0 %v1267
    %2398 = vmatpush2.msra.mxu0 %v1266
    %2399 = vmatprep.mubr.f32.mxu0 %v2190
    %2400 = vmatmul.mubr.f32.gmra.mxu0 %v2186
    %v2401 = vpop.f32.mrf.mxu0
    %v2402 = vadd.f32 0.0, %v2401
    %v2403 = vpop.f32.mrf.mxu0
    %v2404 = vadd.f32 0.0, %v2403
    %2405 = vdwg.mxu0
    %2406 = vmatprep.subr.mxu0 %v1261
    %2407 = vmatpush1.msra.mxu0 %v1260
    %2408 = vmatprep.subr.mxu0 %v1253
    %2409 = vmatpush1.msra.mxu0 %v1252
    %2410 = vmatprep.subr.mxu0 %v1245
    %2411 = vmatpush1.msra.mxu0 %v1244
    %2412 = vmatprep.subr.mxu0 %v1237
    %2413 = vmatpush1.msra.mxu0 %v1236
    %2414 = vmatprep.subr.mxu0 %v1229
    %2415 = vmatpush1.msra.mxu0 %v1228
    %2416 = vmatprep.subr.mxu0 %v1221
    %2417 = vmatpush1.msra.mxu0 %v1220
    %2418 = vmatprep.subr.mxu0 %v1213
    %2419 = vmatpush1.msra.mxu0 %v1212
    %2420 = vmatprep.subr.mxu0 %v1205
    %2421 = vmatpush1.msra.mxu0 %v1204
    %2422 = vmatprep.subr.mxu0 %v1197
    %2423 = vmatpush1.msra.mxu0 %v1196
    %2424 = vmatprep.subr.mxu0 %v1189
    %2425 = vmatpush1.msra.mxu0 %v1188
    %2426 = vmatprep.subr.mxu0 %v1181
    %2427 = vmatpush1.msra.mxu0 %v1180
    %2428 = vmatprep.subr.mxu0 %v1173
    %2429 = vmatpush1.msra.mxu0 %v1172
    %2430 = vmatprep.subr.mxu0 %v1165
    %2431 = vmatpush1.msra.mxu0 %v1164
    %2432 = vmatprep.subr.mxu0 %v1157
    %2433 = vmatpush1.msra.mxu0 %v1156
    %2434 = vmatprep.subr.mxu0 %v1149
    %2435 = vmatpush1.msra.mxu0 %v1148
    %2436 = vmatprep.subr.mxu0 %v1141
    %2437 = vmatpush1.msra.mxu0 %v1140
    %2438 = vmatprep.subr.mxu0 %v1389
    %2439 = vmatpush2.msra.mxu0 %v1388
    %2440 = vmatprep.subr.mxu0 %v1381
    %2441 = vmatpush2.msra.mxu0 %v1380
    %2442 = vmatprep.subr.mxu0 %v1373
    %2443 = vmatpush2.msra.mxu0 %v1372
    %2444 = vmatprep.subr.mxu0 %v1365
    %2445 = vmatpush2.msra.mxu0 %v1364
    %2446 = vmatprep.subr.mxu0 %v1357
    %2447 = vmatpush2.msra.mxu0 %v1356
    %2448 = vmatprep.subr.mxu0 %v1349
    %2449 = vmatpush2.msra.mxu0 %v1348
    %2450 = vmatprep.subr.mxu0 %v1341
    %2451 = vmatpush2.msra.mxu0 %v1340
    %2452 = vmatprep.subr.mxu0 %v1333
    %2453 = vmatpush2.msra.mxu0 %v1332
    %2454 = vmatprep.subr.mxu0 %v1325
    %2455 = vmatpush2.msra.mxu0 %v1324
    %2456 = vmatprep.subr.mxu0 %v1317
    %2457 = vmatpush2.msra.mxu0 %v1316
    %2458 = vmatprep.subr.mxu0 %v1309
    %2459 = vmatpush2.msra.mxu0 %v1308
    %2460 = vmatprep.subr.mxu0 %v1301
    %2461 = vmatpush2.msra.mxu0 %v1300
    %2462 = vmatprep.subr.mxu0 %v1293
    %2463 = vmatpush2.msra.mxu0 %v1292
    %2464 = vmatprep.subr.mxu0 %v1285
    %2465 = vmatpush2.msra.mxu0 %v1284
    %2466 = vmatprep.subr.mxu0 %v1277
    %2467 = vmatpush2.msra.mxu0 %v1276
    %2468 = vmatprep.subr.mxu0 %v1269
    %2469 = vmatpush2.msra.mxu0 %v1268
    %2470 = vmatprep.mubr.f32.mxu0 %v2190
    %2471 = vmatmul.mubr.f32.gmra.mxu0 %v2186
    %v2472 = vpop.f32.mrf.mxu0
    %v2473 = vadd.f32 0.0, %v2472
    %v2474 = vpop.f32.mrf.mxu0
    %v2475 = vadd.f32 0.0, %v2474
    %2476 = vdwg.mxu0
    %v2485 = vcombine.low %v2260, %v2262
    %v2486 = vcombine.low %v2331, %v2333
    %v2487 = vcombine.low %v2402, %v2404
    %v2488 = vcombine.low %v2473, %v2475
    %v2490 = vunpack.c.l.s4 1966171168
    %v2491 = vunpack.c.0.s8 %v2490
    %v2492 = vlaneseq
    %v2493 = vshrl.u32 %v2492, 7
    %v2494 = vsub.s32 %v2491, %v2493
    %v2495 = vrot.slane %v2485, %v2494
    %v2497 = vunpack.c.l.s4 1966171168
    %v2498 = vunpack.c.0.s8 %v2497
    %v2499 = vlaneseq
    %v2500 = vshrl.u32 %v2499, 7
    %v2501 = vsub.s32 %v2498, %v2500
    %v2502 = vrot.slane %v2486, %v2501
    %v2504 = vunpack.c.l.s4 1966171168
    %v2505 = vunpack.c.0.s8 %v2504
    %v2506 = vlaneseq
    %v2507 = vshrl.u32 %v2506, 7
    %v2508 = vsub.s32 %v2505, %v2507
    %v2509 = vrot.slane %v2487, %v2508
    %v2511 = vunpack.c.l.s4 1966171168
    %v2512 = vunpack.c.0.s8 %v2511
    %v2513 = vlaneseq
    %v2514 = vshrl.u32 %v2513, 7
    %v2515 = vsub.s32 %v2512, %v2514
    %v2516 = vrot.slane %v2488, %v2515
    %v2517 = vcombine.low %v2495, %v2502
    %v2518 = vcombine.low %v2509, %v2516
    %v2520 = vunpack.c.l.s4 1966171168
    %v2521 = vunpack.c.0.s8 %v2520
    %v2522 = vlaneseq
    %v2523 = vshrl.u32 %v2522, 7
    %v2524 = vsub.s32 %v2521, %v2523
    %v2525 = vrot.slane %v2517, %v2524
    %v2527 = vunpack.c.l.s4 1966171168
    %v2528 = vunpack.c.0.s8 %v2527
    %v2529 = vlaneseq
    %v2530 = vshrl.u32 %v2529, 7
    %v2531 = vsub.s32 %v2528, %v2530
    %v2532 = vrot.slane %v2518, %v2531
    %v2533 = vcombine.low %v2525, %v2532
    %v2535 = vadd.f32 %v2181, %v2533
    %v2536 = vxor.u32 %v2535, 2147483648
    %v2537 = vmul.f32 %v2536, 1.442695
    %v2538 = vpow.pop %v2537
    %v2539 = vadd.f32 %v2538, 1.0
    %v2540 = vrcp.pop %v2539
    %v2541 = vmul.f32 1.0, %v2540
    %v2543 = vrot.slane %v2535, 2
    %v2545 = vxor.u32 %v2543, 2147483648
    %v2546 = vmul.f32 %v2545, 1.442695
    %v2547 = vpow.pop %v2546
    %v2548 = vadd.f32 %v2547, 1.0
    %v2549 = vrcp.pop %v2548
    %v2550 = vmul.f32 1.0, %v2549
    %v2551 = vrot.slane %v2535, 4
    %v2553 = vtanh.pop %v2551
    %v2554 = vrot.slane %v2535, 6
    %v2556 = vxor.u32 %v2554, 2147483648
    %v2557 = vmul.f32 %v2556, 1.442695
    %v2558 = vpow.pop %v2557
    %v2559 = vadd.f32 %v2558, 1.0
    %v2560 = vrcp.pop %v2559
    %v2561 = vmul.f32 1.0, %v2560
    %v2562 = vmul.f32 %v2550, %v2172
    %v2563 = vmul.f32 %v2541, %v2553
    %v2564 = vadd.f32 %v2562, %v2563
    %v2565 = vtanh.pop %v2564
    %v2566 = vmul.f32 %v2561, %v2565
    %s2567 = scalar_lea.vmem [#allocation3], 2
    %2568 = vst.msk [vmem:[%s2567] ss:$8 sm:$0x3] %vm1783, %v2566
    %2569 = vst.msk [vmem:[%s2567] ss:$8 sm:$0x0] %vm1783, %v2566
    %s2570 = scalar_lea.vmem [#allocation2], 3
    %v2571 = vld [vmem:[%s2570] ss:$8 sm:$0xf]
    %v2572 = vld [vmem:[%s2570] ss:$8 sm:$0xf0]
    %v2573 = vor.u32 %v2571, %v2572
    %v2575 = vlaneseq
    %v2576 = vshrl.u32 %v2575, 7
    %v2577 = vsub.s32 0, %v2576
    %v2578 = vrot.slane %v2566, %v2577
    %v2579 = vlaneseq
    %v2580 = vshrl.u32 %v2579, 7
    %v2581 = vsub.s32 1, %v2580
    %v2582 = vrot.slane %v2566, %v2581
    %2585 = vmatprep.subr.mxu0 %v1255
    %2586 = vmatpush1.msra.mxu0 %v1254
    %2587 = vmatprep.subr.mxu0 %v1247
    %2588 = vmatpush1.msra.mxu0 %v1246
    %2589 = vmatprep.subr.mxu0 %v1239
    %2590 = vmatpush1.msra.mxu0 %v1238
    %2591 = vmatprep.subr.mxu0 %v1231
    %2592 = vmatpush1.msra.mxu0 %v1230
    %2593 = vmatprep.subr.mxu0 %v1223
    %2594 = vmatpush1.msra.mxu0 %v1222
    %2595 = vmatprep.subr.mxu0 %v1215
    %2596 = vmatpush1.msra.mxu0 %v1214
    %2597 = vmatprep.subr.mxu0 %v1207
    %2598 = vmatpush1.msra.mxu0 %v1206
    %2599 = vmatprep.subr.mxu0 %v1199
    %2600 = vmatpush1.msra.mxu0 %v1198
    %2601 = vmatprep.subr.mxu0 %v1191
    %2602 = vmatpush1.msra.mxu0 %v1190
    %2603 = vmatprep.subr.mxu0 %v1183
    %2604 = vmatpush1.msra.mxu0 %v1182
    %2605 = vmatprep.subr.mxu0 %v1175
    %2606 = vmatpush1.msra.mxu0 %v1174
    %2607 = vmatprep.subr.mxu0 %v1167
    %2608 = vmatpush1.msra.mxu0 %v1166
    %2609 = vmatprep.subr.mxu0 %v1159
    %2610 = vmatpush1.msra.mxu0 %v1158
    %2611 = vmatprep.subr.mxu0 %v1151
    %2612 = vmatpush1.msra.mxu0 %v1150
    %2613 = vmatprep.subr.mxu0 %v1143
    %2614 = vmatpush1.msra.mxu0 %v1142
    %2615 = vmatprep.subr.mxu0 %v1135
    %2616 = vmatpush1.msra.mxu0 %v1134
    %2617 = vmatprep.subr.mxu0 %v1383
    %2618 = vmatpush2.msra.mxu0 %v1382
    %2619 = vmatprep.subr.mxu0 %v1375
    %2620 = vmatpush2.msra.mxu0 %v1374
    %2621 = vmatprep.subr.mxu0 %v1367
    %2622 = vmatpush2.msra.mxu0 %v1366
    %2623 = vmatprep.subr.mxu0 %v1359
    %2624 = vmatpush2.msra.mxu0 %v1358
    %2625 = vmatprep.subr.mxu0 %v1351
    %2626 = vmatpush2.msra.mxu0 %v1350
    %2627 = vmatprep.subr.mxu0 %v1343
    %2628 = vmatpush2.msra.mxu0 %v1342
    %2629 = vmatprep.subr.mxu0 %v1335
    %2630 = vmatpush2.msra.mxu0 %v1334
    %2631 = vmatprep.subr.mxu0 %v1327
    %2632 = vmatpush2.msra.mxu0 %v1326
    %2633 = vmatprep.subr.mxu0 %v1319
    %2634 = vmatpush2.msra.mxu0 %v1318
    %2635 = vmatprep.subr.mxu0 %v1311
    %2636 = vmatpush2.msra.mxu0 %v1310
    %2637 = vmatprep.subr.mxu0 %v1303
    %2638 = vmatpush2.msra.mxu0 %v1302
    %2639 = vmatprep.subr.mxu0 %v1295
    %2640 = vmatpush2.msra.mxu0 %v1294
    %2641 = vmatprep.subr.mxu0 %v1287
    %2642 = vmatpush2.msra.mxu0 %v1286
    %2643 = vmatprep.subr.mxu0 %v1279
    %2644 = vmatpush2.msra.mxu0 %v1278
    %2645 = vmatprep.subr.mxu0 %v1271
    %2646 = vmatpush2.msra.mxu0 %v1270
    %2647 = vmatprep.subr.mxu0 %v1263
    %2648 = vmatpush2.msra.mxu0 %v1262
    %2649 = vmatprep.mubr.f32.mxu0 %v2582
    %2650 = vmatmul.mubr.f32.gmra.mxu0 %v2578
    %v2651 = vpop.f32.mrf.mxu0
    %v2652 = vadd.f32 0.0, %v2651
    %v2653 = vpop.f32.mrf.mxu0
    %v2654 = vadd.f32 0.0, %v2653
    %2655 = vdwg.mxu0
    %2656 = vmatprep.subr.mxu0 %v1257
    %2657 = vmatpush1.msra.mxu0 %v1256
    %2658 = vmatprep.subr.mxu0 %v1249
    %2659 = vmatpush1.msra.mxu0 %v1248
    %2660 = vmatprep.subr.mxu0 %v1241
    %2661 = vmatpush1.msra.mxu0 %v1240
    %2662 = vmatprep.subr.mxu0 %v1233
    %2663 = vmatpush1.msra.mxu0 %v1232
    %2664 = vmatprep.subr.mxu0 %v1225
    %2665 = vmatpush1.msra.mxu0 %v1224
    %2666 = vmatprep.subr.mxu0 %v1217
    %2667 = vmatpush1.msra.mxu0 %v1216
    %2668 = vmatprep.subr.mxu0 %v1209
    %2669 = vmatpush1.msra.mxu0 %v1208
    %2670 = vmatprep.subr.mxu0 %v1201
    %2671 = vmatpush1.msra.mxu0 %v1200
    %2672 = vmatprep.subr.mxu0 %v1193
    %2673 = vmatpush1.msra.mxu0 %v1192
    %2674 = vmatprep.subr.mxu0 %v1185
    %2675 = vmatpush1.msra.mxu0 %v1184
    %2676 = vmatprep.subr.mxu0 %v1177
    %2677 = vmatpush1.msra.mxu0 %v1176
    %2678 = vmatprep.subr.mxu0 %v1169
    %2679 = vmatpush1.msra.mxu0 %v1168
    %2680 = vmatprep.subr.mxu0 %v1161
    %2681 = vmatpush1.msra.mxu0 %v1160
    %2682 = vmatprep.subr.mxu0 %v1153
    %2683 = vmatpush1.msra.mxu0 %v1152
    %2684 = vmatprep.subr.mxu0 %v1145
    %2685 = vmatpush1.msra.mxu0 %v1144
    %2686 = vmatprep.subr.mxu0 %v1137
    %2687 = vmatpush1.msra.mxu0 %v1136
    %2688 = vmatprep.subr.mxu0 %v1385
    %2689 = vmatpush2.msra.mxu0 %v1384
    %2690 = vmatprep.subr.mxu0 %v1377
    %2691 = vmatpush2.msra.mxu0 %v1376
    %2692 = vmatprep.subr.mxu0 %v1369
    %2693 = vmatpush2.msra.mxu0 %v1368
    %2694 = vmatprep.subr.mxu0 %v1361
    %2695 = vmatpush2.msra.mxu0 %v1360
    %2696 = vmatprep.subr.mxu0 %v1353
    %2697 = vmatpush2.msra.mxu0 %v1352
    %2698 = vmatprep.subr.mxu0 %v1345
    %2699 = vmatpush2.msra.mxu0 %v1344
    %2700 = vmatprep.subr.mxu0 %v1337
    %2701 = vmatpush2.msra.mxu0 %v1336
    %2702 = vmatprep.subr.mxu0 %v1329
    %2703 = vmatpush2.msra.mxu0 %v1328
    %2704 = vmatprep.subr.mxu0 %v1321
    %2705 = vmatpush2.msra.mxu0 %v1320
    %2706 = vmatprep.subr.mxu0 %v1313
    %2707 = vmatpush2.msra.mxu0 %v1312
    %2708 = vmatprep.subr.mxu0 %v1305
    %2709 = vmatpush2.msra.mxu0 %v1304
    %2710 = vmatprep.subr.mxu0 %v1297
    %2711 = vmatpush2.msra.mxu0 %v1296
    %2712 = vmatprep.subr.mxu0 %v1289
    %2713 = vmatpush2.msra.mxu0 %v1288
    %2714 = vmatprep.subr.mxu0 %v1281
    %2715 = vmatpush2.msra.mxu0 %v1280
    %2716 = vmatprep.subr.mxu0 %v1273
    %2717 = vmatpush2.msra.mxu0 %v1272
    %2718 = vmatprep.subr.mxu0 %v1265
    %2719 = vmatpush2.msra.mxu0 %v1264
    %2720 = vmatprep.mubr.f32.mxu0 %v2582
    %2721 = vmatmul.mubr.f32.gmra.mxu0 %v2578
    %v2722 = vpop.f32.mrf.mxu0
    %v2723 = vadd.f32 0.0, %v2722
    %v2724 = vpop.f32.mrf.mxu0
    %v2725 = vadd.f32 0.0, %v2724
    %2726 = vdwg.mxu0
    %2727 = vmatprep.subr.mxu0 %v1259
    %2728 = vmatpush1.msra.mxu0 %v1258
    %2729 = vmatprep.subr.mxu0 %v1251
    %2730 = vmatpush1.msra.mxu0 %v1250
    %2731 = vmatprep.subr.mxu0 %v1243
    %2732 = vmatpush1.msra.mxu0 %v1242
    %2733 = vmatprep.subr.mxu0 %v1235
    %2734 = vmatpush1.msra.mxu0 %v1234
    %2735 = vmatprep.subr.mxu0 %v1227
    %2736 = vmatpush1.msra.mxu0 %v1226
    %2737 = vmatprep.subr.mxu0 %v1219
    %2738 = vmatpush1.msra.mxu0 %v1218
    %2739 = vmatprep.subr.mxu0 %v1211
    %2740 = vmatpush1.msra.mxu0 %v1210
    %2741 = vmatprep.subr.mxu0 %v1203
    %2742 = vmatpush1.msra.mxu0 %v1202
    %2743 = vmatprep.subr.mxu0 %v1195
    %2744 = vmatpush1.msra.mxu0 %v1194
    %2745 = vmatprep.subr.mxu0 %v1187
    %2746 = vmatpush1.msra.mxu0 %v1186
    %2747 = vmatprep.subr.mxu0 %v1179
    %2748 = vmatpush1.msra.mxu0 %v1178
    %2749 = vmatprep.subr.mxu0 %v1171
    %2750 = vmatpush1.msra.mxu0 %v1170
    %2751 = vmatprep.subr.mxu0 %v1163
    %2752 = vmatpush1.msra.mxu0 %v1162
    %2753 = vmatprep.subr.mxu0 %v1155
    %2754 = vmatpush1.msra.mxu0 %v1154
    %2755 = vmatprep.subr.mxu0 %v1147
    %2756 = vmatpush1.msra.mxu0 %v1146
    %2757 = vmatprep.subr.mxu0 %v1139
    %2758 = vmatpush1.msra.mxu0 %v1138
    %2759 = vmatprep.subr.mxu0 %v1387
    %2760 = vmatpush2.msra.mxu0 %v1386
    %2761 = vmatprep.subr.mxu0 %v1379
    %2762 = vmatpush2.msra.mxu0 %v1378
    %2763 = vmatprep.subr.mxu0 %v1371
    %2764 = vmatpush2.msra.mxu0 %v1370
    %2765 = vmatprep.subr.mxu0 %v1363
    %2766 = vmatpush2.msra.mxu0 %v1362
    %2767 = vmatprep.subr.mxu0 %v1355
    %2768 = vmatpush2.msra.mxu0 %v1354
    %2769 = vmatprep.subr.mxu0 %v1347
    %2770 = vmatpush2.msra.mxu0 %v1346
    %2771 = vmatprep.subr.mxu0 %v1339
    %2772 = vmatpush2.msra.mxu0 %v1338
    %2773 = vmatprep.subr.mxu0 %v1331
    %2774 = vmatpush2.msra.mxu0 %v1330
    %2775 = vmatprep.subr.mxu0 %v1323
    %2776 = vmatpush2.msra.mxu0 %v1322
    %2777 = vmatprep.subr.mxu0 %v1315
    %2778 = vmatpush2.msra.mxu0 %v1314
    %2779 = vmatprep.subr.mxu0 %v1307
    %2780 = vmatpush2.msra.mxu0 %v1306
    %2781 = vmatprep.subr.mxu0 %v1299
    %2782 = vmatpush2.msra.mxu0 %v1298
    %2783 = vmatprep.subr.mxu0 %v1291
    %2784 = vmatpush2.msra.mxu0 %v1290
    %2785 = vmatprep.subr.mxu0 %v1283
    %2786 = vmatpush2.msra.mxu0 %v1282
    %2787 = vmatprep.subr.mxu0 %v1275
    %2788 = vmatpush2.msra.mxu0 %v1274
    %2789 = vmatprep.subr.mxu0 %v1267
    %2790 = vmatpush2.msra.mxu0 %v1266
    %2791 = vmatprep.mubr.f32.mxu0 %v2582
    %2792 = vmatmul.mubr.f32.gmra.mxu0 %v2578
    %v2793 = vpop.f32.mrf.mxu0
    %v2794 = vadd.f32 0.0, %v2793
    %v2795 = vpop.f32.mrf.mxu0
    %v2796 = vadd.f32 0.0, %v2795
    %2797 = vdwg.mxu0
    %2798 = vmatprep.subr.mxu0 %v1261
    %2799 = vmatpush1.msra.mxu0 %v1260
    %2800 = vmatprep.subr.mxu0 %v1253
    %2801 = vmatpush1.msra.mxu0 %v1252
    %2802 = vmatprep.subr.mxu0 %v1245
    %2803 = vmatpush1.msra.mxu0 %v1244
    %2804 = vmatprep.subr.mxu0 %v1237
    %2805 = vmatpush1.msra.mxu0 %v1236
    %2806 = vmatprep.subr.mxu0 %v1229
    %2807 = vmatpush1.msra.mxu0 %v1228
    %2808 = vmatprep.subr.mxu0 %v1221
    %2809 = vmatpush1.msra.mxu0 %v1220
    %2810 = vmatprep.subr.mxu0 %v1213
    %2811 = vmatpush1.msra.mxu0 %v1212
    %2812 = vmatprep.subr.mxu0 %v1205
    %2813 = vmatpush1.msra.mxu0 %v1204
    %2814 = vmatprep.subr.mxu0 %v1197
    %2815 = vmatpush1.msra.mxu0 %v1196
    %2816 = vmatprep.subr.mxu0 %v1189
    %2817 = vmatpush1.msra.mxu0 %v1188
    %2818 = vmatprep.subr.mxu0 %v1181
    %2819 = vmatpush1.msra.mxu0 %v1180
    %2820 = vmatprep.subr.mxu0 %v1173
    %2821 = vmatpush1.msra.mxu0 %v1172
    %2822 = vmatprep.subr.mxu0 %v1165
    %2823 = vmatpush1.msra.mxu0 %v1164
    %2824 = vmatprep.subr.mxu0 %v1157
    %2825 = vmatpush1.msra.mxu0 %v1156
    %2826 = vmatprep.subr.mxu0 %v1149
    %2827 = vmatpush1.msra.mxu0 %v1148
    %2828 = vmatprep.subr.mxu0 %v1141
    %2829 = vmatpush1.msra.mxu0 %v1140
    %2830 = vmatprep.subr.mxu0 %v1389
    %2831 = vmatpush2.msra.mxu0 %v1388
    %2832 = vmatprep.subr.mxu0 %v1381
    %2833 = vmatpush2.msra.mxu0 %v1380
    %2834 = vmatprep.subr.mxu0 %v1373
    %2835 = vmatpush2.msra.mxu0 %v1372
    %2836 = vmatprep.subr.mxu0 %v1365
    %2837 = vmatpush2.msra.mxu0 %v1364
    %2838 = vmatprep.subr.mxu0 %v1357
    %2839 = vmatpush2.msra.mxu0 %v1356
    %2840 = vmatprep.subr.mxu0 %v1349
    %2841 = vmatpush2.msra.mxu0 %v1348
    %2842 = vmatprep.subr.mxu0 %v1341
    %2843 = vmatpush2.msra.mxu0 %v1340
    %2844 = vmatprep.subr.mxu0 %v1333
    %2845 = vmatpush2.msra.mxu0 %v1332
    %2846 = vmatprep.subr.mxu0 %v1325
    %2847 = vmatpush2.msra.mxu0 %v1324
    %2848 = vmatprep.subr.mxu0 %v1317
    %2849 = vmatpush2.msra.mxu0 %v1316
    %2850 = vmatprep.subr.mxu0 %v1309
    %2851 = vmatpush2.msra.mxu0 %v1308
    %2852 = vmatprep.subr.mxu0 %v1301
    %2853 = vmatpush2.msra.mxu0 %v1300
    %2854 = vmatprep.subr.mxu0 %v1293
    %2855 = vmatpush2.msra.mxu0 %v1292
    %2856 = vmatprep.subr.mxu0 %v1285
    %2857 = vmatpush2.msra.mxu0 %v1284
    %2858 = vmatprep.subr.mxu0 %v1277
    %2859 = vmatpush2.msra.mxu0 %v1276
    %2860 = vmatprep.subr.mxu0 %v1269
    %2861 = vmatpush2.msra.mxu0 %v1268
    %2862 = vmatprep.mubr.f32.mxu0 %v2582
    %2863 = vmatmul.mubr.f32.gmra.mxu0 %v2578
    %v2864 = vpop.f32.mrf.mxu0
    %v2865 = vadd.f32 0.0, %v2864
    %v2866 = vpop.f32.mrf.mxu0
    %v2867 = vadd.f32 0.0, %v2866
    %2868 = vdwg.mxu0
    %v2877 = vcombine.low %v2652, %v2654
    %v2878 = vcombine.low %v2723, %v2725
    %v2879 = vcombine.low %v2794, %v2796
    %v2880 = vcombine.low %v2865, %v2867
    %v2882 = vunpack.c.l.s4 1966171168
    %v2883 = vunpack.c.0.s8 %v2882
    %v2884 = vlaneseq
    %v2885 = vshrl.u32 %v2884, 7
    %v2886 = vsub.s32 %v2883, %v2885
    %v2887 = vrot.slane %v2877, %v2886
    %v2889 = vunpack.c.l.s4 1966171168
    %v2890 = vunpack.c.0.s8 %v2889
    %v2891 = vlaneseq
    %v2892 = vshrl.u32 %v2891, 7
    %v2893 = vsub.s32 %v2890, %v2892
    %v2894 = vrot.slane %v2878, %v2893
    %v2896 = vunpack.c.l.s4 1966171168
    %v2897 = vunpack.c.0.s8 %v2896
    %v2898 = vlaneseq
    %v2899 = vshrl.u32 %v2898, 7
    %v2900 = vsub.s32 %v2897, %v2899
    %v2901 = vrot.slane %v2879, %v2900
    %v2903 = vunpack.c.l.s4 1966171168
    %v2904 = vunpack.c.0.s8 %v2903
    %v2905 = vlaneseq
    %v2906 = vshrl.u32 %v2905, 7
    %v2907 = vsub.s32 %v2904, %v2906
    %v2908 = vrot.slane %v2880, %v2907
    %v2909 = vcombine.low %v2887, %v2894
    %v2910 = vcombine.low %v2901, %v2908
    %v2912 = vunpack.c.l.s4 1966171168
    %v2913 = vunpack.c.0.s8 %v2912
    %v2914 = vlaneseq
    %v2915 = vshrl.u32 %v2914, 7
    %v2916 = vsub.s32 %v2913, %v2915
    %v2917 = vrot.slane %v2909, %v2916
    %v2919 = vunpack.c.l.s4 1966171168
    %v2920 = vunpack.c.0.s8 %v2919
    %v2921 = vlaneseq
    %v2922 = vshrl.u32 %v2921, 7
    %v2923 = vsub.s32 %v2920, %v2922
    %v2924 = vrot.slane %v2910, %v2923
    %v2925 = vcombine.low %v2917, %v2924
    %v2927 = vadd.f32 %v2573, %v2925
    %v2928 = vxor.u32 %v2927, 2147483648
    %v2929 = vmul.f32 %v2928, 1.442695
    %v2930 = vpow.pop %v2929
    %v2931 = vadd.f32 %v2930, 1.0
    %v2932 = vrcp.pop %v2931
    %v2933 = vmul.f32 1.0, %v2932
    %v2935 = vrot.slane %v2927, 2
    %v2937 = vxor.u32 %v2935, 2147483648
    %v2938 = vmul.f32 %v2937, 1.442695
    %v2939 = vpow.pop %v2938
    %v2940 = vadd.f32 %v2939, 1.0
    %v2941 = vrcp.pop %v2940
    %v2942 = vmul.f32 1.0, %v2941
    %v2943 = vrot.slane %v2927, 4
    %v2945 = vtanh.pop %v2943
    %v2946 = vrot.slane %v2927, 6
    %v2948 = vxor.u32 %v2946, 2147483648
    %v2949 = vmul.f32 %v2948, 1.442695
    %v2950 = vpow.pop %v2949
    %v2951 = vadd.f32 %v2950, 1.0
    %v2952 = vrcp.pop %v2951
    %v2953 = vmul.f32 1.0, %v2952
    %v2954 = vmul.f32 %v2942, %v2564
    %v2955 = vmul.f32 %v2933, %v2945
    %v2956 = vadd.f32 %v2954, %v2955
    %v2957 = vtanh.pop %v2956
    %v2958 = vmul.f32 %v2953, %v2957
    %s2959 = scalar_lea.vmem [#allocation3], 3
    %2960 = vst.msk [vmem:[%s2959] ss:$8 sm:$0x3] %vm1783, %v2958
    %2961 = vst.msk [vmem:[%s2959] ss:$8 sm:$0x0] %vm1783, %v2958
    %s2962 = scalar_lea.vmem [#allocation2], 4
    %v2963 = vld [vmem:[%s2962] ss:$8 sm:$0xf]
    %v2964 = vld [vmem:[%s2962] ss:$8 sm:$0xf0]
    %v2965 = vor.u32 %v2963, %v2964
    %v2967 = vlaneseq
    %v2968 = vshrl.u32 %v2967, 7
    %v2969 = vsub.s32 0, %v2968
    %v2970 = vrot.slane %v2958, %v2969
    %v2971 = vlaneseq
    %v2972 = vshrl.u32 %v2971, 7
    %v2973 = vsub.s32 1, %v2972
    %v2974 = vrot.slane %v2958, %v2973
    %2977 = vmatprep.subr.mxu0 %v1255
    %2978 = vmatpush1.msra.mxu0 %v1254
    %2979 = vmatprep.subr.mxu0 %v1247
    %2980 = vmatpush1.msra.mxu0 %v1246
    %2981 = vmatprep.subr.mxu0 %v1239
    %2982 = vmatpush1.msra.mxu0 %v1238
    %2983 = vmatprep.subr.mxu0 %v1231
    %2984 = vmatpush1.msra.mxu0 %v1230
    %2985 = vmatprep.subr.mxu0 %v1223
    %2986 = vmatpush1.msra.mxu0 %v1222
    %2987 = vmatprep.subr.mxu0 %v1215
    %2988 = vmatpush1.msra.mxu0 %v1214
    %2989 = vmatprep.subr.mxu0 %v1207
    %2990 = vmatpush1.msra.mxu0 %v1206
    %2991 = vmatprep.subr.mxu0 %v1199
    %2992 = vmatpush1.msra.mxu0 %v1198
    %2993 = vmatprep.subr.mxu0 %v1191
    %2994 = vmatpush1.msra.mxu0 %v1190
    %2995 = vmatprep.subr.mxu0 %v1183
    %2996 = vmatpush1.msra.mxu0 %v1182
    %2997 = vmatprep.subr.mxu0 %v1175
    %2998 = vmatpush1.msra.mxu0 %v1174
    %2999 = vmatprep.subr.mxu0 %v1167
    %3000 = vmatpush1.msra.mxu0 %v1166
    %3001 = vmatprep.subr.mxu0 %v1159
    %3002 = vmatpush1.msra.mxu0 %v1158
    %3003 = vmatprep.subr.mxu0 %v1151
    %3004 = vmatpush1.msra.mxu0 %v1150
    %3005 = vmatprep.subr.mxu0 %v1143
    %3006 = vmatpush1.msra.mxu0 %v1142
    %3007 = vmatprep.subr.mxu0 %v1135
    %3008 = vmatpush1.msra.mxu0 %v1134
    %3009 = vmatprep.subr.mxu0 %v1383
    %3010 = vmatpush2.msra.mxu0 %v1382
    %3011 = vmatprep.subr.mxu0 %v1375
    %3012 = vmatpush2.msra.mxu0 %v1374
    %3013 = vmatprep.subr.mxu0 %v1367
    %3014 = vmatpush2.msra.mxu0 %v1366
    %3015 = vmatprep.subr.mxu0 %v1359
    %3016 = vmatpush2.msra.mxu0 %v1358
    %3017 = vmatprep.subr.mxu0 %v1351
    %3018 = vmatpush2.msra.mxu0 %v1350
    %3019 = vmatprep.subr.mxu0 %v1343
    %3020 = vmatpush2.msra.mxu0 %v1342
    %3021 = vmatprep.subr.mxu0 %v1335
    %3022 = vmatpush2.msra.mxu0 %v1334
    %3023 = vmatprep.subr.mxu0 %v1327
    %3024 = vmatpush2.msra.mxu0 %v1326
    %3025 = vmatprep.subr.mxu0 %v1319
    %3026 = vmatpush2.msra.mxu0 %v1318
    %3027 = vmatprep.subr.mxu0 %v1311
    %3028 = vmatpush2.msra.mxu0 %v1310
    %3029 = vmatprep.subr.mxu0 %v1303
    %3030 = vmatpush2.msra.mxu0 %v1302
    %3031 = vmatprep.subr.mxu0 %v1295
    %3032 = vmatpush2.msra.mxu0 %v1294
    %3033 = vmatprep.subr.mxu0 %v1287
    %3034 = vmatpush2.msra.mxu0 %v1286
    %3035 = vmatprep.subr.mxu0 %v1279
    %3036 = vmatpush2.msra.mxu0 %v1278
    %3037 = vmatprep.subr.mxu0 %v1271
    %3038 = vmatpush2.msra.mxu0 %v1270
    %3039 = vmatprep.subr.mxu0 %v1263
    %3040 = vmatpush2.msra.mxu0 %v1262
    %3041 = vmatprep.mubr.f32.mxu0 %v2974
    %3042 = vmatmul.mubr.f32.gmra.mxu0 %v2970
    %v3043 = vpop.f32.mrf.mxu0
    %v3044 = vadd.f32 0.0, %v3043
    %v3045 = vpop.f32.mrf.mxu0
    %v3046 = vadd.f32 0.0, %v3045
    %3047 = vdwg.mxu0
    %3048 = vmatprep.subr.mxu0 %v1257
    %3049 = vmatpush1.msra.mxu0 %v1256
    %3050 = vmatprep.subr.mxu0 %v1249
    %3051 = vmatpush1.msra.mxu0 %v1248
    %3052 = vmatprep.subr.mxu0 %v1241
    %3053 = vmatpush1.msra.mxu0 %v1240
    %3054 = vmatprep.subr.mxu0 %v1233
    %3055 = vmatpush1.msra.mxu0 %v1232
    %3056 = vmatprep.subr.mxu0 %v1225
    %3057 = vmatpush1.msra.mxu0 %v1224
    %3058 = vmatprep.subr.mxu0 %v1217
    %3059 = vmatpush1.msra.mxu0 %v1216
    %3060 = vmatprep.subr.mxu0 %v1209
    %3061 = vmatpush1.msra.mxu0 %v1208
    %3062 = vmatprep.subr.mxu0 %v1201
    %3063 = vmatpush1.msra.mxu0 %v1200
    %3064 = vmatprep.subr.mxu0 %v1193
    %3065 = vmatpush1.msra.mxu0 %v1192
    %3066 = vmatprep.subr.mxu0 %v1185
    %3067 = vmatpush1.msra.mxu0 %v1184
    %3068 = vmatprep.subr.mxu0 %v1177
    %3069 = vmatpush1.msra.mxu0 %v1176
    %3070 = vmatprep.subr.mxu0 %v1169
    %3071 = vmatpush1.msra.mxu0 %v1168
    %3072 = vmatprep.subr.mxu0 %v1161
    %3073 = vmatpush1.msra.mxu0 %v1160
    %3074 = vmatprep.subr.mxu0 %v1153
    %3075 = vmatpush1.msra.mxu0 %v1152
    %3076 = vmatprep.subr.mxu0 %v1145
    %3077 = vmatpush1.msra.mxu0 %v1144
    %3078 = vmatprep.subr.mxu0 %v1137
    %3079 = vmatpush1.msra.mxu0 %v1136
    %3080 = vmatprep.subr.mxu0 %v1385
    %3081 = vmatpush2.msra.mxu0 %v1384
    %3082 = vmatprep.subr.mxu0 %v1377
    %3083 = vmatpush2.msra.mxu0 %v1376
    %3084 = vmatprep.subr.mxu0 %v1369
    %3085 = vmatpush2.msra.mxu0 %v1368
    %3086 = vmatprep.subr.mxu0 %v1361
    %3087 = vmatpush2.msra.mxu0 %v1360
    %3088 = vmatprep.subr.mxu0 %v1353
    %3089 = vmatpush2.msra.mxu0 %v1352
    %3090 = vmatprep.subr.mxu0 %v1345
    %3091 = vmatpush2.msra.mxu0 %v1344
    %3092 = vmatprep.subr.mxu0 %v1337
    %3093 = vmatpush2.msra.mxu0 %v1336
    %3094 = vmatprep.subr.mxu0 %v1329
    %3095 = vmatpush2.msra.mxu0 %v1328
    %3096 = vmatprep.subr.mxu0 %v1321
    %3097 = vmatpush2.msra.mxu0 %v1320
    %3098 = vmatprep.subr.mxu0 %v1313
    %3099 = vmatpush2.msra.mxu0 %v1312
    %3100 = vmatprep.subr.mxu0 %v1305
    %3101 = vmatpush2.msra.mxu0 %v1304
    %3102 = vmatprep.subr.mxu0 %v1297
    %3103 = vmatpush2.msra.mxu0 %v1296
    %3104 = vmatprep.subr.mxu0 %v1289
    %3105 = vmatpush2.msra.mxu0 %v1288
    %3106 = vmatprep.subr.mxu0 %v1281
    %3107 = vmatpush2.msra.mxu0 %v1280
    %3108 = vmatprep.subr.mxu0 %v1273
    %3109 = vmatpush2.msra.mxu0 %v1272
    %3110 = vmatprep.subr.mxu0 %v1265
    %3111 = vmatpush2.msra.mxu0 %v1264
    %3112 = vmatprep.mubr.f32.mxu0 %v2974
    %3113 = vmatmul.mubr.f32.gmra.mxu0 %v2970
    %v3114 = vpop.f32.mrf.mxu0
    %v3115 = vadd.f32 0.0, %v3114
    %v3116 = vpop.f32.mrf.mxu0
    %v3117 = vadd.f32 0.0, %v3116
    %3118 = vdwg.mxu0
    %3119 = vmatprep.subr.mxu0 %v1259
    %3120 = vmatpush1.msra.mxu0 %v1258
    %3121 = vmatprep.subr.mxu0 %v1251
    %3122 = vmatpush1.msra.mxu0 %v1250
    %3123 = vmatprep.subr.mxu0 %v1243
    %3124 = vmatpush1.msra.mxu0 %v1242
    %3125 = vmatprep.subr.mxu0 %v1235
    %3126 = vmatpush1.msra.mxu0 %v1234
    %3127 = vmatprep.subr.mxu0 %v1227
    %3128 = vmatpush1.msra.mxu0 %v1226
    %3129 = vmatprep.subr.mxu0 %v1219
    %3130 = vmatpush1.msra.mxu0 %v1218
    %3131 = vmatprep.subr.mxu0 %v1211
    %3132 = vmatpush1.msra.mxu0 %v1210
    %3133 = vmatprep.subr.mxu0 %v1203
    %3134 = vmatpush1.msra.mxu0 %v1202
    %3135 = vmatprep.subr.mxu0 %v1195
    %3136 = vmatpush1.msra.mxu0 %v1194
    %3137 = vmatprep.subr.mxu0 %v1187
    %3138 = vmatpush1.msra.mxu0 %v1186
    %3139 = vmatprep.subr.mxu0 %v1179
    %3140 = vmatpush1.msra.mxu0 %v1178
    %3141 = vmatprep.subr.mxu0 %v1171
    %3142 = vmatpush1.msra.mxu0 %v1170
    %3143 = vmatprep.subr.mxu0 %v1163
    %3144 = vmatpush1.msra.mxu0 %v1162
    %3145 = vmatprep.subr.mxu0 %v1155
    %3146 = vmatpush1.msra.mxu0 %v1154
    %3147 = vmatprep.subr.mxu0 %v1147
    %3148 = vmatpush1.msra.mxu0 %v1146
    %3149 = vmatprep.subr.mxu0 %v1139
    %3150 = vmatpush1.msra.mxu0 %v1138
    %3151 = vmatprep.subr.mxu0 %v1387
    %3152 = vmatpush2.msra.mxu0 %v1386
    %3153 = vmatprep.subr.mxu0 %v1379
    %3154 = vmatpush2.msra.mxu0 %v1378
    %3155 = vmatprep.subr.mxu0 %v1371
    %3156 = vmatpush2.msra.mxu0 %v1370
    %3157 = vmatprep.subr.mxu0 %v1363
    %3158 = vmatpush2.msra.mxu0 %v1362
    %3159 = vmatprep.subr.mxu0 %v1355
    %3160 = vmatpush2.msra.mxu0 %v1354
    %3161 = vmatprep.subr.mxu0 %v1347
    %3162 = vmatpush2.msra.mxu0 %v1346
    %3163 = vmatprep.subr.mxu0 %v1339
    %3164 = vmatpush2.msra.mxu0 %v1338
    %3165 = vmatprep.subr.mxu0 %v1331
    %3166 = vmatpush2.msra.mxu0 %v1330
    %3167 = vmatprep.subr.mxu0 %v1323
    %3168 = vmatpush2.msra.mxu0 %v1322
    %3169 = vmatprep.subr.mxu0 %v1315
    %3170 = vmatpush2.msra.mxu0 %v1314
    %3171 = vmatprep.subr.mxu0 %v1307
    %3172 = vmatpush2.msra.mxu0 %v1306
    %3173 = vmatprep.subr.mxu0 %v1299
    %3174 = vmatpush2.msra.mxu0 %v1298
    %3175 = vmatprep.subr.mxu0 %v1291
    %3176 = vmatpush2.msra.mxu0 %v1290
    %3177 = vmatprep.subr.mxu0 %v1283
    %3178 = vmatpush2.msra.mxu0 %v1282
    %3179 = vmatprep.subr.mxu0 %v1275
    %3180 = vmatpush2.msra.mxu0 %v1274
    %3181 = vmatprep.subr.mxu0 %v1267
    %3182 = vmatpush2.msra.mxu0 %v1266
    %3183 = vmatprep.mubr.f32.mxu0 %v2974
    %3184 = vmatmul.mubr.f32.gmra.mxu0 %v2970
    %v3185 = vpop.f32.mrf.mxu0
    %v3186 = vadd.f32 0.0, %v3185
    %v3187 = vpop.f32.mrf.mxu0
    %v3188 = vadd.f32 0.0, %v3187
    %3189 = vdwg.mxu0
    %3190 = vmatprep.subr.mxu0 %v1261
    %3191 = vmatpush1.msra.mxu0 %v1260
    %3192 = vmatprep.subr.mxu0 %v1253
    %3193 = vmatpush1.msra.mxu0 %v1252
    %3194 = vmatprep.subr.mxu0 %v1245
    %3195 = vmatpush1.msra.mxu0 %v1244
    %3196 = vmatprep.subr.mxu0 %v1237
    %3197 = vmatpush1.msra.mxu0 %v1236
    %3198 = vmatprep.subr.mxu0 %v1229
    %3199 = vmatpush1.msra.mxu0 %v1228
    %3200 = vmatprep.subr.mxu0 %v1221
    %3201 = vmatpush1.msra.mxu0 %v1220
    %3202 = vmatprep.subr.mxu0 %v1213
    %3203 = vmatpush1.msra.mxu0 %v1212
    %3204 = vmatprep.subr.mxu0 %v1205
    %3205 = vmatpush1.msra.mxu0 %v1204
    %3206 = vmatprep.subr.mxu0 %v1197
    %3207 = vmatpush1.msra.mxu0 %v1196
    %3208 = vmatprep.subr.mxu0 %v1189
    %3209 = vmatpush1.msra.mxu0 %v1188
    %3210 = vmatprep.subr.mxu0 %v1181
    %3211 = vmatpush1.msra.mxu0 %v1180
    %3212 = vmatprep.subr.mxu0 %v1173
    %3213 = vmatpush1.msra.mxu0 %v1172
    %3214 = vmatprep.subr.mxu0 %v1165
    %3215 = vmatpush1.msra.mxu0 %v1164
    %3216 = vmatprep.subr.mxu0 %v1157
    %3217 = vmatpush1.msra.mxu0 %v1156
    %3218 = vmatprep.subr.mxu0 %v1149
    %3219 = vmatpush1.msra.mxu0 %v1148
    %3220 = vmatprep.subr.mxu0 %v1141
    %3221 = vmatpush1.msra.mxu0 %v1140
    %3222 = vmatprep.subr.mxu0 %v1389
    %3223 = vmatpush2.msra.mxu0 %v1388
    %3224 = vmatprep.subr.mxu0 %v1381
    %3225 = vmatpush2.msra.mxu0 %v1380
    %3226 = vmatprep.subr.mxu0 %v1373
    %3227 = vmatpush2.msra.mxu0 %v1372
    %3228 = vmatprep.subr.mxu0 %v1365
    %3229 = vmatpush2.msra.mxu0 %v1364
    %3230 = vmatprep.subr.mxu0 %v1357
    %3231 = vmatpush2.msra.mxu0 %v1356
    %3232 = vmatprep.subr.mxu0 %v1349
    %3233 = vmatpush2.msra.mxu0 %v1348
    %3234 = vmatprep.subr.mxu0 %v1341
    %3235 = vmatpush2.msra.mxu0 %v1340
    %3236 = vmatprep.subr.mxu0 %v1333
    %3237 = vmatpush2.msra.mxu0 %v1332
    %3238 = vmatprep.subr.mxu0 %v1325
    %3239 = vmatpush2.msra.mxu0 %v1324
    %3240 = vmatprep.subr.mxu0 %v1317
    %3241 = vmatpush2.msra.mxu0 %v1316
    %3242 = vmatprep.subr.mxu0 %v1309
    %3243 = vmatpush2.msra.mxu0 %v1308
    %3244 = vmatprep.subr.mxu0 %v1301
    %3245 = vmatpush2.msra.mxu0 %v1300
    %3246 = vmatprep.subr.mxu0 %v1293
    %3247 = vmatpush2.msra.mxu0 %v1292
    %3248 = vmatprep.subr.mxu0 %v1285
    %3249 = vmatpush2.msra.mxu0 %v1284
    %3250 = vmatprep.subr.mxu0 %v1277
    %3251 = vmatpush2.msra.mxu0 %v1276
    %3252 = vmatprep.subr.mxu0 %v1269
    %3253 = vmatpush2.msra.mxu0 %v1268
    %3254 = vmatprep.mubr.f32.mxu0 %v2974
    %3255 = vmatmul.mubr.f32.gmra.mxu0 %v2970
    %v3256 = vpop.f32.mrf.mxu0
    %v3257 = vadd.f32 0.0, %v3256
    %v3258 = vpop.f32.mrf.mxu0
    %v3259 = vadd.f32 0.0, %v3258
    %3260 = vdwg.mxu0
    %v3269 = vcombine.low %v3044, %v3046
    %v3270 = vcombine.low %v3115, %v3117
    %v3271 = vcombine.low %v3186, %v3188
    %v3272 = vcombine.low %v3257, %v3259
    %v3274 = vunpack.c.l.s4 1966171168
    %v3275 = vunpack.c.0.s8 %v3274
    %v3276 = vlaneseq
    %v3277 = vshrl.u32 %v3276, 7
    %v3278 = vsub.s32 %v3275, %v3277
    %v3279 = vrot.slane %v3269, %v3278
    %v3281 = vunpack.c.l.s4 1966171168
    %v3282 = vunpack.c.0.s8 %v3281
    %v3283 = vlaneseq
    %v3284 = vshrl.u32 %v3283, 7
    %v3285 = vsub.s32 %v3282, %v3284
    %v3286 = vrot.slane %v3270, %v3285
    %v3288 = vunpack.c.l.s4 1966171168
    %v3289 = vunpack.c.0.s8 %v3288
    %v3290 = vlaneseq
    %v3291 = vshrl.u32 %v3290, 7
    %v3292 = vsub.s32 %v3289, %v3291
    %v3293 = vrot.slane %v3271, %v3292
    %v3295 = vunpack.c.l.s4 1966171168
    %v3296 = vunpack.c.0.s8 %v3295
    %v3297 = vlaneseq
    %v3298 = vshrl.u32 %v3297, 7
    %v3299 = vsub.s32 %v3296, %v3298
    %v3300 = vrot.slane %v3272, %v3299
    %v3301 = vcombine.low %v3279, %v3286
    %v3302 = vcombine.low %v3293, %v3300
    %v3304 = vunpack.c.l.s4 1966171168
    %v3305 = vunpack.c.0.s8 %v3304
    %v3306 = vlaneseq
    %v3307 = vshrl.u32 %v3306, 7
    %v3308 = vsub.s32 %v3305, %v3307
    %v3309 = vrot.slane %v3301, %v3308
    %v3311 = vunpack.c.l.s4 1966171168
    %v3312 = vunpack.c.0.s8 %v3311
    %v3313 = vlaneseq
    %v3314 = vshrl.u32 %v3313, 7
    %v3315 = vsub.s32 %v3312, %v3314
    %v3316 = vrot.slane %v3302, %v3315
    %v3317 = vcombine.low %v3309, %v3316
    %v3319 = vadd.f32 %v2965, %v3317
    %v3320 = vxor.u32 %v3319, 2147483648
    %v3321 = vmul.f32 %v3320, 1.442695
    %v3322 = vpow.pop %v3321
    %v3323 = vadd.f32 %v3322, 1.0
    %v3324 = vrcp.pop %v3323
    %v3325 = vmul.f32 1.0, %v3324
    %v3327 = vrot.slane %v3319, 2
    %v3329 = vxor.u32 %v3327, 2147483648
    %v3330 = vmul.f32 %v3329, 1.442695
    %v3331 = vpow.pop %v3330
    %v3332 = vadd.f32 %v3331, 1.0
    %v3333 = vrcp.pop %v3332
    %v3334 = vmul.f32 1.0, %v3333
    %v3335 = vrot.slane %v3319, 4
    %v3337 = vtanh.pop %v3335
    %v3338 = vrot.slane %v3319, 6
    %v3340 = vxor.u32 %v3338, 2147483648
    %v3341 = vmul.f32 %v3340, 1.442695
    %v3342 = vpow.pop %v3341
    %v3343 = vadd.f32 %v3342, 1.0
    %v3344 = vrcp.pop %v3343
    %v3345 = vmul.f32 1.0, %v3344
    %v3346 = vmul.f32 %v3334, %v2956
    %v3347 = vmul.f32 %v3325, %v3337
    %v3348 = vadd.f32 %v3346, %v3347
    %v3349 = vtanh.pop %v3348
    %v3350 = vmul.f32 %v3345, %v3349
    %s3351 = scalar_lea.vmem [#allocation3], 4
    %3352 = vst.msk [vmem:[%s3351] ss:$8 sm:$0x3] %vm1783, %v3350
    %3353 = vst.msk [vmem:[%s3351] ss:$8 sm:$0x0] %vm1783, %v3350
    %s3354 = scalar_lea.vmem [#allocation2], 5
    %v3355 = vld [vmem:[%s3354] ss:$8 sm:$0xf]
    %v3356 = vld [vmem:[%s3354] ss:$8 sm:$0xf0]
    %v3357 = vor.u32 %v3355, %v3356
    %v3359 = vlaneseq
    %v3360 = vshrl.u32 %v3359, 7
    %v3361 = vsub.s32 0, %v3360
    %v3362 = vrot.slane %v3350, %v3361
    %v3363 = vlaneseq
    %v3364 = vshrl.u32 %v3363, 7
    %v3365 = vsub.s32 1, %v3364
    %v3366 = vrot.slane %v3350, %v3365
    %3369 = vmatprep.subr.mxu0 %v1255
    %3370 = vmatpush1.msra.mxu0 %v1254
    %3371 = vmatprep.subr.mxu0 %v1247
    %3372 = vmatpush1.msra.mxu0 %v1246
    %3373 = vmatprep.subr.mxu0 %v1239
    %3374 = vmatpush1.msra.mxu0 %v1238
    %3375 = vmatprep.subr.mxu0 %v1231
    %3376 = vmatpush1.msra.mxu0 %v1230
    %3377 = vmatprep.subr.mxu0 %v1223
    %3378 = vmatpush1.msra.mxu0 %v1222
    %3379 = vmatprep.subr.mxu0 %v1215
    %3380 = vmatpush1.msra.mxu0 %v1214
    %3381 = vmatprep.subr.mxu0 %v1207
    %3382 = vmatpush1.msra.mxu0 %v1206
    %3383 = vmatprep.subr.mxu0 %v1199
    %3384 = vmatpush1.msra.mxu0 %v1198
    %3385 = vmatprep.subr.mxu0 %v1191
    %3386 = vmatpush1.msra.mxu0 %v1190
    %3387 = vmatprep.subr.mxu0 %v1183
    %3388 = vmatpush1.msra.mxu0 %v1182
    %3389 = vmatprep.subr.mxu0 %v1175
    %3390 = vmatpush1.msra.mxu0 %v1174
    %3391 = vmatprep.subr.mxu0 %v1167
    %3392 = vmatpush1.msra.mxu0 %v1166
    %3393 = vmatprep.subr.mxu0 %v1159
    %3394 = vmatpush1.msra.mxu0 %v1158
    %3395 = vmatprep.subr.mxu0 %v1151
    %3396 = vmatpush1.msra.mxu0 %v1150
    %3397 = vmatprep.subr.mxu0 %v1143
    %3398 = vmatpush1.msra.mxu0 %v1142
    %3399 = vmatprep.subr.mxu0 %v1135
    %3400 = vmatpush1.msra.mxu0 %v1134
    %3401 = vmatprep.subr.mxu0 %v1383
    %3402 = vmatpush2.msra.mxu0 %v1382
    %3403 = vmatprep.subr.mxu0 %v1375
    %3404 = vmatpush2.msra.mxu0 %v1374
    %3405 = vmatprep.subr.mxu0 %v1367
    %3406 = vmatpush2.msra.mxu0 %v1366
    %3407 = vmatprep.subr.mxu0 %v1359
    %3408 = vmatpush2.msra.mxu0 %v1358
    %3409 = vmatprep.subr.mxu0 %v1351
    %3410 = vmatpush2.msra.mxu0 %v1350
    %3411 = vmatprep.subr.mxu0 %v1343
    %3412 = vmatpush2.msra.mxu0 %v1342
    %3413 = vmatprep.subr.mxu0 %v1335
    %3414 = vmatpush2.msra.mxu0 %v1334
    %3415 = vmatprep.subr.mxu0 %v1327
    %3416 = vmatpush2.msra.mxu0 %v1326
    %3417 = vmatprep.subr.mxu0 %v1319
    %3418 = vmatpush2.msra.mxu0 %v1318
    %3419 = vmatprep.subr.mxu0 %v1311
    %3420 = vmatpush2.msra.mxu0 %v1310
    %3421 = vmatprep.subr.mxu0 %v1303
    %3422 = vmatpush2.msra.mxu0 %v1302
    %3423 = vmatprep.subr.mxu0 %v1295
    %3424 = vmatpush2.msra.mxu0 %v1294
    %3425 = vmatprep.subr.mxu0 %v1287
    %3426 = vmatpush2.msra.mxu0 %v1286
    %3427 = vmatprep.subr.mxu0 %v1279
    %3428 = vmatpush2.msra.mxu0 %v1278
    %3429 = vmatprep.subr.mxu0 %v1271
    %3430 = vmatpush2.msra.mxu0 %v1270
    %3431 = vmatprep.subr.mxu0 %v1263
    %3432 = vmatpush2.msra.mxu0 %v1262
    %3433 = vmatprep.mubr.f32.mxu0 %v3366
    %3434 = vmatmul.mubr.f32.gmra.mxu0 %v3362
    %v3435 = vpop.f32.mrf.mxu0
    %v3436 = vadd.f32 0.0, %v3435
    %v3437 = vpop.f32.mrf.mxu0
    %v3438 = vadd.f32 0.0, %v3437
    %3439 = vdwg.mxu0
    %3440 = vmatprep.subr.mxu0 %v1257
    %3441 = vmatpush1.msra.mxu0 %v1256
    %3442 = vmatprep.subr.mxu0 %v1249
    %3443 = vmatpush1.msra.mxu0 %v1248
    %3444 = vmatprep.subr.mxu0 %v1241
    %3445 = vmatpush1.msra.mxu0 %v1240
    %3446 = vmatprep.subr.mxu0 %v1233
    %3447 = vmatpush1.msra.mxu0 %v1232
    %3448 = vmatprep.subr.mxu0 %v1225
    %3449 = vmatpush1.msra.mxu0 %v1224
    %3450 = vmatprep.subr.mxu0 %v1217
    %3451 = vmatpush1.msra.mxu0 %v1216
    %3452 = vmatprep.subr.mxu0 %v1209
    %3453 = vmatpush1.msra.mxu0 %v1208
    %3454 = vmatprep.subr.mxu0 %v1201
    %3455 = vmatpush1.msra.mxu0 %v1200
    %3456 = vmatprep.subr.mxu0 %v1193
    %3457 = vmatpush1.msra.mxu0 %v1192
    %3458 = vmatprep.subr.mxu0 %v1185
    %3459 = vmatpush1.msra.mxu0 %v1184
    %3460 = vmatprep.subr.mxu0 %v1177
    %3461 = vmatpush1.msra.mxu0 %v1176
    %3462 = vmatprep.subr.mxu0 %v1169
    %3463 = vmatpush1.msra.mxu0 %v1168
    %3464 = vmatprep.subr.mxu0 %v1161
    %3465 = vmatpush1.msra.mxu0 %v1160
    %3466 = vmatprep.subr.mxu0 %v1153
    %3467 = vmatpush1.msra.mxu0 %v1152
    %3468 = vmatprep.subr.mxu0 %v1145
    %3469 = vmatpush1.msra.mxu0 %v1144
    %3470 = vmatprep.subr.mxu0 %v1137
    %3471 = vmatpush1.msra.mxu0 %v1136
    %3472 = vmatprep.subr.mxu0 %v1385
    %3473 = vmatpush2.msra.mxu0 %v1384
    %3474 = vmatprep.subr.mxu0 %v1377
    %3475 = vmatpush2.msra.mxu0 %v1376
    %3476 = vmatprep.subr.mxu0 %v1369
    %3477 = vmatpush2.msra.mxu0 %v1368
    %3478 = vmatprep.subr.mxu0 %v1361
    %3479 = vmatpush2.msra.mxu0 %v1360
    %3480 = vmatprep.subr.mxu0 %v1353
    %3481 = vmatpush2.msra.mxu0 %v1352
    %3482 = vmatprep.subr.mxu0 %v1345
    %3483 = vmatpush2.msra.mxu0 %v1344
    %3484 = vmatprep.subr.mxu0 %v1337
    %3485 = vmatpush2.msra.mxu0 %v1336
    %3486 = vmatprep.subr.mxu0 %v1329
    %3487 = vmatpush2.msra.mxu0 %v1328
    %3488 = vmatprep.subr.mxu0 %v1321
    %3489 = vmatpush2.msra.mxu0 %v1320
    %3490 = vmatprep.subr.mxu0 %v1313
    %3491 = vmatpush2.msra.mxu0 %v1312
    %3492 = vmatprep.subr.mxu0 %v1305
    %3493 = vmatpush2.msra.mxu0 %v1304
    %3494 = vmatprep.subr.mxu0 %v1297
    %3495 = vmatpush2.msra.mxu0 %v1296
    %3496 = vmatprep.subr.mxu0 %v1289
    %3497 = vmatpush2.msra.mxu0 %v1288
    %3498 = vmatprep.subr.mxu0 %v1281
    %3499 = vmatpush2.msra.mxu0 %v1280
    %3500 = vmatprep.subr.mxu0 %v1273
    %3501 = vmatpush2.msra.mxu0 %v1272
    %3502 = vmatprep.subr.mxu0 %v1265
    %3503 = vmatpush2.msra.mxu0 %v1264
    %3504 = vmatprep.mubr.f32.mxu0 %v3366
    %3505 = vmatmul.mubr.f32.gmra.mxu0 %v3362
    %v3506 = vpop.f32.mrf.mxu0
    %v3507 = vadd.f32 0.0, %v3506
    %v3508 = vpop.f32.mrf.mxu0
    %v3509 = vadd.f32 0.0, %v3508
    %3510 = vdwg.mxu0
    %3511 = vmatprep.subr.mxu0 %v1259
    %3512 = vmatpush1.msra.mxu0 %v1258
    %3513 = vmatprep.subr.mxu0 %v1251
    %3514 = vmatpush1.msra.mxu0 %v1250
    %3515 = vmatprep.subr.mxu0 %v1243
    %3516 = vmatpush1.msra.mxu0 %v1242
    %3517 = vmatprep.subr.mxu0 %v1235
    %3518 = vmatpush1.msra.mxu0 %v1234
    %3519 = vmatprep.subr.mxu0 %v1227
    %3520 = vmatpush1.msra.mxu0 %v1226
    %3521 = vmatprep.subr.mxu0 %v1219
    %3522 = vmatpush1.msra.mxu0 %v1218
    %3523 = vmatprep.subr.mxu0 %v1211
    %3524 = vmatpush1.msra.mxu0 %v1210
    %3525 = vmatprep.subr.mxu0 %v1203
    %3526 = vmatpush1.msra.mxu0 %v1202
    %3527 = vmatprep.subr.mxu0 %v1195
    %3528 = vmatpush1.msra.mxu0 %v1194
    %3529 = vmatprep.subr.mxu0 %v1187
    %3530 = vmatpush1.msra.mxu0 %v1186
    %3531 = vmatprep.subr.mxu0 %v1179
    %3532 = vmatpush1.msra.mxu0 %v1178
    %3533 = vmatprep.subr.mxu0 %v1171
    %3534 = vmatpush1.msra.mxu0 %v1170
    %3535 = vmatprep.subr.mxu0 %v1163
    %3536 = vmatpush1.msra.mxu0 %v1162
    %3537 = vmatprep.subr.mxu0 %v1155
    %3538 = vmatpush1.msra.mxu0 %v1154
    %3539 = vmatprep.subr.mxu0 %v1147
    %3540 = vmatpush1.msra.mxu0 %v1146
    %3541 = vmatprep.subr.mxu0 %v1139
    %3542 = vmatpush1.msra.mxu0 %v1138
    %3543 = vmatprep.subr.mxu0 %v1387
    %3544 = vmatpush2.msra.mxu0 %v1386
    %3545 = vmatprep.subr.mxu0 %v1379
    %3546 = vmatpush2.msra.mxu0 %v1378
    %3547 = vmatprep.subr.mxu0 %v1371
    %3548 = vmatpush2.msra.mxu0 %v1370
    %3549 = vmatprep.subr.mxu0 %v1363
    %3550 = vmatpush2.msra.mxu0 %v1362
    %3551 = vmatprep.subr.mxu0 %v1355
    %3552 = vmatpush2.msra.mxu0 %v1354
    %3553 = vmatprep.subr.mxu0 %v1347
    %3554 = vmatpush2.msra.mxu0 %v1346
    %3555 = vmatprep.subr.mxu0 %v1339
    %3556 = vmatpush2.msra.mxu0 %v1338
    %3557 = vmatprep.subr.mxu0 %v1331
    %3558 = vmatpush2.msra.mxu0 %v1330
    %3559 = vmatprep.subr.mxu0 %v1323
    %3560 = vmatpush2.msra.mxu0 %v1322
    %3561 = vmatprep.subr.mxu0 %v1315
    %3562 = vmatpush2.msra.mxu0 %v1314
    %3563 = vmatprep.subr.mxu0 %v1307
    %3564 = vmatpush2.msra.mxu0 %v1306
    %3565 = vmatprep.subr.mxu0 %v1299
    %3566 = vmatpush2.msra.mxu0 %v1298
    %3567 = vmatprep.subr.mxu0 %v1291
    %3568 = vmatpush2.msra.mxu0 %v1290
    %3569 = vmatprep.subr.mxu0 %v1283
    %3570 = vmatpush2.msra.mxu0 %v1282
    %3571 = vmatprep.subr.mxu0 %v1275
    %3572 = vmatpush2.msra.mxu0 %v1274
    %3573 = vmatprep.subr.mxu0 %v1267
    %3574 = vmatpush2.msra.mxu0 %v1266
    %3575 = vmatprep.mubr.f32.mxu0 %v3366
    %3576 = vmatmul.mubr.f32.gmra.mxu0 %v3362
    %v3577 = vpop.f32.mrf.mxu0
    %v3578 = vadd.f32 0.0, %v3577
    %v3579 = vpop.f32.mrf.mxu0
    %v3580 = vadd.f32 0.0, %v3579
    %3581 = vdwg.mxu0
    %3582 = vmatprep.subr.mxu0 %v1261
    %3583 = vmatpush1.msra.mxu0 %v1260
    %3584 = vmatprep.subr.mxu0 %v1253
    %3585 = vmatpush1.msra.mxu0 %v1252
    %3586 = vmatprep.subr.mxu0 %v1245
    %3587 = vmatpush1.msra.mxu0 %v1244
    %3588 = vmatprep.subr.mxu0 %v1237
    %3589 = vmatpush1.msra.mxu0 %v1236
    %3590 = vmatprep.subr.mxu0 %v1229
    %3591 = vmatpush1.msra.mxu0 %v1228
    %3592 = vmatprep.subr.mxu0 %v1221
    %3593 = vmatpush1.msra.mxu0 %v1220
    %3594 = vmatprep.subr.mxu0 %v1213
    %3595 = vmatpush1.msra.mxu0 %v1212
    %3596 = vmatprep.subr.mxu0 %v1205
    %3597 = vmatpush1.msra.mxu0 %v1204
    %3598 = vmatprep.subr.mxu0 %v1197
    %3599 = vmatpush1.msra.mxu0 %v1196
    %3600 = vmatprep.subr.mxu0 %v1189
    %3601 = vmatpush1.msra.mxu0 %v1188
    %3602 = vmatprep.subr.mxu0 %v1181
    %3603 = vmatpush1.msra.mxu0 %v1180
    %3604 = vmatprep.subr.mxu0 %v1173
    %3605 = vmatpush1.msra.mxu0 %v1172
    %3606 = vmatprep.subr.mxu0 %v1165
    %3607 = vmatpush1.msra.mxu0 %v1164
    %3608 = vmatprep.subr.mxu0 %v1157
    %3609 = vmatpush1.msra.mxu0 %v1156
    %3610 = vmatprep.subr.mxu0 %v1149
    %3611 = vmatpush1.msra.mxu0 %v1148
    %3612 = vmatprep.subr.mxu0 %v1141
    %3613 = vmatpush1.msra.mxu0 %v1140
    %3614 = vmatprep.subr.mxu0 %v1389
    %3615 = vmatpush2.msra.mxu0 %v1388
    %3616 = vmatprep.subr.mxu0 %v1381
    %3617 = vmatpush2.msra.mxu0 %v1380
    %3618 = vmatprep.subr.mxu0 %v1373
    %3619 = vmatpush2.msra.mxu0 %v1372
    %3620 = vmatprep.subr.mxu0 %v1365
    %3621 = vmatpush2.msra.mxu0 %v1364
    %3622 = vmatprep.subr.mxu0 %v1357
    %3623 = vmatpush2.msra.mxu0 %v1356
    %3624 = vmatprep.subr.mxu0 %v1349
    %3625 = vmatpush2.msra.mxu0 %v1348
    %3626 = vmatprep.subr.mxu0 %v1341
    %3627 = vmatpush2.msra.mxu0 %v1340
    %3628 = vmatprep.subr.mxu0 %v1333
    %3629 = vmatpush2.msra.mxu0 %v1332
    %3630 = vmatprep.subr.mxu0 %v1325
    %3631 = vmatpush2.msra.mxu0 %v1324
    %3632 = vmatprep.subr.mxu0 %v1317
    %3633 = vmatpush2.msra.mxu0 %v1316
    %3634 = vmatprep.subr.mxu0 %v1309
    %3635 = vmatpush2.msra.mxu0 %v1308
    %3636 = vmatprep.subr.mxu0 %v1301
    %3637 = vmatpush2.msra.mxu0 %v1300
    %3638 = vmatprep.subr.mxu0 %v1293
    %3639 = vmatpush2.msra.mxu0 %v1292
    %3640 = vmatprep.subr.mxu0 %v1285
    %3641 = vmatpush2.msra.mxu0 %v1284
    %3642 = vmatprep.subr.mxu0 %v1277
    %3643 = vmatpush2.msra.mxu0 %v1276
    %3644 = vmatprep.subr.mxu0 %v1269
    %3645 = vmatpush2.msra.mxu0 %v1268
    %3646 = vmatprep.mubr.f32.mxu0 %v3366
    %3647 = vmatmul.mubr.f32.gmra.mxu0 %v3362
    %v3648 = vpop.f32.mrf.mxu0
    %v3649 = vadd.f32 0.0, %v3648
    %v3650 = vpop.f32.mrf.mxu0
    %v3651 = vadd.f32 0.0, %v3650
    %3652 = vdwg.mxu0
    %v3661 = vcombine.low %v3436, %v3438
    %v3662 = vcombine.low %v3507, %v3509
    %v3663 = vcombine.low %v3578, %v3580
    %v3664 = vcombine.low %v3649, %v3651
    %v3666 = vunpack.c.l.s4 1966171168
    %v3667 = vunpack.c.0.s8 %v3666
    %v3668 = vlaneseq
    %v3669 = vshrl.u32 %v3668, 7
    %v3670 = vsub.s32 %v3667, %v3669
    %v3671 = vrot.slane %v3661, %v3670
    %v3673 = vunpack.c.l.s4 1966171168
    %v3674 = vunpack.c.0.s8 %v3673
    %v3675 = vlaneseq
    %v3676 = vshrl.u32 %v3675, 7
    %v3677 = vsub.s32 %v3674, %v3676
    %v3678 = vrot.slane %v3662, %v3677
    %v3680 = vunpack.c.l.s4 1966171168
    %v3681 = vunpack.c.0.s8 %v3680
    %v3682 = vlaneseq
    %v3683 = vshrl.u32 %v3682, 7
    %v3684 = vsub.s32 %v3681, %v3683
    %v3685 = vrot.slane %v3663, %v3684
    %v3687 = vunpack.c.l.s4 1966171168
    %v3688 = vunpack.c.0.s8 %v3687
    %v3689 = vlaneseq
    %v3690 = vshrl.u32 %v3689, 7
    %v3691 = vsub.s32 %v3688, %v3690
    %v3692 = vrot.slane %v3664, %v3691
    %v3693 = vcombine.low %v3671, %v3678
    %v3694 = vcombine.low %v3685, %v3692
    %v3696 = vunpack.c.l.s4 1966171168
    %v3697 = vunpack.c.0.s8 %v3696
    %v3698 = vlaneseq
    %v3699 = vshrl.u32 %v3698, 7
    %v3700 = vsub.s32 %v3697, %v3699
    %v3701 = vrot.slane %v3693, %v3700
    %v3703 = vunpack.c.l.s4 1966171168
    %v3704 = vunpack.c.0.s8 %v3703
    %v3705 = vlaneseq
    %v3706 = vshrl.u32 %v3705, 7
    %v3707 = vsub.s32 %v3704, %v3706
    %v3708 = vrot.slane %v3694, %v3707
    %v3709 = vcombine.low %v3701, %v3708
    %v3711 = vadd.f32 %v3357, %v3709
    %v3712 = vxor.u32 %v3711, 2147483648
    %v3713 = vmul.f32 %v3712, 1.442695
    %v3714 = vpow.pop %v3713
    %v3715 = vadd.f32 %v3714, 1.0
    %v3716 = vrcp.pop %v3715
    %v3717 = vmul.f32 1.0, %v3716
    %v3719 = vrot.slane %v3711, 2
    %v3721 = vxor.u32 %v3719, 2147483648
    %v3722 = vmul.f32 %v3721, 1.442695
    %v3723 = vpow.pop %v3722
    %v3724 = vadd.f32 %v3723, 1.0
    %v3725 = vrcp.pop %v3724
    %v3726 = vmul.f32 1.0, %v3725
    %v3727 = vrot.slane %v3711, 4
    %v3729 = vtanh.pop %v3727
    %v3730 = vrot.slane %v3711, 6
    %v3732 = vxor.u32 %v3730, 2147483648
    %v3733 = vmul.f32 %v3732, 1.442695
    %v3734 = vpow.pop %v3733
    %v3735 = vadd.f32 %v3734, 1.0
    %v3736 = vrcp.pop %v3735
    %v3737 = vmul.f32 1.0, %v3736
    %v3738 = vmul.f32 %v3726, %v3348
    %v3739 = vmul.f32 %v3717, %v3729
    %v3740 = vadd.f32 %v3738, %v3739
    %v3741 = vtanh.pop %v3740
    %v3742 = vmul.f32 %v3737, %v3741
    %s3743 = scalar_lea.vmem [#allocation3], 5
    %3744 = vst.msk [vmem:[%s3743] ss:$8 sm:$0x3] %vm1783, %v3742
    %3745 = vst.msk [vmem:[%s3743] ss:$8 sm:$0x0] %vm1783, %v3742
    %s3746 = scalar_lea.vmem [#allocation2], 6
    %v3747 = vld [vmem:[%s3746] ss:$8 sm:$0xf]
    %v3748 = vld [vmem:[%s3746] ss:$8 sm:$0xf0]
    %v3749 = vor.u32 %v3747, %v3748
    %v3751 = vlaneseq
    %v3752 = vshrl.u32 %v3751, 7
    %v3753 = vsub.s32 0, %v3752
    %v3754 = vrot.slane %v3742, %v3753
    %v3755 = vlaneseq
    %v3756 = vshrl.u32 %v3755, 7
    %v3757 = vsub.s32 1, %v3756
    %v3758 = vrot.slane %v3742, %v3757
    %3761 = vmatprep.subr.mxu0 %v1255
    %3762 = vmatpush1.msra.mxu0 %v1254
    %3763 = vmatprep.subr.mxu0 %v1247
    %3764 = vmatpush1.msra.mxu0 %v1246
    %3765 = vmatprep.subr.mxu0 %v1239
    %3766 = vmatpush1.msra.mxu0 %v1238
    %3767 = vmatprep.subr.mxu0 %v1231
    %3768 = vmatpush1.msra.mxu0 %v1230
    %3769 = vmatprep.subr.mxu0 %v1223
    %3770 = vmatpush1.msra.mxu0 %v1222
    %3771 = vmatprep.subr.mxu0 %v1215
    %3772 = vmatpush1.msra.mxu0 %v1214
    %3773 = vmatprep.subr.mxu0 %v1207
    %3774 = vmatpush1.msra.mxu0 %v1206
    %3775 = vmatprep.subr.mxu0 %v1199
    %3776 = vmatpush1.msra.mxu0 %v1198
    %3777 = vmatprep.subr.mxu0 %v1191
    %3778 = vmatpush1.msra.mxu0 %v1190
    %3779 = vmatprep.subr.mxu0 %v1183
    %3780 = vmatpush1.msra.mxu0 %v1182
    %3781 = vmatprep.subr.mxu0 %v1175
    %3782 = vmatpush1.msra.mxu0 %v1174
    %3783 = vmatprep.subr.mxu0 %v1167
    %3784 = vmatpush1.msra.mxu0 %v1166
    %3785 = vmatprep.subr.mxu0 %v1159
    %3786 = vmatpush1.msra.mxu0 %v1158
    %3787 = vmatprep.subr.mxu0 %v1151
    %3788 = vmatpush1.msra.mxu0 %v1150
    %3789 = vmatprep.subr.mxu0 %v1143
    %3790 = vmatpush1.msra.mxu0 %v1142
    %3791 = vmatprep.subr.mxu0 %v1135
    %3792 = vmatpush1.msra.mxu0 %v1134
    %3793 = vmatprep.subr.mxu0 %v1383
    %3794 = vmatpush2.msra.mxu0 %v1382
    %3795 = vmatprep.subr.mxu0 %v1375
    %3796 = vmatpush2.msra.mxu0 %v1374
    %3797 = vmatprep.subr.mxu0 %v1367
    %3798 = vmatpush2.msra.mxu0 %v1366
    %3799 = vmatprep.subr.mxu0 %v1359
    %3800 = vmatpush2.msra.mxu0 %v1358
    %3801 = vmatprep.subr.mxu0 %v1351
    %3802 = vmatpush2.msra.mxu0 %v1350
    %3803 = vmatprep.subr.mxu0 %v1343
    %3804 = vmatpush2.msra.mxu0 %v1342
    %3805 = vmatprep.subr.mxu0 %v1335
    %3806 = vmatpush2.msra.mxu0 %v1334
    %3807 = vmatprep.subr.mxu0 %v1327
    %3808 = vmatpush2.msra.mxu0 %v1326
    %3809 = vmatprep.subr.mxu0 %v1319
    %3810 = vmatpush2.msra.mxu0 %v1318
    %3811 = vmatprep.subr.mxu0 %v1311
    %3812 = vmatpush2.msra.mxu0 %v1310
    %3813 = vmatprep.subr.mxu0 %v1303
    %3814 = vmatpush2.msra.mxu0 %v1302
    %3815 = vmatprep.subr.mxu0 %v1295
    %3816 = vmatpush2.msra.mxu0 %v1294
    %3817 = vmatprep.subr.mxu0 %v1287
    %3818 = vmatpush2.msra.mxu0 %v1286
    %3819 = vmatprep.subr.mxu0 %v1279
    %3820 = vmatpush2.msra.mxu0 %v1278
    %3821 = vmatprep.subr.mxu0 %v1271
    %3822 = vmatpush2.msra.mxu0 %v1270
    %3823 = vmatprep.subr.mxu0 %v1263
    %3824 = vmatpush2.msra.mxu0 %v1262
    %3825 = vmatprep.mubr.f32.mxu0 %v3758
    %3826 = vmatmul.mubr.f32.gmra.mxu0 %v3754
    %v3827 = vpop.f32.mrf.mxu0
    %v3828 = vadd.f32 0.0, %v3827
    %v3829 = vpop.f32.mrf.mxu0
    %v3830 = vadd.f32 0.0, %v3829
    %3831 = vdwg.mxu0
    %3832 = vmatprep.subr.mxu0 %v1257
    %3833 = vmatpush1.msra.mxu0 %v1256
    %3834 = vmatprep.subr.mxu0 %v1249
    %3835 = vmatpush1.msra.mxu0 %v1248
    %3836 = vmatprep.subr.mxu0 %v1241
    %3837 = vmatpush1.msra.mxu0 %v1240
    %3838 = vmatprep.subr.mxu0 %v1233
    %3839 = vmatpush1.msra.mxu0 %v1232
    %3840 = vmatprep.subr.mxu0 %v1225
    %3841 = vmatpush1.msra.mxu0 %v1224
    %3842 = vmatprep.subr.mxu0 %v1217
    %3843 = vmatpush1.msra.mxu0 %v1216
    %3844 = vmatprep.subr.mxu0 %v1209
    %3845 = vmatpush1.msra.mxu0 %v1208
    %3846 = vmatprep.subr.mxu0 %v1201
    %3847 = vmatpush1.msra.mxu0 %v1200
    %3848 = vmatprep.subr.mxu0 %v1193
    %3849 = vmatpush1.msra.mxu0 %v1192
    %3850 = vmatprep.subr.mxu0 %v1185
    %3851 = vmatpush1.msra.mxu0 %v1184
    %3852 = vmatprep.subr.mxu0 %v1177
    %3853 = vmatpush1.msra.mxu0 %v1176
    %3854 = vmatprep.subr.mxu0 %v1169
    %3855 = vmatpush1.msra.mxu0 %v1168
    %3856 = vmatprep.subr.mxu0 %v1161
    %3857 = vmatpush1.msra.mxu0 %v1160
    %3858 = vmatprep.subr.mxu0 %v1153
    %3859 = vmatpush1.msra.mxu0 %v1152
    %3860 = vmatprep.subr.mxu0 %v1145
    %3861 = vmatpush1.msra.mxu0 %v1144
    %3862 = vmatprep.subr.mxu0 %v1137
    %3863 = vmatpush1.msra.mxu0 %v1136
    %3864 = vmatprep.subr.mxu0 %v1385
    %3865 = vmatpush2.msra.mxu0 %v1384
    %3866 = vmatprep.subr.mxu0 %v1377
    %3867 = vmatpush2.msra.mxu0 %v1376
    %3868 = vmatprep.subr.mxu0 %v1369
    %3869 = vmatpush2.msra.mxu0 %v1368
    %3870 = vmatprep.subr.mxu0 %v1361
    %3871 = vmatpush2.msra.mxu0 %v1360
    %3872 = vmatprep.subr.mxu0 %v1353
    %3873 = vmatpush2.msra.mxu0 %v1352
    %3874 = vmatprep.subr.mxu0 %v1345
    %3875 = vmatpush2.msra.mxu0 %v1344
    %3876 = vmatprep.subr.mxu0 %v1337
    %3877 = vmatpush2.msra.mxu0 %v1336
    %3878 = vmatprep.subr.mxu0 %v1329
    %3879 = vmatpush2.msra.mxu0 %v1328
    %3880 = vmatprep.subr.mxu0 %v1321
    %3881 = vmatpush2.msra.mxu0 %v1320
    %3882 = vmatprep.subr.mxu0 %v1313
    %3883 = vmatpush2.msra.mxu0 %v1312
    %3884 = vmatprep.subr.mxu0 %v1305
    %3885 = vmatpush2.msra.mxu0 %v1304
    %3886 = vmatprep.subr.mxu0 %v1297
    %3887 = vmatpush2.msra.mxu0 %v1296
    %3888 = vmatprep.subr.mxu0 %v1289
    %3889 = vmatpush2.msra.mxu0 %v1288
    %3890 = vmatprep.subr.mxu0 %v1281
    %3891 = vmatpush2.msra.mxu0 %v1280
    %3892 = vmatprep.subr.mxu0 %v1273
    %3893 = vmatpush2.msra.mxu0 %v1272
    %3894 = vmatprep.subr.mxu0 %v1265
    %3895 = vmatpush2.msra.mxu0 %v1264
    %3896 = vmatprep.mubr.f32.mxu0 %v3758
    %3897 = vmatmul.mubr.f32.gmra.mxu0 %v3754
    %v3898 = vpop.f32.mrf.mxu0
    %v3899 = vadd.f32 0.0, %v3898
    %v3900 = vpop.f32.mrf.mxu0
    %v3901 = vadd.f32 0.0, %v3900
    %3902 = vdwg.mxu0
    %3903 = vmatprep.subr.mxu0 %v1259
    %3904 = vmatpush1.msra.mxu0 %v1258
    %3905 = vmatprep.subr.mxu0 %v1251
    %3906 = vmatpush1.msra.mxu0 %v1250
    %3907 = vmatprep.subr.mxu0 %v1243
    %3908 = vmatpush1.msra.mxu0 %v1242
    %3909 = vmatprep.subr.mxu0 %v1235
    %3910 = vmatpush1.msra.mxu0 %v1234
    %3911 = vmatprep.subr.mxu0 %v1227
    %3912 = vmatpush1.msra.mxu0 %v1226
    %3913 = vmatprep.subr.mxu0 %v1219
    %3914 = vmatpush1.msra.mxu0 %v1218
    %3915 = vmatprep.subr.mxu0 %v1211
    %3916 = vmatpush1.msra.mxu0 %v1210
    %3917 = vmatprep.subr.mxu0 %v1203
    %3918 = vmatpush1.msra.mxu0 %v1202
    %3919 = vmatprep.subr.mxu0 %v1195
    %3920 = vmatpush1.msra.mxu0 %v1194
    %3921 = vmatprep.subr.mxu0 %v1187
    %3922 = vmatpush1.msra.mxu0 %v1186
    %3923 = vmatprep.subr.mxu0 %v1179
    %3924 = vmatpush1.msra.mxu0 %v1178
    %3925 = vmatprep.subr.mxu0 %v1171
    %3926 = vmatpush1.msra.mxu0 %v1170
    %3927 = vmatprep.subr.mxu0 %v1163
    %3928 = vmatpush1.msra.mxu0 %v1162
    %3929 = vmatprep.subr.mxu0 %v1155
    %3930 = vmatpush1.msra.mxu0 %v1154
    %3931 = vmatprep.subr.mxu0 %v1147
    %3932 = vmatpush1.msra.mxu0 %v1146
    %3933 = vmatprep.subr.mxu0 %v1139
    %3934 = vmatpush1.msra.mxu0 %v1138
    %3935 = vmatprep.subr.mxu0 %v1387
    %3936 = vmatpush2.msra.mxu0 %v1386
    %3937 = vmatprep.subr.mxu0 %v1379
    %3938 = vmatpush2.msra.mxu0 %v1378
    %3939 = vmatprep.subr.mxu0 %v1371
    %3940 = vmatpush2.msra.mxu0 %v1370
    %3941 = vmatprep.subr.mxu0 %v1363
    %3942 = vmatpush2.msra.mxu0 %v1362
    %3943 = vmatprep.subr.mxu0 %v1355
    %3944 = vmatpush2.msra.mxu0 %v1354
    %3945 = vmatprep.subr.mxu0 %v1347
    %3946 = vmatpush2.msra.mxu0 %v1346
    %3947 = vmatprep.subr.mxu0 %v1339
    %3948 = vmatpush2.msra.mxu0 %v1338
    %3949 = vmatprep.subr.mxu0 %v1331
    %3950 = vmatpush2.msra.mxu0 %v1330
    %3951 = vmatprep.subr.mxu0 %v1323
    %3952 = vmatpush2.msra.mxu0 %v1322
    %3953 = vmatprep.subr.mxu0 %v1315
    %3954 = vmatpush2.msra.mxu0 %v1314
    %3955 = vmatprep.subr.mxu0 %v1307
    %3956 = vmatpush2.msra.mxu0 %v1306
    %3957 = vmatprep.subr.mxu0 %v1299
    %3958 = vmatpush2.msra.mxu0 %v1298
    %3959 = vmatprep.subr.mxu0 %v1291
    %3960 = vmatpush2.msra.mxu0 %v1290
    %3961 = vmatprep.subr.mxu0 %v1283
    %3962 = vmatpush2.msra.mxu0 %v1282
    %3963 = vmatprep.subr.mxu0 %v1275
    %3964 = vmatpush2.msra.mxu0 %v1274
    %3965 = vmatprep.subr.mxu0 %v1267
    %3966 = vmatpush2.msra.mxu0 %v1266
    %3967 = vmatprep.mubr.f32.mxu0 %v3758
    %3968 = vmatmul.mubr.f32.gmra.mxu0 %v3754
    %v3969 = vpop.f32.mrf.mxu0
    %v3970 = vadd.f32 0.0, %v3969
    %v3971 = vpop.f32.mrf.mxu0
    %v3972 = vadd.f32 0.0, %v3971
    %3973 = vdwg.mxu0
    %3974 = vmatprep.subr.mxu0 %v1261
    %3975 = vmatpush1.msra.mxu0 %v1260
    %3976 = vmatprep.subr.mxu0 %v1253
    %3977 = vmatpush1.msra.mxu0 %v1252
    %3978 = vmatprep.subr.mxu0 %v1245
    %3979 = vmatpush1.msra.mxu0 %v1244
    %3980 = vmatprep.subr.mxu0 %v1237
    %3981 = vmatpush1.msra.mxu0 %v1236
    %3982 = vmatprep.subr.mxu0 %v1229
    %3983 = vmatpush1.msra.mxu0 %v1228
    %3984 = vmatprep.subr.mxu0 %v1221
    %3985 = vmatpush1.msra.mxu0 %v1220
    %3986 = vmatprep.subr.mxu0 %v1213
    %3987 = vmatpush1.msra.mxu0 %v1212
    %3988 = vmatprep.subr.mxu0 %v1205
    %3989 = vmatpush1.msra.mxu0 %v1204
    %3990 = vmatprep.subr.mxu0 %v1197
    %3991 = vmatpush1.msra.mxu0 %v1196
    %3992 = vmatprep.subr.mxu0 %v1189
    %3993 = vmatpush1.msra.mxu0 %v1188
    %3994 = vmatprep.subr.mxu0 %v1181
    %3995 = vmatpush1.msra.mxu0 %v1180
    %3996 = vmatprep.subr.mxu0 %v1173
    %3997 = vmatpush1.msra.mxu0 %v1172
    %3998 = vmatprep.subr.mxu0 %v1165
    %3999 = vmatpush1.msra.mxu0 %v1164
    %4000 = vmatprep.subr.mxu0 %v1157
    %4001 = vmatpush1.msra.mxu0 %v1156
    %4002 = vmatprep.subr.mxu0 %v1149
    %4003 = vmatpush1.msra.mxu0 %v1148
    %4004 = vmatprep.subr.mxu0 %v1141
    %4005 = vmatpush1.msra.mxu0 %v1140
    %4006 = vmatprep.subr.mxu0 %v1389
    %4007 = vmatpush2.msra.mxu0 %v1388
    %4008 = vmatprep.subr.mxu0 %v1381
    %4009 = vmatpush2.msra.mxu0 %v1380
    %4010 = vmatprep.subr.mxu0 %v1373
    %4011 = vmatpush2.msra.mxu0 %v1372
    %4012 = vmatprep.subr.mxu0 %v1365
    %4013 = vmatpush2.msra.mxu0 %v1364
    %4014 = vmatprep.subr.mxu0 %v1357
    %4015 = vmatpush2.msra.mxu0 %v1356
    %4016 = vmatprep.subr.mxu0 %v1349
    %4017 = vmatpush2.msra.mxu0 %v1348
    %4018 = vmatprep.subr.mxu0 %v1341
    %4019 = vmatpush2.msra.mxu0 %v1340
    %4020 = vmatprep.subr.mxu0 %v1333
    %4021 = vmatpush2.msra.mxu0 %v1332
    %4022 = vmatprep.subr.mxu0 %v1325
    %4023 = vmatpush2.msra.mxu0 %v1324
    %4024 = vmatprep.subr.mxu0 %v1317
    %4025 = vmatpush2.msra.mxu0 %v1316
    %4026 = vmatprep.subr.mxu0 %v1309
    %4027 = vmatpush2.msra.mxu0 %v1308
    %4028 = vmatprep.subr.mxu0 %v1301
    %4029 = vmatpush2.msra.mxu0 %v1300
    %4030 = vmatprep.subr.mxu0 %v1293
    %4031 = vmatpush2.msra.mxu0 %v1292
    %4032 = vmatprep.subr.mxu0 %v1285
    %4033 = vmatpush2.msra.mxu0 %v1284
    %4034 = vmatprep.subr.mxu0 %v1277
    %4035 = vmatpush2.msra.mxu0 %v1276
    %4036 = vmatprep.subr.mxu0 %v1269
    %4037 = vmatpush2.msra.mxu0 %v1268
    %4038 = vmatprep.mubr.f32.mxu0 %v3758
    %4039 = vmatmul.mubr.f32.gmra.mxu0 %v3754
    %v4040 = vpop.f32.mrf.mxu0
    %v4041 = vadd.f32 0.0, %v4040
    %v4042 = vpop.f32.mrf.mxu0
    %v4043 = vadd.f32 0.0, %v4042
    %4044 = vdwg.mxu0
    %v4053 = vcombine.low %v3828, %v3830
    %v4054 = vcombine.low %v3899, %v3901
    %v4055 = vcombine.low %v3970, %v3972
    %v4056 = vcombine.low %v4041, %v4043
    %v4058 = vunpack.c.l.s4 1966171168
    %v4059 = vunpack.c.0.s8 %v4058
    %v4060 = vlaneseq
    %v4061 = vshrl.u32 %v4060, 7
    %v4062 = vsub.s32 %v4059, %v4061
    %v4063 = vrot.slane %v4053, %v4062
    %v4065 = vunpack.c.l.s4 1966171168
    %v4066 = vunpack.c.0.s8 %v4065
    %v4067 = vlaneseq
    %v4068 = vshrl.u32 %v4067, 7
    %v4069 = vsub.s32 %v4066, %v4068
    %v4070 = vrot.slane %v4054, %v4069
    %v4072 = vunpack.c.l.s4 1966171168
    %v4073 = vunpack.c.0.s8 %v4072
    %v4074 = vlaneseq
    %v4075 = vshrl.u32 %v4074, 7
    %v4076 = vsub.s32 %v4073, %v4075
    %v4077 = vrot.slane %v4055, %v4076
    %v4079 = vunpack.c.l.s4 1966171168
    %v4080 = vunpack.c.0.s8 %v4079
    %v4081 = vlaneseq
    %v4082 = vshrl.u32 %v4081, 7
    %v4083 = vsub.s32 %v4080, %v4082
    %v4084 = vrot.slane %v4056, %v4083
    %v4085 = vcombine.low %v4063, %v4070
    %v4086 = vcombine.low %v4077, %v4084
    %v4088 = vunpack.c.l.s4 1966171168
    %v4089 = vunpack.c.0.s8 %v4088
    %v4090 = vlaneseq
    %v4091 = vshrl.u32 %v4090, 7
    %v4092 = vsub.s32 %v4089, %v4091
    %v4093 = vrot.slane %v4085, %v4092
    %v4095 = vunpack.c.l.s4 1966171168
    %v4096 = vunpack.c.0.s8 %v4095
    %v4097 = vlaneseq
    %v4098 = vshrl.u32 %v4097, 7
    %v4099 = vsub.s32 %v4096, %v4098
    %v4100 = vrot.slane %v4086, %v4099
    %v4101 = vcombine.low %v4093, %v4100
    %v4103 = vadd.f32 %v3749, %v4101
    %v4104 = vxor.u32 %v4103, 2147483648
    %v4105 = vmul.f32 %v4104, 1.442695
    %v4106 = vpow.pop %v4105
    %v4107 = vadd.f32 %v4106, 1.0
    %v4108 = vrcp.pop %v4107
    %v4109 = vmul.f32 1.0, %v4108
    %v4111 = vrot.slane %v4103, 2
    %v4113 = vxor.u32 %v4111, 2147483648
    %v4114 = vmul.f32 %v4113, 1.442695
    %v4115 = vpow.pop %v4114
    %v4116 = vadd.f32 %v4115, 1.0
    %v4117 = vrcp.pop %v4116
    %v4118 = vmul.f32 1.0, %v4117
    %v4119 = vrot.slane %v4103, 4
    %v4121 = vtanh.pop %v4119
    %v4122 = vrot.slane %v4103, 6
    %v4124 = vxor.u32 %v4122, 2147483648
    %v4125 = vmul.f32 %v4124, 1.442695
    %v4126 = vpow.pop %v4125
    %v4127 = vadd.f32 %v4126, 1.0
    %v4128 = vrcp.pop %v4127
    %v4129 = vmul.f32 1.0, %v4128
    %v4130 = vmul.f32 %v4118, %v3740
    %v4131 = vmul.f32 %v4109, %v4121
    %v4132 = vadd.f32 %v4130, %v4131
    %v4133 = vtanh.pop %v4132
    %v4134 = vmul.f32 %v4129, %v4133
    %s4135 = scalar_lea.vmem [#allocation3], 6
    %4136 = vst.msk [vmem:[%s4135] ss:$8 sm:$0x3] %vm1783, %v4134
    %4137 = vst.msk [vmem:[%s4135] ss:$8 sm:$0x0] %vm1783, %v4134
    %s4138 = scalar_lea.vmem [#allocation2], 7
    %v4139 = vld [vmem:[%s4138] ss:$8 sm:$0xf]
    %v4140 = vld [vmem:[%s4138] ss:$8 sm:$0xf0]
    %v4141 = vor.u32 %v4139, %v4140
    %v4143 = vlaneseq
    %v4144 = vshrl.u32 %v4143, 7
    %v4145 = vsub.s32 0, %v4144
    %v4146 = vrot.slane %v4134, %v4145
    %v4147 = vlaneseq
    %v4148 = vshrl.u32 %v4147, 7
    %v4149 = vsub.s32 1, %v4148
    %v4150 = vrot.slane %v4134, %v4149
    %4153 = vmatprep.subr.mxu0 %v1255
    %4154 = vmatpush1.msra.mxu0 %v1254
    %4155 = vmatprep.subr.mxu0 %v1247
    %4156 = vmatpush1.msra.mxu0 %v1246
    %4157 = vmatprep.subr.mxu0 %v1239
    %4158 = vmatpush1.msra.mxu0 %v1238
    %4159 = vmatprep.subr.mxu0 %v1231
    %4160 = vmatpush1.msra.mxu0 %v1230
    %4161 = vmatprep.subr.mxu0 %v1223
    %4162 = vmatpush1.msra.mxu0 %v1222
    %4163 = vmatprep.subr.mxu0 %v1215
    %4164 = vmatpush1.msra.mxu0 %v1214
    %4165 = vmatprep.subr.mxu0 %v1207
    %4166 = vmatpush1.msra.mxu0 %v1206
    %4167 = vmatprep.subr.mxu0 %v1199
    %4168 = vmatpush1.msra.mxu0 %v1198
    %4169 = vmatprep.subr.mxu0 %v1191
    %4170 = vmatpush1.msra.mxu0 %v1190
    %4171 = vmatprep.subr.mxu0 %v1183
    %4172 = vmatpush1.msra.mxu0 %v1182
    %4173 = vmatprep.subr.mxu0 %v1175
    %4174 = vmatpush1.msra.mxu0 %v1174
    %4175 = vmatprep.subr.mxu0 %v1167
    %4176 = vmatpush1.msra.mxu0 %v1166
    %4177 = vmatprep.subr.mxu0 %v1159
    %4178 = vmatpush1.msra.mxu0 %v1158
    %4179 = vmatprep.subr.mxu0 %v1151
    %4180 = vmatpush1.msra.mxu0 %v1150
    %4181 = vmatprep.subr.mxu0 %v1143
    %4182 = vmatpush1.msra.mxu0 %v1142
    %4183 = vmatprep.subr.mxu0 %v1135
    %4184 = vmatpush1.msra.mxu0 %v1134
    %4185 = vmatprep.subr.mxu0 %v1383
    %4186 = vmatpush2.msra.mxu0 %v1382
    %4187 = vmatprep.subr.mxu0 %v1375
    %4188 = vmatpush2.msra.mxu0 %v1374
    %4189 = vmatprep.subr.mxu0 %v1367
    %4190 = vmatpush2.msra.mxu0 %v1366
    %4191 = vmatprep.subr.mxu0 %v1359
    %4192 = vmatpush2.msra.mxu0 %v1358
    %4193 = vmatprep.subr.mxu0 %v1351
    %4194 = vmatpush2.msra.mxu0 %v1350
    %4195 = vmatprep.subr.mxu0 %v1343
    %4196 = vmatpush2.msra.mxu0 %v1342
    %4197 = vmatprep.subr.mxu0 %v1335
    %4198 = vmatpush2.msra.mxu0 %v1334
    %4199 = vmatprep.subr.mxu0 %v1327
    %4200 = vmatpush2.msra.mxu0 %v1326
    %4201 = vmatprep.subr.mxu0 %v1319
    %4202 = vmatpush2.msra.mxu0 %v1318
    %4203 = vmatprep.subr.mxu0 %v1311
    %4204 = vmatpush2.msra.mxu0 %v1310
    %4205 = vmatprep.subr.mxu0 %v1303
    %4206 = vmatpush2.msra.mxu0 %v1302
    %4207 = vmatprep.subr.mxu0 %v1295
    %4208 = vmatpush2.msra.mxu0 %v1294
    %4209 = vmatprep.subr.mxu0 %v1287
    %4210 = vmatpush2.msra.mxu0 %v1286
    %4211 = vmatprep.subr.mxu0 %v1279
    %4212 = vmatpush2.msra.mxu0 %v1278
    %4213 = vmatprep.subr.mxu0 %v1271
    %4214 = vmatpush2.msra.mxu0 %v1270
    %4215 = vmatprep.subr.mxu0 %v1263
    %4216 = vmatpush2.msra.mxu0 %v1262
    %4217 = vmatprep.mubr.f32.mxu0 %v4150
    %4218 = vmatmul.mubr.f32.gmra.mxu0 %v4146
    %v4219 = vpop.f32.mrf.mxu0
    %v4220 = vadd.f32 0.0, %v4219
    %v4221 = vpop.f32.mrf.mxu0
    %v4222 = vadd.f32 0.0, %v4221
    %4223 = vdwg.mxu0
    %4224 = vmatprep.subr.mxu0 %v1257
    %4225 = vmatpush1.msra.mxu0 %v1256
    %4226 = vmatprep.subr.mxu0 %v1249
    %4227 = vmatpush1.msra.mxu0 %v1248
    %4228 = vmatprep.subr.mxu0 %v1241
    %4229 = vmatpush1.msra.mxu0 %v1240
    %4230 = vmatprep.subr.mxu0 %v1233
    %4231 = vmatpush1.msra.mxu0 %v1232
    %4232 = vmatprep.subr.mxu0 %v1225
    %4233 = vmatpush1.msra.mxu0 %v1224
    %4234 = vmatprep.subr.mxu0 %v1217
    %4235 = vmatpush1.msra.mxu0 %v1216
    %4236 = vmatprep.subr.mxu0 %v1209
    %4237 = vmatpush1.msra.mxu0 %v1208
    %4238 = vmatprep.subr.mxu0 %v1201
    %4239 = vmatpush1.msra.mxu0 %v1200
    %4240 = vmatprep.subr.mxu0 %v1193
    %4241 = vmatpush1.msra.mxu0 %v1192
    %4242 = vmatprep.subr.mxu0 %v1185
    %4243 = vmatpush1.msra.mxu0 %v1184
    %4244 = vmatprep.subr.mxu0 %v1177
    %4245 = vmatpush1.msra.mxu0 %v1176
    %4246 = vmatprep.subr.mxu0 %v1169
    %4247 = vmatpush1.msra.mxu0 %v1168
    %4248 = vmatprep.subr.mxu0 %v1161
    %4249 = vmatpush1.msra.mxu0 %v1160
    %4250 = vmatprep.subr.mxu0 %v1153
    %4251 = vmatpush1.msra.mxu0 %v1152
    %4252 = vmatprep.subr.mxu0 %v1145
    %4253 = vmatpush1.msra.mxu0 %v1144
    %4254 = vmatprep.subr.mxu0 %v1137
    %4255 = vmatpush1.msra.mxu0 %v1136
    %4256 = vmatprep.subr.mxu0 %v1385
    %4257 = vmatpush2.msra.mxu0 %v1384
    %4258 = vmatprep.subr.mxu0 %v1377
    %4259 = vmatpush2.msra.mxu0 %v1376
    %4260 = vmatprep.subr.mxu0 %v1369
    %4261 = vmatpush2.msra.mxu0 %v1368
    %4262 = vmatprep.subr.mxu0 %v1361
    %4263 = vmatpush2.msra.mxu0 %v1360
    %4264 = vmatprep.subr.mxu0 %v1353
    %4265 = vmatpush2.msra.mxu0 %v1352
    %4266 = vmatprep.subr.mxu0 %v1345
    %4267 = vmatpush2.msra.mxu0 %v1344
    %4268 = vmatprep.subr.mxu0 %v1337
    %4269 = vmatpush2.msra.mxu0 %v1336
    %4270 = vmatprep.subr.mxu0 %v1329
    %4271 = vmatpush2.msra.mxu0 %v1328
    %4272 = vmatprep.subr.mxu0 %v1321
    %4273 = vmatpush2.msra.mxu0 %v1320
    %4274 = vmatprep.subr.mxu0 %v1313
    %4275 = vmatpush2.msra.mxu0 %v1312
    %4276 = vmatprep.subr.mxu0 %v1305
    %4277 = vmatpush2.msra.mxu0 %v1304
    %4278 = vmatprep.subr.mxu0 %v1297
    %4279 = vmatpush2.msra.mxu0 %v1296
    %4280 = vmatprep.subr.mxu0 %v1289
    %4281 = vmatpush2.msra.mxu0 %v1288
    %4282 = vmatprep.subr.mxu0 %v1281
    %4283 = vmatpush2.msra.mxu0 %v1280
    %4284 = vmatprep.subr.mxu0 %v1273
    %4285 = vmatpush2.msra.mxu0 %v1272
    %4286 = vmatprep.subr.mxu0 %v1265
    %4287 = vmatpush2.msra.mxu0 %v1264
    %4288 = vmatprep.mubr.f32.mxu0 %v4150
    %4289 = vmatmul.mubr.f32.gmra.mxu0 %v4146
    %v4290 = vpop.f32.mrf.mxu0
    %v4291 = vadd.f32 0.0, %v4290
    %v4292 = vpop.f32.mrf.mxu0
    %v4293 = vadd.f32 0.0, %v4292
    %4294 = vdwg.mxu0
    %4295 = vmatprep.subr.mxu0 %v1259
    %4296 = vmatpush1.msra.mxu0 %v1258
    %4297 = vmatprep.subr.mxu0 %v1251
    %4298 = vmatpush1.msra.mxu0 %v1250
    %4299 = vmatprep.subr.mxu0 %v1243
    %4300 = vmatpush1.msra.mxu0 %v1242
    %4301 = vmatprep.subr.mxu0 %v1235
    %4302 = vmatpush1.msra.mxu0 %v1234
    %4303 = vmatprep.subr.mxu0 %v1227
    %4304 = vmatpush1.msra.mxu0 %v1226
    %4305 = vmatprep.subr.mxu0 %v1219
    %4306 = vmatpush1.msra.mxu0 %v1218
    %4307 = vmatprep.subr.mxu0 %v1211
    %4308 = vmatpush1.msra.mxu0 %v1210
    %4309 = vmatprep.subr.mxu0 %v1203
    %4310 = vmatpush1.msra.mxu0 %v1202
    %4311 = vmatprep.subr.mxu0 %v1195
    %4312 = vmatpush1.msra.mxu0 %v1194
    %4313 = vmatprep.subr.mxu0 %v1187
    %4314 = vmatpush1.msra.mxu0 %v1186
    %4315 = vmatprep.subr.mxu0 %v1179
    %4316 = vmatpush1.msra.mxu0 %v1178
    %4317 = vmatprep.subr.mxu0 %v1171
    %4318 = vmatpush1.msra.mxu0 %v1170
    %4319 = vmatprep.subr.mxu0 %v1163
    %4320 = vmatpush1.msra.mxu0 %v1162
    %4321 = vmatprep.subr.mxu0 %v1155
    %4322 = vmatpush1.msra.mxu0 %v1154
    %4323 = vmatprep.subr.mxu0 %v1147
    %4324 = vmatpush1.msra.mxu0 %v1146
    %4325 = vmatprep.subr.mxu0 %v1139
    %4326 = vmatpush1.msra.mxu0 %v1138
    %4327 = vmatprep.subr.mxu0 %v1387
    %4328 = vmatpush2.msra.mxu0 %v1386
    %4329 = vmatprep.subr.mxu0 %v1379
    %4330 = vmatpush2.msra.mxu0 %v1378
    %4331 = vmatprep.subr.mxu0 %v1371
    %4332 = vmatpush2.msra.mxu0 %v1370
    %4333 = vmatprep.subr.mxu0 %v1363
    %4334 = vmatpush2.msra.mxu0 %v1362
    %4335 = vmatprep.subr.mxu0 %v1355
    %4336 = vmatpush2.msra.mxu0 %v1354
    %4337 = vmatprep.subr.mxu0 %v1347
    %4338 = vmatpush2.msra.mxu0 %v1346
    %4339 = vmatprep.subr.mxu0 %v1339
    %4340 = vmatpush2.msra.mxu0 %v1338
    %4341 = vmatprep.subr.mxu0 %v1331
    %4342 = vmatpush2.msra.mxu0 %v1330
    %4343 = vmatprep.subr.mxu0 %v1323
    %4344 = vmatpush2.msra.mxu0 %v1322
    %4345 = vmatprep.subr.mxu0 %v1315
    %4346 = vmatpush2.msra.mxu0 %v1314
    %4347 = vmatprep.subr.mxu0 %v1307
    %4348 = vmatpush2.msra.mxu0 %v1306
    %4349 = vmatprep.subr.mxu0 %v1299
    %4350 = vmatpush2.msra.mxu0 %v1298
    %4351 = vmatprep.subr.mxu0 %v1291
    %4352 = vmatpush2.msra.mxu0 %v1290
    %4353 = vmatprep.subr.mxu0 %v1283
    %4354 = vmatpush2.msra.mxu0 %v1282
    %4355 = vmatprep.subr.mxu0 %v1275
    %4356 = vmatpush2.msra.mxu0 %v1274
    %4357 = vmatprep.subr.mxu0 %v1267
    %4358 = vmatpush2.msra.mxu0 %v1266
    %4359 = vmatprep.mubr.f32.mxu0 %v4150
    %4360 = vmatmul.mubr.f32.gmra.mxu0 %v4146
    %v4361 = vpop.f32.mrf.mxu0
    %v4362 = vadd.f32 0.0, %v4361
    %v4363 = vpop.f32.mrf.mxu0
    %v4364 = vadd.f32 0.0, %v4363
    %4365 = vdwg.mxu0
    %4366 = vmatprep.subr.mxu0 %v1261
    %4367 = vmatpush1.msra.mxu0 %v1260
    %4368 = vmatprep.subr.mxu0 %v1253
    %4369 = vmatpush1.msra.mxu0 %v1252
    %4370 = vmatprep.subr.mxu0 %v1245
    %4371 = vmatpush1.msra.mxu0 %v1244
    %4372 = vmatprep.subr.mxu0 %v1237
    %4373 = vmatpush1.msra.mxu0 %v1236
    %4374 = vmatprep.subr.mxu0 %v1229
    %4375 = vmatpush1.msra.mxu0 %v1228
    %4376 = vmatprep.subr.mxu0 %v1221
    %4377 = vmatpush1.msra.mxu0 %v1220
    %4378 = vmatprep.subr.mxu0 %v1213
    %4379 = vmatpush1.msra.mxu0 %v1212
    %4380 = vmatprep.subr.mxu0 %v1205
    %4381 = vmatpush1.msra.mxu0 %v1204
    %4382 = vmatprep.subr.mxu0 %v1197
    %4383 = vmatpush1.msra.mxu0 %v1196
    %4384 = vmatprep.subr.mxu0 %v1189
    %4385 = vmatpush1.msra.mxu0 %v1188
    %4386 = vmatprep.subr.mxu0 %v1181
    %4387 = vmatpush1.msra.mxu0 %v1180
    %4388 = vmatprep.subr.mxu0 %v1173
    %4389 = vmatpush1.msra.mxu0 %v1172
    %4390 = vmatprep.subr.mxu0 %v1165
    %4391 = vmatpush1.msra.mxu0 %v1164
    %4392 = vmatprep.subr.mxu0 %v1157
    %4393 = vmatpush1.msra.mxu0 %v1156
    %4394 = vmatprep.subr.mxu0 %v1149
    %4395 = vmatpush1.msra.mxu0 %v1148
    %4396 = vmatprep.subr.mxu0 %v1141
    %4397 = vmatpush1.msra.mxu0 %v1140
    %4398 = vmatprep.subr.mxu0 %v1389
    %4399 = vmatpush2.msra.mxu0 %v1388
    %4400 = vmatprep.subr.mxu0 %v1381
    %4401 = vmatpush2.msra.mxu0 %v1380
    %4402 = vmatprep.subr.mxu0 %v1373
    %4403 = vmatpush2.msra.mxu0 %v1372
    %4404 = vmatprep.subr.mxu0 %v1365
    %4405 = vmatpush2.msra.mxu0 %v1364
    %4406 = vmatprep.subr.mxu0 %v1357
    %4407 = vmatpush2.msra.mxu0 %v1356
    %4408 = vmatprep.subr.mxu0 %v1349
    %4409 = vmatpush2.msra.mxu0 %v1348
    %4410 = vmatprep.subr.mxu0 %v1341
    %4411 = vmatpush2.msra.mxu0 %v1340
    %4412 = vmatprep.subr.mxu0 %v1333
    %4413 = vmatpush2.msra.mxu0 %v1332
    %4414 = vmatprep.subr.mxu0 %v1325
    %4415 = vmatpush2.msra.mxu0 %v1324
    %4416 = vmatprep.subr.mxu0 %v1317
    %4417 = vmatpush2.msra.mxu0 %v1316
    %4418 = vmatprep.subr.mxu0 %v1309
    %4419 = vmatpush2.msra.mxu0 %v1308
    %4420 = vmatprep.subr.mxu0 %v1301
    %4421 = vmatpush2.msra.mxu0 %v1300
    %4422 = vmatprep.subr.mxu0 %v1293
    %4423 = vmatpush2.msra.mxu0 %v1292
    %4424 = vmatprep.subr.mxu0 %v1285
    %4425 = vmatpush2.msra.mxu0 %v1284
    %4426 = vmatprep.subr.mxu0 %v1277
    %4427 = vmatpush2.msra.mxu0 %v1276
    %4428 = vmatprep.subr.mxu0 %v1269
    %4429 = vmatpush2.msra.mxu0 %v1268
    %4430 = vmatprep.mubr.f32.mxu0 %v4150
    %4431 = vmatmul.mubr.f32.gmra.mxu0 %v4146
    %v4432 = vpop.f32.mrf.mxu0
    %v4433 = vadd.f32 0.0, %v4432
    %v4434 = vpop.f32.mrf.mxu0
    %v4435 = vadd.f32 0.0, %v4434
    %4436 = vdwg.mxu0
    %v4445 = vcombine.low %v4220, %v4222
    %v4446 = vcombine.low %v4291, %v4293
    %v4447 = vcombine.low %v4362, %v4364
    %v4448 = vcombine.low %v4433, %v4435
    %v4450 = vunpack.c.l.s4 1966171168
    %v4451 = vunpack.c.0.s8 %v4450
    %v4452 = vlaneseq
    %v4453 = vshrl.u32 %v4452, 7
    %v4454 = vsub.s32 %v4451, %v4453
    %v4455 = vrot.slane %v4445, %v4454
    %v4457 = vunpack.c.l.s4 1966171168
    %v4458 = vunpack.c.0.s8 %v4457
    %v4459 = vlaneseq
    %v4460 = vshrl.u32 %v4459, 7
    %v4461 = vsub.s32 %v4458, %v4460
    %v4462 = vrot.slane %v4446, %v4461
    %v4464 = vunpack.c.l.s4 1966171168
    %v4465 = vunpack.c.0.s8 %v4464
    %v4466 = vlaneseq
    %v4467 = vshrl.u32 %v4466, 7
    %v4468 = vsub.s32 %v4465, %v4467
    %v4469 = vrot.slane %v4447, %v4468
    %v4471 = vunpack.c.l.s4 1966171168
    %v4472 = vunpack.c.0.s8 %v4471
    %v4473 = vlaneseq
    %v4474 = vshrl.u32 %v4473, 7
    %v4475 = vsub.s32 %v4472, %v4474
    %v4476 = vrot.slane %v4448, %v4475
    %v4477 = vcombine.low %v4455, %v4462
    %v4478 = vcombine.low %v4469, %v4476
    %v4480 = vunpack.c.l.s4 1966171168
    %v4481 = vunpack.c.0.s8 %v4480
    %v4482 = vlaneseq
    %v4483 = vshrl.u32 %v4482, 7
    %v4484 = vsub.s32 %v4481, %v4483
    %v4485 = vrot.slane %v4477, %v4484
    %v4487 = vunpack.c.l.s4 1966171168
    %v4488 = vunpack.c.0.s8 %v4487
    %v4489 = vlaneseq
    %v4490 = vshrl.u32 %v4489, 7
    %v4491 = vsub.s32 %v4488, %v4490
    %v4492 = vrot.slane %v4478, %v4491
    %v4493 = vcombine.low %v4485, %v4492
    %v4495 = vadd.f32 %v4141, %v4493
    %v4496 = vxor.u32 %v4495, 2147483648
    %v4497 = vmul.f32 %v4496, 1.442695
    %v4498 = vpow.pop %v4497
    %v4499 = vadd.f32 %v4498, 1.0
    %v4500 = vrcp.pop %v4499
    %v4501 = vmul.f32 1.0, %v4500
    %v4503 = vrot.slane %v4495, 2
    %v4505 = vxor.u32 %v4503, 2147483648
    %v4506 = vmul.f32 %v4505, 1.442695
    %v4507 = vpow.pop %v4506
    %v4508 = vadd.f32 %v4507, 1.0
    %v4509 = vrcp.pop %v4508
    %v4510 = vmul.f32 1.0, %v4509
    %v4511 = vrot.slane %v4495, 4
    %v4513 = vtanh.pop %v4511
    %v4514 = vrot.slane %v4495, 6
    %v4516 = vxor.u32 %v4514, 2147483648
    %v4517 = vmul.f32 %v4516, 1.442695
    %v4518 = vpow.pop %v4517
    %v4519 = vadd.f32 %v4518, 1.0
    %v4520 = vrcp.pop %v4519
    %v4521 = vmul.f32 1.0, %v4520
    %v4522 = vmul.f32 %v4510, %v4132
    %v4523 = vmul.f32 %v4501, %v4513
    %v4524 = vadd.f32 %v4522, %v4523
    %v4525 = vtanh.pop %v4524
    %v4526 = vmul.f32 %v4521, %v4525
    %s4527 = scalar_lea.vmem [#allocation3], 7
    %4528 = vst.msk [vmem:[%s4527] ss:$8 sm:$0x3] %vm1783, %v4526
    %4529 = vst.msk [vmem:[%s4527] ss:$8 sm:$0x0] %vm1783, %v4526
    %v4530 = vld [vmem:[#allocation3] sm:$0xff]
    %v4531 = vld [vmem:[#allocation3 + $0x8] sm:$0xff]
    %v4532 = vld [vmem:[#allocation15] sm:$0xff]
    %v4533 = vld [vmem:[#allocation15 + $0x8] sm:$0xff]
    %v4534 = vld [vmem:[#allocation15 + $0x10] sm:$0xff]
    %v4535 = vld [vmem:[#allocation15 + $0x18] sm:$0xff]
    %v4536 = vld [vmem:[#allocation15 + $0x20] sm:$0xff]
    %v4537 = vld [vmem:[#allocation15 + $0x28] sm:$0xff]
    %v4538 = vld [vmem:[#allocation15 + $0x30] sm:$0xff]
    %v4539 = vld [vmem:[#allocation15 + $0x38] sm:$0xff]
    %v4540 = vld [vmem:[#allocation15 + $0x40] sm:$0xff]
    %v4541 = vld [vmem:[#allocation15 + $0x48] sm:$0xff]
    %v4542 = vld [vmem:[#allocation15 + $0x50] sm:$0xff]
    %v4543 = vld [vmem:[#allocation15 + $0x58] sm:$0xff]
    %v4544 = vld [vmem:[#allocation15 + $0x60] sm:$0xff]
    %v4545 = vld [vmem:[#allocation15 + $0x68] sm:$0xff]
    %v4546 = vld [vmem:[#allocation15 + $0x70] sm:$0xff]
    %v4547 = vld [vmem:[#allocation15 + $0x78] sm:$0xff]
    %v4548 = vld [vmem:[#allocation15 + $0x80] sm:$0xff]
    %v4549 = vld [vmem:[#allocation15 + $0x88] sm:$0xff]
    %v4550 = vld [vmem:[#allocation15 + $0x90] sm:$0xff]
    %v4551 = vld [vmem:[#allocation15 + $0x98] sm:$0xff]
    %v4552 = vld [vmem:[#allocation15 + $0xa0] sm:$0xff]
    %v4553 = vld [vmem:[#allocation15 + $0xa8] sm:$0xff]
    %v4554 = vld [vmem:[#allocation15 + $0xb0] sm:$0xff]
    %v4555 = vld [vmem:[#allocation15 + $0xb8] sm:$0xff]
    %v4556 = vld [vmem:[#allocation15 + $0xc0] sm:$0xff]
    %v4557 = vld [vmem:[#allocation15 + $0xc8] sm:$0xff]
    %v4558 = vld [vmem:[#allocation15 + $0xd0] sm:$0xff]
    %v4559 = vld [vmem:[#allocation15 + $0xd8] sm:$0xff]
    %v4560 = vld [vmem:[#allocation15 + $0xe0] sm:$0xff]
    %v4561 = vld [vmem:[#allocation15 + $0xe8] sm:$0xff]
    %v4562 = vld [vmem:[#allocation15 + $0xf0] sm:$0xff]
    %v4563 = vld [vmem:[#allocation15 + $0xf8] sm:$0xff]
    %v4564 = vld [vmem:[#allocation16] sm:$0x1]
    %v4566 = vlaneseq
    %v4567 = vshrl.u32 %v4566, 7
    %v4568 = vsub.s32 0, %v4567
    %v4569 = vrot.slane %v4564, %v4568
    %4571 = vmatprep.subr.mxu0 0.0
    %4572 = vmatpush1.msra.mxu0 %v4547
    %4573 = vmatprep.subr.mxu0 0.0
    %4574 = vmatpush1.msra.mxu0 %v4546
    %4575 = vmatprep.subr.mxu0 0.0
    %4576 = vmatpush1.msra.mxu0 %v4545
    %4577 = vmatprep.subr.mxu0 0.0
    %4578 = vmatpush1.msra.mxu0 %v4544
    %4579 = vmatprep.subr.mxu0 0.0
    %4580 = vmatpush1.msra.mxu0 %v4543
    %4581 = vmatprep.subr.mxu0 0.0
    %4582 = vmatpush1.msra.mxu0 %v4542
    %4583 = vmatprep.subr.mxu0 0.0
    %4584 = vmatpush1.msra.mxu0 %v4541
    %4585 = vmatprep.subr.mxu0 0.0
    %4586 = vmatpush1.msra.mxu0 %v4540
    %4587 = vmatprep.subr.mxu0 0.0
    %4588 = vmatpush1.msra.mxu0 %v4539
    %4589 = vmatprep.subr.mxu0 0.0
    %4590 = vmatpush1.msra.mxu0 %v4538
    %4591 = vmatprep.subr.mxu0 0.0
    %4592 = vmatpush1.msra.mxu0 %v4537
    %4593 = vmatprep.subr.mxu0 0.0
    %4594 = vmatpush1.msra.mxu0 %v4536
    %4595 = vmatprep.subr.mxu0 0.0
    %4596 = vmatpush1.msra.mxu0 %v4535
    %4597 = vmatprep.subr.mxu0 0.0
    %4598 = vmatpush1.msra.mxu0 %v4534
    %4599 = vmatprep.subr.mxu0 0.0
    %4600 = vmatpush1.msra.mxu0 %v4533
    %4601 = vmatprep.subr.mxu0 0.0
    %4602 = vmatpush1.msra.mxu0 %v4532
    %4603 = vmatprep.subr.mxu0 0.0
    %4604 = vmatpush2.msra.mxu0 %v4563
    %4605 = vmatprep.subr.mxu0 0.0
    %4606 = vmatpush2.msra.mxu0 %v4562
    %4607 = vmatprep.subr.mxu0 0.0
    %4608 = vmatpush2.msra.mxu0 %v4561
    %4609 = vmatprep.subr.mxu0 0.0
    %4610 = vmatpush2.msra.mxu0 %v4560
    %4611 = vmatprep.subr.mxu0 0.0
    %4612 = vmatpush2.msra.mxu0 %v4559
    %4613 = vmatprep.subr.mxu0 0.0
    %4614 = vmatpush2.msra.mxu0 %v4558
    %4615 = vmatprep.subr.mxu0 0.0
    %4616 = vmatpush2.msra.mxu0 %v4557
    %4617 = vmatprep.subr.mxu0 0.0
    %4618 = vmatpush2.msra.mxu0 %v4556
    %4619 = vmatprep.subr.mxu0 0.0
    %4620 = vmatpush2.msra.mxu0 %v4555
    %4621 = vmatprep.subr.mxu0 0.0
    %4622 = vmatpush2.msra.mxu0 %v4554
    %4623 = vmatprep.subr.mxu0 0.0
    %4624 = vmatpush2.msra.mxu0 %v4553
    %4625 = vmatprep.subr.mxu0 0.0
    %4626 = vmatpush2.msra.mxu0 %v4552
    %4627 = vmatprep.subr.mxu0 0.0
    %4628 = vmatpush2.msra.mxu0 %v4551
    %4629 = vmatprep.subr.mxu0 0.0
    %4630 = vmatpush2.msra.mxu0 %v4550
    %4631 = vmatprep.subr.mxu0 0.0
    %4632 = vmatpush2.msra.mxu0 %v4549
    %4633 = vmatprep.subr.mxu0 0.0
    %4634 = vmatpush2.msra.mxu0 %v4548
    %4635 = vmatprep.mubr.f32.mxu0 %v4531
    %4636 = vmatmul.mubr.f32.gmra.mxu0 %v4530
    %v4637 = vpop.f32.mrf.mxu0
    %v4638 = vadd.f32 %v4569, %v4637
    %v4639 = vpop.f32.mrf.mxu0
    %4640 = vdwg.mxu0
    %4641 = vst [vmem:[#allocation18] sm:$0xff] %v4638
    // Predicated region
    $region66: #{tpu_custom_call.1} parent=1 // pred_check
      _
    $region67: #{tpu_custom_call.1} parent=1 // pred_check_branch
      %4643 = sbr.rel (0) target = $region69
    $region68: #{tpu_custom_call.1} parent=1 // pred_region
      %s4645 = ssub.s32 128, 128
      %4646 = vsyncadd [#allocation6], %s4645
      %s4648 = sshll.u32 [#allocation18], 4
      %s4649 = int_to_ptr.vmem [resolvable:$true] %s4648
      %4651 = dma.vmem_to_hbm [thread:$0]  %s4649, 128, %s8, [#allocation6]
    $region69: #{tpu_custom_call.1} parent=1 // pred_fallthru
      _
    // Predicated region
    $region70: #{tpu_custom_call.1} parent=1 // pred_check
      _
    $region71: #{tpu_custom_call.1} parent=1 // pred_check_branch
      %4653 = sbr.rel (0) target = $region73
    $region72: #{tpu_custom_call.1} parent=1 // pred_region
      %4654 = dma.done [#allocation6], 128
    $region73: #{tpu_custom_call.1} parent=1 // pred_fallthru
      _
    %4655 = vsyncpa [#allocation5], 1
    %4656 = vsyncpa [#allocation8], 1
    %4657 = vsyncpa [#allocation11], 1
    %4658 = vsyncpa [#allocation14], 1
    %4659 = vsyncpa [#allocation17], 1
    %4660 = vsyncpa [#allocation6], 1

</llo_original>
